<compile_context>
chip_gen: v6e
topology: v6e:2x2x1
jax: 0.10.0
libtpu: 0.0.40
codegen_flags: <defaults>
</compile_context>

<pallas_src>
import jax
import jax.numpy as jnp
from jax import lax
from jax.experimental import pallas as pl
from jax.experimental.pallas import tpu as pltpu

# ----------------------------- model dimensions ------------------------------
HIDDEN = 16            # opt.hidden_dim
EMBED = 32             # opt.embed_dim
POLAR = 3              # opt.polarities_dim
VOCAB = 20
D = 2 * HIDDEN         # bi-LSTM output width (2*hidden_dim)
PPAD = 128             # lane-dense padded logits width


# ==================== fused bidirectional LSTM Pallas kernel ==================
def _bilstm_kernel(x_ref, len_ref, wih_ref, whh_ref, bias_ref, out_ref):
    # x_ref   (G, T, E)   G = 2B rows: [fwd batch ; time-reversed bwd batch]
    # len_ref (G, 1) int32
    # wih_ref (2, E, 4H)  [fwd ; bwd] fused gate weights (order i,f,g,o)
    # whh_ref (2H, 4H)    vstack([Whh_fwd, Whh_bwd])
    # bias_ref(G, 4H)     per-row gate bias (fwd rows -> b_f, bwd rows -> b_b)
    # out_ref (G, T*H)    lane-dense; reshaped to (G, T, H) in the wrapper
    G, T, E = x_ref.shape
    H4 = whh_ref.shape[1]
    H = H4 // 4
    B = G // 2

    # ---- hoisted input projection: one MXU pass per direction (prologue) ----
    x2 = x_ref[...].reshape(G * T, E)
    xp_f = jnp.dot(x2, wih_ref[0],
                   preferred_element_type=jnp.float32).reshape(G, T, H4)
    xp_b = jnp.dot(x2, wih_ref[1],
                   preferred_element_type=jnp.float32).reshape(G, T, H4)
    is_fwd_row = lax.broadcasted_iota(jnp.int32, (G, 1, 1), 0) < B
    xproj = jnp.where(is_fwd_row, xp_f, xp_b) + bias_ref[...][:, None, :]

    # block-diagonal selector so ONE (G,2H)@(2H,4H) dot serves both directions:
    # fwd rows keep h in cols [0:H], bwd rows in cols [H:2H].
    row_f = lax.broadcasted_iota(jnp.int32, (G, 2 * H), 0) < B
    col_l = lax.broadcasted_iota(jnp.int32, (G, 2 * H), 1) < H
    colmask = (row_f == col_l).astype(jnp.float32)

    lens = len_ref[...]                       # (G, 1) int32
    whh = whh_ref[...]
    h = jnp.zeros((G, H), jnp.float32)
    c = jnp.zeros((G, H), jnp.float32)
    outs = []
    for t in range(T):                        # static unroll (T small & static)
        h_ext = jnp.concatenate([h, h], axis=1) * colmask          # (G, 2H)
        gates = xproj[:, t, :] + jnp.dot(
            h_ext, whh, preferred_element_type=jnp.float32)        # (G, 4H)
        i_g = jax.nn.sigmoid(gates[:, 0:H])
        f_g = jax.nn.sigmoid(gates[:, H:2 * H])
        g_g = jnp.tanh(gates[:, 2 * H:3 * H])
        o_g = jax.nn.sigmoid(gates[:, 3 * H:4 * H])
        c_new = f_g * c + i_g * g_g
        h_new = o_g * jnp.tanh(c_new)
        valid = t < lens                                           # (G, 1) bool
        c = jnp.where(valid, c_new, c)
        h = jnp.where(valid, h_new, h)
        outs.append(jnp.where(valid, h_new, 0.0))                  # zero past len
    out_ref[...] = jnp.concatenate(outs, axis=1)   # single lane-dense store


def _bilstm_pallas(x, lens2, wih, whh, bias, T, H):
    G = x.shape[0]
    return pl.pallas_call(
        _bilstm_kernel,
        out_shape=jax.ShapeDtypeStruct((G, T * H), jnp.float32),
        in_specs=[pl.BlockSpec(memory_space=pltpu.MemorySpace.VMEM)] * 5,
        out_specs=pl.BlockSpec(memory_space=pltpu.MemorySpace.VMEM),
    )(x, lens2, wih, whh, bias)


def reverse_within_length(x, lens):
    """Reverse each sequence (axis=1) within its valid length (rank 2 or 3)."""
    T = x.shape[1]
    t = jnp.arange(T)[None, :]
    idx = jnp.clip(lens[:, None] - 1 - t, 0, T - 1)                 # (B, T)
    idx = idx.reshape(idx.shape + (1,) * (x.ndim - 2))
    return jnp.take_along_axis(x, jnp.broadcast_to(idx, x.shape), axis=1)


def bilstm(tokens, lens, emb, p):
    """Bidirectional masked LSTM (DynamicLSTM semantics). Returns (B, T, 2H)."""
    B, T = tokens.shape
    H = p['whh_f'].shape[0]
    # reverse int32 token ids (4 B/token) instead of f32 embeddings (4E B/token)
    tok_rev = reverse_within_length(tokens, lens)
    tok2 = jnp.concatenate([tokens, tok_rev], axis=0)               # (2B, T)
    x = emb[tok2]                                                   # (2B, T, E)
    lens2 = jnp.concatenate([lens, lens], axis=0).reshape(2 * B, 1).astype(jnp.int32)
    wih = jnp.stack([p['wih_f'], p['wih_b']], axis=0)               # (2, E, 4H)
    whh = jnp.concatenate([p['whh_f'], p['whh_b']], axis=0)         # (2H, 4H)
    bias = jnp.concatenate([jnp.broadcast_to(p['b_f'], (B, 4 * H)),
                            jnp.broadcast_to(p['b_b'], (B, 4 * H))], axis=0)
    out = _bilstm_pallas(x, lens2, wih, whh, bias, T, H).reshape(2 * B, T, H)
    out_f = out[:B]
    out_b = reverse_within_length(out[B:], lens)
    mask = (jnp.arange(T)[None, :] < lens[:, None]).astype(jnp.float32)[:, :, None]
    return jnp.concatenate([out_f, out_b * mask], axis=-1)          # (B, T, 2H)


# =============== MGAN attention-head Pallas kernel (whole batch) ==============
def _mgan_head_kernel(ctx_ref, asp_ref, locw_ref, clen_ref, alen_ref,
                      wu3_ref, wa2c_ref, wc2a_ref, wd_ref, bd_ref, out_ref):
    # ctx (B,Lc,D)  asp (B,La,D)  locw (B,Lc,1)  clen/alen (B,1) f32
    # wu3 (3,D)  wa2c/wc2a (D,D)  wd (4D,PPAD)  bd (1,PPAD)  out (B,PPAD)
    ctx = ctx_ref[...] * locw_ref[...]            # location-weighted context
    asp = asp_ref[...]
    B, Lc, Dd = ctx.shape
    La = asp.shape[1]

    inv_cl = pl.reciprocal(clen_ref[...], approx=True)          # EUP (B,1)
    inv_al = pl.reciprocal(alen_ref[...], approx=True)
    ctx_pool = jnp.sum(ctx, axis=1) * inv_cl                    # (B, D)
    asp_pool = jnp.sum(asp, axis=1) * inv_al                    # (B, D)

    w1 = wu3_ref[0:1, :][:, None, :]                            # (1,1,D)
    w2 = wu3_ref[1:2, :][:, None, :]
    w3 = wu3_ref[2:3, :][:, None, :]
    a1 = jnp.sum(ctx * w1, axis=2)                              # (B, Lc)
    a2 = jnp.sum(asp * w2, axis=2)                              # (B, La)
    a3 = jnp.einsum('bid,bjd->bij', ctx * w3, asp,
                    preferred_element_type=jnp.float32)         # (B, Lc, La)
    align = a1[:, :, None] + a2[:, None, :] + a3

    def softmax(x, axis):
        e = jnp.exp(x - jnp.max(x, axis=axis, keepdims=True))
        return e * pl.reciprocal(jnp.sum(e, axis=axis, keepdims=True), approx=True)

    # fine-grained attentions (from alignment matrix)
    alpha_f1 = softmax(jnp.max(align, axis=2), axis=1)          # (B, Lc)
    f_asp2ctx = jnp.sum(ctx * alpha_f1[:, :, None], axis=1)     # (B, D)
    alpha_f2 = softmax(jnp.max(align, axis=1), axis=1)          # (B, La)
    f_ctx2asp = jnp.sum(asp * alpha_f2[:, :, None], axis=1)     # (B, D)

    # coarse-grained attentions (bilinear with pooled vectors)
    cw = jnp.dot(ctx.reshape(B * Lc, Dd), wa2c_ref[...],
                 preferred_element_type=jnp.float32).reshape(B, Lc, Dd)
    s1 = jnp.sum(cw * asp_pool[:, None, :], axis=2)             # (B, Lc)
    c_asp2ctx = jnp.sum(ctx * softmax(s1, axis=1)[:, :, None], axis=1)
    aw = jnp.dot(asp.reshape(B * La, Dd), wc2a_ref[...],
                 preferred_element_type=jnp.float32).reshape(B, La, Dd)
    s2 = jnp.sum(aw * ctx_pool[:, None, :], axis=2)             # (B, La)
    c_ctx2asp = jnp.sum(asp * softmax(s2, axis=1)[:, :, None], axis=1)

    feat = jnp.concatenate([c_asp2ctx, f_asp2ctx, f_ctx2asp, c_ctx2asp], axis=1)
    out_ref[...] = (jnp.dot(feat, wd_ref[...], preferred_element_type=jnp.float32)
                    + bd_ref[...])                              # lane-dense store


def mgan_head(ctx_out, asp_out, loc_w, ctx_len, asp_len, params):
    B, Lc, Dd = ctx_out.shape
    P = params['wd'].shape[1]
    wd_pad = jnp.zeros((4 * Dd, PPAD), jnp.float32).at[:, :P].set(params['wd'])
    bd_pad = jnp.zeros((1, PPAD), jnp.float32).at[:, :P].set(params['bd'])
    out = pl.pallas_call(
        _mgan_head_kernel,
        out_shape=jax.ShapeDtypeStruct((B, PPAD), jnp.float32),
        in_specs=[pl.BlockSpec(memory_space=pltpu.MemorySpace.VMEM)] * 10,
        out_specs=pl.BlockSpec(memory_space=pltpu.MemorySpace.VMEM),
    )(ctx_out, asp_out,
      loc_w[:, :, None].astype(jnp.float32),
      ctx_len.astype(jnp.float32).reshape(B, 1),
      asp_len.astype(jnp.float32).reshape(B, 1),
      params['wu3'], params['w_a2c'], params['w_c2a'], wd_pad, bd_pad)
    return out[:, :P]


# ================================ full forward ================================
def _location_weights(Lc, left_len, asp_len):
    pos = jnp.arange(Lc)[None, :].astype(jnp.float32)
    start = left_len[:, None].astype(jnp.float32)
    end = (left_len + asp_len - 1)[:, None].astype(jnp.float32)
    aspect_l = end - start + 1.0
    sent_l = Lc - aspect_l
    w_before = 1.0 - (start - pos) / sent_l
    w_after = 1.0 - (pos - end) / sent_l
    return jnp.where(pos < start, w_before,
                     jnp.where(pos <= end, 0.0, w_after))


def mgan_forward(params, text_raw_indices, aspect_indices, text_left_indices):
    # TODO(synk): embedding gather / !=0 length counts / location-weight build
    # stay as tiny XLA glue (data-dependent scalar bookkeeping).
    emb = params['embedding']
    ctx_len = jnp.sum(text_raw_indices != 0, axis=1)
    asp_len = jnp.sum(aspect_indices != 0, axis=1)
    left_len = jnp.sum(text_left_indices != 0, axis=-1)

    ctx_out = bilstm(text_raw_indices, ctx_len, emb, params['ctx_lstm'])  # (B,Lc,2H)
    asp_out = bilstm(aspect_indices, asp_len, emb, params['asp_lstm'])    # (B,La,2H)

    loc_w = _location_weights(ctx_out.shape[1], left_len, asp_len)
    return mgan_head(ctx_out, asp_out, loc_w, ctx_len, asp_len, params)


# ========================== pure-JAX reference (check) ========================
def _lstm_ref_dir(x_bte, lens, wih, whh, b):
    B, T, _ = x_bte.shape
    H = whh.shape[0]

    def step(carry, xt_t):
        h, c = carry
        x_t, t = xt_t
        g = x_t @ wih + h @ whh + b
        i_g = jax.nn.sigmoid(g[:, 0:H])
        f_g = jax.nn.sigmoid(g[:, H:2 * H])
        g_g = jnp.tanh(g[:, 2 * H:3 * H])
        o_g = jax.nn.sigmoid(g[:, 3 * H:4 * H])
        c_new = f_g * c + i_g * g_g
        h_new = o_g * jnp.tanh(c_new)
        valid = (t < lens)[:, None].astype(jnp.float32)
        h = valid * h_new + (1.0 - valid) * h
        c = valid * c_new + (1.0 - valid) * c
        return (h, c), valid * h_new

    h0 = jnp.zeros((B, H), jnp.float32)
    c0 = jnp.zeros((B, H), jnp.float32)
    x_tbe = jnp.transpose(x_bte, (1, 0, 2))
    _, outs = lax.scan(step, (h0, c0), (x_tbe, jnp.arange(T)))
    return jnp.transpose(outs, (1, 0, 2))


def _bilstm_ref(x_bte, lens, p):
    T = x_bte.shape[1]
    out_f = _lstm_ref_dir(x_bte, lens, p['wih_f'], p['whh_f'], p['b_f'])
    out_b = reverse_within_length(
        _lstm_ref_dir(reverse_within_length(x_bte, lens), lens,
                      p['wih_b'], p['whh_b'], p['b_b']), lens)
    mask = (jnp.arange(T)[None, :] < lens[:, None]).astype(jnp.float32)[:, :, None]
    return jnp.concatenate([out_f, out_b * mask], axis=-1)


def mgan_ref(params, text_raw_indices, aspect_indices, text_left_indices):
    emb = params['embedding']
    ctx_len = jnp.sum(text_raw_indices != 0, axis=1)
    asp_len = jnp.sum(aspect_indices != 0, axis=1)
    left_len = jnp.sum(text_left_indices != 0, axis=-1)
    ctx_out = _bilstm_ref(emb[text_raw_indices], ctx_len, params['ctx_lstm'])
    asp_out = _bilstm_ref(emb[aspect_indices], asp_len, params['asp_lstm'])
    loc_w = _location_weights(ctx_out.shape[1], left_len, asp_len)
    ctx_out = loc_w[:, :, None] * ctx_out
    ctx_pool = jnp.sum(ctx_out, axis=1) / ctx_len[:, None].astype(jnp.float32)
    asp_pool = jnp.sum(asp_out, axis=1) / asp_len[:, None].astype(jnp.float32)
    w1, w2, w3 = params['wu3'][0], params['wu3'][1], params['wu3'][2]
    align = (jnp.einsum('bid,d->bi', ctx_out, w1)[:, :, None]
             + jnp.einsum('bjd,d->bj', asp_out, w2)[:, None, :]
             + jnp.einsum('bid,bjd,d->bij', ctx_out, asp_out, w3))
    f_asp2ctx = jnp.einsum('bid,bi->bd', ctx_out,
                           jax.nn.softmax(jnp.max(align, axis=2), axis=1))
    f_ctx2asp = jnp.einsum('bj,bjd->bd',
                           jax.nn.softmax(jnp.max(align, axis=1), axis=1), asp_out)
    s1 = jnp.einsum('bid,de,be->bi', ctx_out, params['w_a2c'], asp_pool)
    c_asp2ctx = jnp.einsum('bid,bi->bd', ctx_out, jax.nn.softmax(s1, axis=1))
    s2 = jnp.einsum('bjd,de,be->bj', asp_out, params['w_c2a'], ctx_pool)
    c_ctx2asp = jnp.einsum('bjd,bj->bd', asp_out, jax.nn.softmax(s2, axis=1))
    feat = jnp.concatenate([c_asp2ctx, f_asp2ctx, f_ctx2asp, c_ctx2asp], axis=1)
    return feat @ params['wd'] + params['bd'][0]


# ============================== parameter init ================================
def init_params(key):
    keys = jax.random.split(key, 18)
    scale = 1.0 / jnp.sqrt(jnp.float32(HIDDEN))

    def u(k, shape):
        return jax.random.uniform(k, shape, jnp.float32, -scale, scale)

    emb = jax.random.normal(keys[0], (VOCAB, EMBED), jnp.float32) * 0.1
    emb = emb.at[0].set(0.0)

    def lstm_params(k1, k2, k3, k4, k5, k6):
        # fused gate layout: [i | f | g | o] along the 4H axis
        return {'wih_f': u(k1, (EMBED, 4 * HIDDEN)),
                'whh_f': u(k2, (HIDDEN, 4 * HIDDEN)),
                'b_f':  u(k3, (1, 4 * HIDDEN)),
                'wih_b': u(k4, (EMBED, 4 * HIDDEN)),
                'whh_b': u(k5, (HIDDEN, 4 * HIDDEN)),
                'b_b':  u(k6, (1, 4 * HIDDEN))}

    return {
        'embedding': emb,
        'ctx_lstm': lstm_params(*keys[1:7]),
        'asp_lstm': lstm_params(*keys[7:13]),
        'wu3':   u(keys[13], (3, D)),        # == w_u (6*hidden, 1) reshaped
        'w_a2c': u(keys[14], (D, D)),
        'w_c2a': u(keys[15], (D, D)),
        'wd':    u(keys[16], (4 * D, POLAR)),
        'bd':    u(keys[17], (1, POLAR)),
    }


# ==================================== main ====================================
if __name__ == "__main__":
    key = jax.random.PRNGKey(0)
    params = init_params(key)

    # batch=2, ctx padded len=8, aspect padded len=4, left padded len=8
    text_raw_indices = jnp.array([[1, 2, 3, 4, 5, 6, 7, 8],
                                  [3, 5, 7, 9, 11, 13, 0, 0]], dtype=jnp.int32)
    aspect_indices = jnp.array([[4, 5, 6, 7],
                                [9, 11, 0, 0]], dtype=jnp.int32)
    text_left_indices = jnp.array([[1, 2, 3, 0, 0, 0, 0, 0],
                                   [3, 5, 0, 0, 0, 0, 0, 0]], dtype=jnp.int32)

    out = jax.jit(mgan_forward)(params, text_raw_indices,
                                aspect_indices, text_left_indices)
    out = jax.block_until_ready(out)

    ref = mgan_ref(params, text_raw_indices, aspect_indices, text_left_indices)
    assert out.shape == (2, POLAR)
    assert bool(jnp.all(jnp.isfinite(out)))
    assert bool(jnp.allclose(out, ref, atol=2e-3, rtol=2e-3))
    print("KERNEL_OK")
</pallas_src>

<mosaic_0001>
module attributes {stable_mosaic.version = 11 : i64} {
  func.func @_bilstm_kernel(%arg0: memref<4x4x32xf32, #tpu.memory_space<vmem>>, %arg1: memref<4x1xi32, #tpu.memory_space<vmem>>, %arg2: memref<2x32x64xf32, #tpu.memory_space<vmem>>, %arg3: memref<32x64xf32, #tpu.memory_space<vmem>>, %arg4: memref<4x64xf32, #tpu.memory_space<vmem>>, %arg5: memref<4x64xf32, #tpu.memory_space<vmem>>) attributes {dimension_semantics = [], scalar_prefetch = 0 : i64, scratch_operands = 0 : i64, tpu.core_type = #tpu.core_type<tc>} {
    %c0 = arith.constant 0 : index
    %c0_0 = arith.constant 0 : index
    %c0_1 = arith.constant 0 : index
    %0 = vector.load %arg0[%c0, %c0_0, %c0_1] : memref<4x4x32xf32, #tpu.memory_space<vmem>>, vector<4x4x32xf32>
    %1 = vector.shape_cast %0 : vector<4x4x32xf32> to vector<16x32xf32>
    %c0_2 = arith.constant 0 : index
    %c0_3 = arith.constant 0 : index
    %c0_4 = arith.constant 0 : index
    %2 = vector.load %arg2[%c0_2, %c0_3, %c0_4] : memref<2x32x64xf32, #tpu.memory_space<vmem>>, vector<1x32x64xf32>
    %3 = vector.shape_cast %2 : vector<1x32x64xf32> to vector<32x64xf32>
    %cst = arith.constant dense<0.000000e+00> : vector<16x64xf32>
    %4 = tpu.matmul %1, %3, %cst {dimension_numbers = #tpu.dot_dimension_numbers<[1], [0], [0], [1], [0, 0, 1, 1], [], []>} : vector<16x32xf32>, vector<32x64xf32>, vector<16x64xf32> -> vector<16x64xf32>
    %5 = vector.shape_cast %4 : vector<16x64xf32> to vector<4x4x64xf32>
    %c1 = arith.constant 1 : index
    %c0_5 = arith.constant 0 : index
    %c0_6 = arith.constant 0 : index
    %6 = vector.load %arg2[%c1, %c0_5, %c0_6] : memref<2x32x64xf32, #tpu.memory_space<vmem>>, vector<1x32x64xf32>
    %7 = vector.shape_cast %6 : vector<1x32x64xf32> to vector<32x64xf32>
    %cst_7 = arith.constant dense<0.000000e+00> : vector<16x64xf32>
    %8 = tpu.matmul %1, %7, %cst_7 {dimension_numbers = #tpu.dot_dimension_numbers<[1], [0], [0], [1], [0, 0, 1, 1], [], []>} : vector<16x32xf32>, vector<32x64xf32>, vector<16x64xf32> -> vector<16x64xf32>
    %9 = vector.shape_cast %8 : vector<16x64xf32> to vector<4x4x64xf32>
    %10 = tpu.iota {dimensions = array<i32: 0>} : vector<4x1x1xi32>
    %c2_i32 = arith.constant 2 : i32
    %11 = vector.broadcast %c2_i32 : i32 to vector<4x1x1xi32>
    %12 = arith.cmpi slt, %10, %11 : vector<4x1x1xi32>
    %13 = vector.shape_cast %12 : vector<4x1x1xi1> to vector<4x1x1xi1>
    %14 = vector.broadcast %13 : vector<4x1x1xi1> to vector<4x4x64xi1>
    %15 = arith.select %14, %5, %9 : vector<4x4x64xi1>, vector<4x4x64xf32>
    %c0_8 = arith.constant 0 : index
    %c0_9 = arith.constant 0 : index
    %16 = vector.load %arg4[%c0_8, %c0_9] : memref<4x64xf32, #tpu.memory_space<vmem>>, vector<4x64xf32>
    %17 = vector.shape_cast %16 : vector<4x64xf32> to vector<4x1x64xf32>
    %18 = vector.broadcast %17 : vector<4x1x64xf32> to vector<4x4x64xf32>
    %19 = arith.addf %15, %18 : vector<4x4x64xf32>
    %20 = tpu.iota {dimensions = array<i32: 0>} : vector<4x32xi32>
    %c2_i32_10 = arith.constant 2 : i32
    %21 = vector.broadcast %c2_i32_10 : i32 to vector<4x32xi32>
    %22 = arith.cmpi slt, %20, %21 : vector<4x32xi32>
    %23 = tpu.iota {dimensions = array<i32: 1>} : vector<4x32xi32>
    %c16_i32 = arith.constant 16 : i32
    %24 = vector.broadcast %c16_i32 : i32 to vector<4x32xi32>
    %25 = arith.cmpi slt, %23, %24 : vector<4x32xi32>
    %26 = arith.xori %22, %25 : vector<4x32xi1>
    %cst_11 = arith.constant dense<true> : vector<4x32xi1>
    %27 = arith.xori %26, %cst_11 : vector<4x32xi1>
    %28 = arith.extui %27 : vector<4x32xi1> to vector<4x32xi32>
    %29 = arith.sitofp %28 : vector<4x32xi32> to vector<4x32xf32>
    %c0_12 = arith.constant 0 : index
    %c0_13 = arith.constant 0 : index
    %30 = vector.load %arg1[%c0_12, %c0_13] : memref<4x1xi32, #tpu.memory_space<vmem>>, vector<4x1xi32>
    %c0_14 = arith.constant 0 : index
    %c0_15 = arith.constant 0 : index
    %31 = vector.load %arg3[%c0_14, %c0_15] : memref<32x64xf32, #tpu.memory_space<vmem>>, vector<32x64xf32>
    %cst_16 = arith.constant 0.000000e+00 : f32
    %32 = vector.broadcast %cst_16 : f32 to vector<4x16xf32>
    %cst_17 = arith.constant 0.000000e+00 : f32
    %33 = vector.broadcast %cst_17 : f32 to vector<4x16xf32>
    %34 = tpu.concatenate %32, %32 in 1 : vector<4x16xf32>, vector<4x16xf32> -> vector<4x32xf32>
    %35 = arith.mulf %34, %29 : vector<4x32xf32>
    %36 = vector.extract_strided_slice %19 {offsets = [0, 0, 0], sizes = [4, 1, 64], strides = [1, 1, 1]} : vector<4x4x64xf32> to vector<4x1x64xf32>
    %37 = vector.shape_cast %36 : vector<4x1x64xf32> to vector<4x64xf32>
    %cst_18 = arith.constant dense<0.000000e+00> : vector<4x64xf32>
    %38 = tpu.matmul %35, %31, %cst_18 {dimension_numbers = #tpu.dot_dimension_numbers<[1], [0], [0], [1], [0, 0, 1, 1], [], []>} : vector<4x32xf32>, vector<32x64xf32>, vector<4x64xf32> -> vector<4x64xf32>
    %39 = arith.addf %37, %38 : vector<4x64xf32>
    %40 = vector.extract_strided_slice %39 {offsets = [0, 0], sizes = [4, 16], strides = [1, 1]} : vector<4x64xf32> to vector<4x16xf32>
    %41 = arith.negf %40 : vector<4x16xf32>
    %42 = math.exp %41 : vector<4x16xf32>
    %cst_19 = arith.constant 1.000000e+00 : f32
    %43 = vector.broadcast %cst_19 : f32 to vector<4x16xf32>
    %44 = arith.addf %43, %42 : vector<4x16xf32>
    %45 = arith.divf %43, %44 : vector<4x16xf32>
    %46 = vector.extract_strided_slice %39 {offsets = [0, 16], sizes = [4, 16], strides = [1, 1]} : vector<4x64xf32> to vector<4x16xf32>
    %47 = arith.negf %46 : vector<4x16xf32>
    %48 = math.exp %47 : vector<4x16xf32>
    %cst_20 = arith.constant 1.000000e+00 : f32
    %49 = vector.broadcast %cst_20 : f32 to vector<4x16xf32>
    %50 = arith.addf %49, %48 : vector<4x16xf32>
    %51 = arith.divf %49, %50 : vector<4x16xf32>
    %52 = vector.extract_strided_slice %39 {offsets = [0, 32], sizes = [4, 16], strides = [1, 1]} : vector<4x64xf32> to vector<4x16xf32>
    %53 = math.tanh %52 : vector<4x16xf32>
    %54 = vector.extract_strided_slice %39 {offsets = [0, 48], sizes = [4, 16], strides = [1, 1]} : vector<4x64xf32> to vector<4x16xf32>
    %55 = arith.negf %54 : vector<4x16xf32>
    %56 = math.exp %55 : vector<4x16xf32>
    %cst_21 = arith.constant 1.000000e+00 : f32
    %57 = vector.broadcast %cst_21 : f32 to vector<4x16xf32>
    %58 = arith.addf %57, %56 : vector<4x16xf32>
    %59 = arith.divf %57, %58 : vector<4x16xf32>
    %60 = arith.mulf %51, %33 : vector<4x16xf32>
    %61 = arith.mulf %45, %53 : vector<4x16xf32>
    %62 = arith.addf %60, %61 : vector<4x16xf32>
    %63 = math.tanh %62 : vector<4x16xf32>
    %64 = arith.mulf %59, %63 : vector<4x16xf32>
    %c0_i32 = arith.constant 0 : i32
    %65 = vector.broadcast %c0_i32 : i32 to vector<4x1xi32>
    %66 = arith.cmpi sgt, %30, %65 : vector<4x1xi32>
    %67 = vector.shape_cast %66 : vector<4x1xi1> to vector<4x1xi1>
    %68 = vector.broadcast %67 : vector<4x1xi1> to vector<4x16xi1>
    %69 = arith.select %68, %62, %33 : vector<4x16xi1>, vector<4x16xf32>
    %70 = vector.shape_cast %66 : vector<4x1xi1> to vector<4x1xi1>
    %71 = vector.broadcast %70 : vector<4x1xi1> to vector<4x16xi1>
    %72 = arith.select %71, %64, %32 : vector<4x16xi1>, vector<4x16xf32>
    %cst_22 = arith.constant 0.000000e+00 : f32
    %73 = vector.shape_cast %66 : vector<4x1xi1> to vector<4x1xi1>
    %74 = vector.broadcast %73 : vector<4x1xi1> to vector<4x16xi1>
    %75 = vector.broadcast %cst_22 : f32 to vector<4x16xf32>
    %76 = arith.select %74, %64, %75 : vector<4x16xi1>, vector<4x16xf32>
    %77 = tpu.concatenate %72, %72 in 1 : vector<4x16xf32>, vector<4x16xf32> -> vector<4x32xf32>
    %78 = arith.mulf %77, %29 : vector<4x32xf32>
    %79 = vector.extract_strided_slice %19 {offsets = [0, 1, 0], sizes = [4, 1, 64], strides = [1, 1, 1]} : vector<4x4x64xf32> to vector<4x1x64xf32>
    %80 = vector.shape_cast %79 : vector<4x1x64xf32> to vector<4x64xf32>
    %cst_23 = arith.constant dense<0.000000e+00> : vector<4x64xf32>
    %81 = tpu.matmul %78, %31, %cst_23 {dimension_numbers = #tpu.dot_dimension_numbers<[1], [0], [0], [1], [0, 0, 1, 1], [], []>} : vector<4x32xf32>, vector<32x64xf32>, vector<4x64xf32> -> vector<4x64xf32>
    %82 = arith.addf %80, %81 : vector<4x64xf32>
    %83 = vector.extract_strided_slice %82 {offsets = [0, 0], sizes = [4, 16], strides = [1, 1]} : vector<4x64xf32> to vector<4x16xf32>
    %84 = arith.negf %83 : vector<4x16xf32>
    %85 = math.exp %84 : vector<4x16xf32>
    %cst_24 = arith.constant 1.000000e+00 : f32
    %86 = vector.broadcast %cst_24 : f32 to vector<4x16xf32>
    %87 = arith.addf %86, %85 : vector<4x16xf32>
    %88 = arith.divf %86, %87 : vector<4x16xf32>
    %89 = vector.extract_strided_slice %82 {offsets = [0, 16], sizes = [4, 16], strides = [1, 1]} : vector<4x64xf32> to vector<4x16xf32>
    %90 = arith.negf %89 : vector<4x16xf32>
    %91 = math.exp %90 : vector<4x16xf32>
    %cst_25 = arith.constant 1.000000e+00 : f32
    %92 = vector.broadcast %cst_25 : f32 to vector<4x16xf32>
    %93 = arith.addf %92, %91 : vector<4x16xf32>
    %94 = arith.divf %92, %93 : vector<4x16xf32>
    %95 = vector.extract_strided_slice %82 {offsets = [0, 32], sizes = [4, 16], strides = [1, 1]} : vector<4x64xf32> to vector<4x16xf32>
    %96 = math.tanh %95 : vector<4x16xf32>
    %97 = vector.extract_strided_slice %82 {offsets = [0, 48], sizes = [4, 16], strides = [1, 1]} : vector<4x64xf32> to vector<4x16xf32>
    %98 = arith.negf %97 : vector<4x16xf32>
    %99 = math.exp %98 : vector<4x16xf32>
    %cst_26 = arith.constant 1.000000e+00 : f32
    %100 = vector.broadcast %cst_26 : f32 to vector<4x16xf32>
    %101 = arith.addf %100, %99 : vector<4x16xf32>
    %102 = arith.divf %100, %101 : vector<4x16xf32>
    %103 = arith.mulf %94, %69 : vector<4x16xf32>
    %104 = arith.mulf %88, %96 : vector<4x16xf32>
    %105 = arith.addf %103, %104 : vector<4x16xf32>
    %106 = math.tanh %105 : vector<4x16xf32>
    %107 = arith.mulf %102, %106 : vector<4x16xf32>
    %c1_i32 = arith.constant 1 : i32
    %108 = vector.broadcast %c1_i32 : i32 to vector<4x1xi32>
    %109 = arith.cmpi sgt, %30, %108 : vector<4x1xi32>
    %110 = vector.shape_cast %109 : vector<4x1xi1> to vector<4x1xi1>
    %111 = vector.broadcast %110 : vector<4x1xi1> to vector<4x16xi1>
    %112 = arith.select %111, %105, %69 : vector<4x16xi1>, vector<4x16xf32>
    %113 = vector.shape_cast %109 : vector<4x1xi1> to vector<4x1xi1>
    %114 = vector.broadcast %113 : vector<4x1xi1> to vector<4x16xi1>
    %115 = arith.select %114, %107, %72 : vector<4x16xi1>, vector<4x16xf32>
    %cst_27 = arith.constant 0.000000e+00 : f32
    %116 = vector.shape_cast %109 : vector<4x1xi1> to vector<4x1xi1>
    %117 = vector.broadcast %116 : vector<4x1xi1> to vector<4x16xi1>
    %118 = vector.broadcast %cst_27 : f32 to vector<4x16xf32>
    %119 = arith.select %117, %107, %118 : vector<4x16xi1>, vector<4x16xf32>
    %120 = tpu.concatenate %115, %115 in 1 : vector<4x16xf32>, vector<4x16xf32> -> vector<4x32xf32>
    %121 = arith.mulf %120, %29 : vector<4x32xf32>
    %122 = vector.extract_strided_slice %19 {offsets = [0, 2, 0], sizes = [4, 1, 64], strides = [1, 1, 1]} : vector<4x4x64xf32> to vector<4x1x64xf32>
    %123 = vector.shape_cast %122 : vector<4x1x64xf32> to vector<4x64xf32>
    %cst_28 = arith.constant dense<0.000000e+00> : vector<4x64xf32>
    %124 = tpu.matmul %121, %31, %cst_28 {dimension_numbers = #tpu.dot_dimension_numbers<[1], [0], [0], [1], [0, 0, 1, 1], [], []>} : vector<4x32xf32>, vector<32x64xf32>, vector<4x64xf32> -> vector<4x64xf32>
    %125 = arith.addf %123, %124 : vector<4x64xf32>
    %126 = vector.extract_strided_slice %125 {offsets = [0, 0], sizes = [4, 16], strides = [1, 1]} : vector<4x64xf32> to vector<4x16xf32>
    %127 = arith.negf %126 : vector<4x16xf32>
    %128 = math.exp %127 : vector<4x16xf32>
    %cst_29 = arith.constant 1.000000e+00 : f32
    %129 = vector.broadcast %cst_29 : f32 to vector<4x16xf32>
    %130 = arith.addf %129, %128 : vector<4x16xf32>
    %131 = arith.divf %129, %130 : vector<4x16xf32>
    %132 = vector.extract_strided_slice %125 {offsets = [0, 16], sizes = [4, 16], strides = [1, 1]} : vector<4x64xf32> to vector<4x16xf32>
    %133 = arith.negf %132 : vector<4x16xf32>
    %134 = math.exp %133 : vector<4x16xf32>
    %cst_30 = arith.constant 1.000000e+00 : f32
    %135 = vector.broadcast %cst_30 : f32 to vector<4x16xf32>
    %136 = arith.addf %135, %134 : vector<4x16xf32>
    %137 = arith.divf %135, %136 : vector<4x16xf32>
    %138 = vector.extract_strided_slice %125 {offsets = [0, 32], sizes = [4, 16], strides = [1, 1]} : vector<4x64xf32> to vector<4x16xf32>
    %139 = math.tanh %138 : vector<4x16xf32>
    %140 = vector.extract_strided_slice %125 {offsets = [0, 48], sizes = [4, 16], strides = [1, 1]} : vector<4x64xf32> to vector<4x16xf32>
    %141 = arith.negf %140 : vector<4x16xf32>
    %142 = math.exp %141 : vector<4x16xf32>
    %cst_31 = arith.constant 1.000000e+00 : f32
    %143 = vector.broadcast %cst_31 : f32 to vector<4x16xf32>
    %144 = arith.addf %143, %142 : vector<4x16xf32>
    %145 = arith.divf %143, %144 : vector<4x16xf32>
    %146 = arith.mulf %137, %112 : vector<4x16xf32>
    %147 = arith.mulf %131, %139 : vector<4x16xf32>
    %148 = arith.addf %146, %147 : vector<4x16xf32>
    %149 = math.tanh %148 : vector<4x16xf32>
    %150 = arith.mulf %145, %149 : vector<4x16xf32>
    %c2_i32_32 = arith.constant 2 : i32
    %151 = vector.broadcast %c2_i32_32 : i32 to vector<4x1xi32>
    %152 = arith.cmpi sgt, %30, %151 : vector<4x1xi32>
    %153 = vector.shape_cast %152 : vector<4x1xi1> to vector<4x1xi1>
    %154 = vector.broadcast %153 : vector<4x1xi1> to vector<4x16xi1>
    %155 = arith.select %154, %148, %112 : vector<4x16xi1>, vector<4x16xf32>
    %156 = vector.shape_cast %152 : vector<4x1xi1> to vector<4x1xi1>
    %157 = vector.broadcast %156 : vector<4x1xi1> to vector<4x16xi1>
    %158 = arith.select %157, %150, %115 : vector<4x16xi1>, vector<4x16xf32>
    %cst_33 = arith.constant 0.000000e+00 : f32
    %159 = vector.shape_cast %152 : vector<4x1xi1> to vector<4x1xi1>
    %160 = vector.broadcast %159 : vector<4x1xi1> to vector<4x16xi1>
    %161 = vector.broadcast %cst_33 : f32 to vector<4x16xf32>
    %162 = arith.select %160, %150, %161 : vector<4x16xi1>, vector<4x16xf32>
    %163 = tpu.concatenate %158, %158 in 1 : vector<4x16xf32>, vector<4x16xf32> -> vector<4x32xf32>
    %164 = arith.mulf %163, %29 : vector<4x32xf32>
    %165 = vector.extract_strided_slice %19 {offsets = [0, 3, 0], sizes = [4, 1, 64], strides = [1, 1, 1]} : vector<4x4x64xf32> to vector<4x1x64xf32>
    %166 = vector.shape_cast %165 : vector<4x1x64xf32> to vector<4x64xf32>
    %cst_34 = arith.constant dense<0.000000e+00> : vector<4x64xf32>
    %167 = tpu.matmul %164, %31, %cst_34 {dimension_numbers = #tpu.dot_dimension_numbers<[1], [0], [0], [1], [0, 0, 1, 1], [], []>} : vector<4x32xf32>, vector<32x64xf32>, vector<4x64xf32> -> vector<4x64xf32>
    %168 = arith.addf %166, %167 : vector<4x64xf32>
    %169 = vector.extract_strided_slice %168 {offsets = [0, 0], sizes = [4, 16], strides = [1, 1]} : vector<4x64xf32> to vector<4x16xf32>
    %170 = arith.negf %169 : vector<4x16xf32>
    %171 = math.exp %170 : vector<4x16xf32>
    %cst_35 = arith.constant 1.000000e+00 : f32
    %172 = vector.broadcast %cst_35 : f32 to vector<4x16xf32>
    %173 = arith.addf %172, %171 : vector<4x16xf32>
    %174 = arith.divf %172, %173 : vector<4x16xf32>
    %175 = vector.extract_strided_slice %168 {offsets = [0, 16], sizes = [4, 16], strides = [1, 1]} : vector<4x64xf32> to vector<4x16xf32>
    %176 = arith.negf %175 : vector<4x16xf32>
    %177 = math.exp %176 : vector<4x16xf32>
    %cst_36 = arith.constant 1.000000e+00 : f32
    %178 = vector.broadcast %cst_36 : f32 to vector<4x16xf32>
    %179 = arith.addf %178, %177 : vector<4x16xf32>
    %180 = arith.divf %178, %179 : vector<4x16xf32>
    %181 = vector.extract_strided_slice %168 {offsets = [0, 32], sizes = [4, 16], strides = [1, 1]} : vector<4x64xf32> to vector<4x16xf32>
    %182 = math.tanh %181 : vector<4x16xf32>
    %183 = vector.extract_strided_slice %168 {offsets = [0, 48], sizes = [4, 16], strides = [1, 1]} : vector<4x64xf32> to vector<4x16xf32>
    %184 = arith.negf %183 : vector<4x16xf32>
    %185 = math.exp %184 : vector<4x16xf32>
    %cst_37 = arith.constant 1.000000e+00 : f32
    %186 = vector.broadcast %cst_37 : f32 to vector<4x16xf32>
    %187 = arith.addf %186, %185 : vector<4x16xf32>
    %188 = arith.divf %186, %187 : vector<4x16xf32>
    %189 = arith.mulf %180, %155 : vector<4x16xf32>
    %190 = arith.mulf %174, %182 : vector<4x16xf32>
    %191 = arith.addf %189, %190 : vector<4x16xf32>
    %192 = math.tanh %191 : vector<4x16xf32>
    %193 = arith.mulf %188, %192 : vector<4x16xf32>
    %c3_i32 = arith.constant 3 : i32
    %194 = vector.broadcast %c3_i32 : i32 to vector<4x1xi32>
    %195 = arith.cmpi sgt, %30, %194 : vector<4x1xi32>
    %cst_38 = arith.constant 0.000000e+00 : f32
    %196 = vector.shape_cast %195 : vector<4x1xi1> to vector<4x1xi1>
    %197 = vector.broadcast %196 : vector<4x1xi1> to vector<4x16xi1>
    %198 = vector.broadcast %cst_38 : f32 to vector<4x16xf32>
    %199 = arith.select %197, %193, %198 : vector<4x16xi1>, vector<4x16xf32>
    %200 = tpu.concatenate %76, %119, %162, %199 in 1 : vector<4x16xf32>, vector<4x16xf32>, vector<4x16xf32>, vector<4x16xf32> -> vector<4x64xf32>
    %c0_39 = arith.constant 0 : index
    %c0_40 = arith.constant 0 : index
    %201 = vector.load %arg5[%c0_39, %c0_40] : memref<4x64xf32, #tpu.memory_space<vmem>>, vector<4x64xf32>
    tpu.vector_store %arg5[%c0_39, %c0_40], %200 {strides = array<i32>} : memref<4x64xf32, #tpu.memory_space<vmem>>, vector<4x64xf32>,
    return
  }
}

module attributes {stable_mosaic.version = 11 : i64} {
  func.func @_bilstm_kernel(%arg0: memref<4x8x32xf32, #tpu.memory_space<vmem>>, %arg1: memref<4x1xi32, #tpu.memory_space<vmem>>, %arg2: memref<2x32x64xf32, #tpu.memory_space<vmem>>, %arg3: memref<32x64xf32, #tpu.memory_space<vmem>>, %arg4: memref<4x64xf32, #tpu.memory_space<vmem>>, %arg5: memref<4x128xf32, #tpu.memory_space<vmem>>) attributes {dimension_semantics = [], scalar_prefetch = 0 : i64, scratch_operands = 0 : i64, tpu.core_type = #tpu.core_type<tc>} {
    %c0 = arith.constant 0 : index
    %c0_0 = arith.constant 0 : index
    %c0_1 = arith.constant 0 : index
    %0 = vector.load %arg0[%c0, %c0_0, %c0_1] : memref<4x8x32xf32, #tpu.memory_space<vmem>>, vector<4x8x32xf32>
    %1 = vector.shape_cast %0 : vector<4x8x32xf32> to vector<32x32xf32>
    %c0_2 = arith.constant 0 : index
    %c0_3 = arith.constant 0 : index
    %c0_4 = arith.constant 0 : index
    %2 = vector.load %arg2[%c0_2, %c0_3, %c0_4] : memref<2x32x64xf32, #tpu.memory_space<vmem>>, vector<1x32x64xf32>
    %3 = vector.shape_cast %2 : vector<1x32x64xf32> to vector<32x64xf32>
    %cst = arith.constant dense<0.000000e+00> : vector<32x64xf32>
    %4 = tpu.matmul %1, %3, %cst {dimension_numbers = #tpu.dot_dimension_numbers<[1], [0], [0], [1], [0, 0, 1, 1], [], []>} : vector<32x32xf32>, vector<32x64xf32>, vector<32x64xf32> -> vector<32x64xf32>
    %5 = vector.shape_cast %4 : vector<32x64xf32> to vector<4x8x64xf32>
    %c1 = arith.constant 1 : index
    %c0_5 = arith.constant 0 : index
    %c0_6 = arith.constant 0 : index
    %6 = vector.load %arg2[%c1, %c0_5, %c0_6] : memref<2x32x64xf32, #tpu.memory_space<vmem>>, vector<1x32x64xf32>
    %7 = vector.shape_cast %6 : vector<1x32x64xf32> to vector<32x64xf32>
    %cst_7 = arith.constant dense<0.000000e+00> : vector<32x64xf32>
    %8 = tpu.matmul %1, %7, %cst_7 {dimension_numbers = #tpu.dot_dimension_numbers<[1], [0], [0], [1], [0, 0, 1, 1], [], []>} : vector<32x32xf32>, vector<32x64xf32>, vector<32x64xf32> -> vector<32x64xf32>
    %9 = vector.shape_cast %8 : vector<32x64xf32> to vector<4x8x64xf32>
    %10 = tpu.iota {dimensions = array<i32: 0>} : vector<4x1x1xi32>
    %c2_i32 = arith.constant 2 : i32
    %11 = vector.broadcast %c2_i32 : i32 to vector<4x1x1xi32>
    %12 = arith.cmpi slt, %10, %11 : vector<4x1x1xi32>
    %13 = vector.shape_cast %12 : vector<4x1x1xi1> to vector<4x1x1xi1>
    %14 = vector.broadcast %13 : vector<4x1x1xi1> to vector<4x8x64xi1>
    %15 = arith.select %14, %5, %9 : vector<4x8x64xi1>, vector<4x8x64xf32>
    %c0_8 = arith.constant 0 : index
    %c0_9 = arith.constant 0 : index
    %16 = vector.load %arg4[%c0_8, %c0_9] : memref<4x64xf32, #tpu.memory_space<vmem>>, vector<4x64xf32>
    %17 = vector.shape_cast %16 : vector<4x64xf32> to vector<4x1x64xf32>
    %18 = vector.broadcast %17 : vector<4x1x64xf32> to vector<4x8x64xf32>
    %19 = arith.addf %15, %18 : vector<4x8x64xf32>
    %20 = tpu.iota {dimensions = array<i32: 0>} : vector<4x32xi32>
    %c2_i32_10 = arith.constant 2 : i32
    %21 = vector.broadcast %c2_i32_10 : i32 to vector<4x32xi32>
    %22 = arith.cmpi slt, %20, %21 : vector<4x32xi32>
    %23 = tpu.iota {dimensions = array<i32: 1>} : vector<4x32xi32>
    %c16_i32 = arith.constant 16 : i32
    %24 = vector.broadcast %c16_i32 : i32 to vector<4x32xi32>
    %25 = arith.cmpi slt, %23, %24 : vector<4x32xi32>
    %26 = arith.xori %22, %25 : vector<4x32xi1>
    %cst_11 = arith.constant dense<true> : vector<4x32xi1>
    %27 = arith.xori %26, %cst_11 : vector<4x32xi1>
    %28 = arith.extui %27 : vector<4x32xi1> to vector<4x32xi32>
    %29 = arith.sitofp %28 : vector<4x32xi32> to vector<4x32xf32>
    %c0_12 = arith.constant 0 : index
    %c0_13 = arith.constant 0 : index
    %30 = vector.load %arg1[%c0_12, %c0_13] : memref<4x1xi32, #tpu.memory_space<vmem>>, vector<4x1xi32>
    %c0_14 = arith.constant 0 : index
    %c0_15 = arith.constant 0 : index
    %31 = vector.load %arg3[%c0_14, %c0_15] : memref<32x64xf32, #tpu.memory_space<vmem>>, vector<32x64xf32>
    %cst_16 = arith.constant 0.000000e+00 : f32
    %32 = vector.broadcast %cst_16 : f32 to vector<4x16xf32>
    %cst_17 = arith.constant 0.000000e+00 : f32
    %33 = vector.broadcast %cst_17 : f32 to vector<4x16xf32>
    %34 = tpu.concatenate %32, %32 in 1 : vector<4x16xf32>, vector<4x16xf32> -> vector<4x32xf32>
    %35 = arith.mulf %34, %29 : vector<4x32xf32>
    %36 = vector.extract_strided_slice %19 {offsets = [0, 0, 0], sizes = [4, 1, 64], strides = [1, 1, 1]} : vector<4x8x64xf32> to vector<4x1x64xf32>
    %37 = vector.shape_cast %36 : vector<4x1x64xf32> to vector<4x64xf32>
    %cst_18 = arith.constant dense<0.000000e+00> : vector<4x64xf32>
    %38 = tpu.matmul %35, %31, %cst_18 {dimension_numbers = #tpu.dot_dimension_numbers<[1], [0], [0], [1], [0, 0, 1, 1], [], []>} : vector<4x32xf32>, vector<32x64xf32>, vector<4x64xf32> -> vector<4x64xf32>
    %39 = arith.addf %37, %38 : vector<4x64xf32>
    %40 = vector.extract_strided_slice %39 {offsets = [0, 0], sizes = [4, 16], strides = [1, 1]} : vector<4x64xf32> to vector<4x16xf32>
    %41 = arith.negf %40 : vector<4x16xf32>
    %42 = math.exp %41 : vector<4x16xf32>
    %cst_19 = arith.constant 1.000000e+00 : f32
    %43 = vector.broadcast %cst_19 : f32 to vector<4x16xf32>
    %44 = arith.addf %43, %42 : vector<4x16xf32>
    %45 = arith.divf %43, %44 : vector<4x16xf32>
    %46 = vector.extract_strided_slice %39 {offsets = [0, 16], sizes = [4, 16], strides = [1, 1]} : vector<4x64xf32> to vector<4x16xf32>
    %47 = arith.negf %46 : vector<4x16xf32>
    %48 = math.exp %47 : vector<4x16xf32>
    %cst_20 = arith.constant 1.000000e+00 : f32
    %49 = vector.broadcast %cst_20 : f32 to vector<4x16xf32>
    %50 = arith.addf %49, %48 : vector<4x16xf32>
    %51 = arith.divf %49, %50 : vector<4x16xf32>
    %52 = vector.extract_strided_slice %39 {offsets = [0, 32], sizes = [4, 16], strides = [1, 1]} : vector<4x64xf32> to vector<4x16xf32>
    %53 = math.tanh %52 : vector<4x16xf32>
    %54 = vector.extract_strided_slice %39 {offsets = [0, 48], sizes = [4, 16], strides = [1, 1]} : vector<4x64xf32> to vector<4x16xf32>
    %55 = arith.negf %54 : vector<4x16xf32>
    %56 = math.exp %55 : vector<4x16xf32>
    %cst_21 = arith.constant 1.000000e+00 : f32
    %57 = vector.broadcast %cst_21 : f32 to vector<4x16xf32>
    %58 = arith.addf %57, %56 : vector<4x16xf32>
    %59 = arith.divf %57, %58 : vector<4x16xf32>
    %60 = arith.mulf %51, %33 : vector<4x16xf32>
    %61 = arith.mulf %45, %53 : vector<4x16xf32>
    %62 = arith.addf %60, %61 : vector<4x16xf32>
    %63 = math.tanh %62 : vector<4x16xf32>
    %64 = arith.mulf %59, %63 : vector<4x16xf32>
    %c0_i32 = arith.constant 0 : i32
    %65 = vector.broadcast %c0_i32 : i32 to vector<4x1xi32>
    %66 = arith.cmpi sgt, %30, %65 : vector<4x1xi32>
    %67 = vector.shape_cast %66 : vector<4x1xi1> to vector<4x1xi1>
    %68 = vector.broadcast %67 : vector<4x1xi1> to vector<4x16xi1>
    %69 = arith.select %68, %62, %33 : vector<4x16xi1>, vector<4x16xf32>
    %70 = vector.shape_cast %66 : vector<4x1xi1> to vector<4x1xi1>
    %71 = vector.broadcast %70 : vector<4x1xi1> to vector<4x16xi1>
    %72 = arith.select %71, %64, %32 : vector<4x16xi1>, vector<4x16xf32>
    %cst_22 = arith.constant 0.000000e+00 : f32
    %73 = vector.shape_cast %66 : vector<4x1xi1> to vector<4x1xi1>
    %74 = vector.broadcast %73 : vector<4x1xi1> to vector<4x16xi1>
    %75 = vector.broadcast %cst_22 : f32 to vector<4x16xf32>
    %76 = arith.select %74, %64, %75 : vector<4x16xi1>, vector<4x16xf32>
    %77 = tpu.concatenate %72, %72 in 1 : vector<4x16xf32>, vector<4x16xf32> -> vector<4x32xf32>
    %78 = arith.mulf %77, %29 : vector<4x32xf32>
    %79 = vector.extract_strided_slice %19 {offsets = [0, 1, 0], sizes = [4, 1, 64], strides = [1, 1, 1]} : vector<4x8x64xf32> to vector<4x1x64xf32>
    %80 = vector.shape_cast %79 : vector<4x1x64xf32> to vector<4x64xf32>
    %cst_23 = arith.constant dense<0.000000e+00> : vector<4x64xf32>
    %81 = tpu.matmul %78, %31, %cst_23 {dimension_numbers = #tpu.dot_dimension_numbers<[1], [0], [0], [1], [0, 0, 1, 1], [], []>} : vector<4x32xf32>, vector<32x64xf32>, vector<4x64xf32> -> vector<4x64xf32>
    %82 = arith.addf %80, %81 : vector<4x64xf32>
    %83 = vector.extract_strided_slice %82 {offsets = [0, 0], sizes = [4, 16], strides = [1, 1]} : vector<4x64xf32> to vector<4x16xf32>
    %84 = arith.negf %83 : vector<4x16xf32>
    %85 = math.exp %84 : vector<4x16xf32>
    %cst_24 = arith.constant 1.000000e+00 : f32
    %86 = vector.broadcast %cst_24 : f32 to vector<4x16xf32>
    %87 = arith.addf %86, %85 : vector<4x16xf32>
    %88 = arith.divf %86, %87 : vector<4x16xf32>
    %89 = vector.extract_strided_slice %82 {offsets = [0, 16], sizes = [4, 16], strides = [1, 1]} : vector<4x64xf32> to vector<4x16xf32>
    %90 = arith.negf %89 : vector<4x16xf32>
    %91 = math.exp %90 : vector<4x16xf32>
    %cst_25 = arith.constant 1.000000e+00 : f32
    %92 = vector.broadcast %cst_25 : f32 to vector<4x16xf32>
    %93 = arith.addf %92, %91 : vector<4x16xf32>
    %94 = arith.divf %92, %93 : vector<4x16xf32>
    %95 = vector.extract_strided_slice %82 {offsets = [0, 32], sizes = [4, 16], strides = [1, 1]} : vector<4x64xf32> to vector<4x16xf32>
    %96 = math.tanh %95 : vector<4x16xf32>
    %97 = vector.extract_strided_slice %82 {offsets = [0, 48], sizes = [4, 16], strides = [1, 1]} : vector<4x64xf32> to vector<4x16xf32>
    %98 = arith.negf %97 : vector<4x16xf32>
    %99 = math.exp %98 : vector<4x16xf32>
    %cst_26 = arith.constant 1.000000e+00 : f32
    %100 = vector.broadcast %cst_26 : f32 to vector<4x16xf32>
    %101 = arith.addf %100, %99 : vector<4x16xf32>
    %102 = arith.divf %100, %101 : vector<4x16xf32>
    %103 = arith.mulf %94, %69 : vector<4x16xf32>
    %104 = arith.mulf %88, %96 : vector<4x16xf32>
    %105 = arith.addf %103, %104 : vector<4x16xf32>
    %106 = math.tanh %105 : vector<4x16xf32>
    %107 = arith.mulf %102, %106 : vector<4x16xf32>
    %c1_i32 = arith.constant 1 : i32
    %108 = vector.broadcast %c1_i32 : i32 to vector<4x1xi32>
    %109 = arith.cmpi sgt, %30, %108 : vector<4x1xi32>
    %110 = vector.shape_cast %109 : vector<4x1xi1> to vector<4x1xi1>
    %111 = vector.broadcast %110 : vector<4x1xi1> to vector<4x16xi1>
    %112 = arith.select %111, %105, %69 : vector<4x16xi1>, vector<4x16xf32>
    %113 = vector.shape_cast %109 : vector<4x1xi1> to vector<4x1xi1>
    %114 = vector.broadcast %113 : vector<4x1xi1> to vector<4x16xi1>
    %115 = arith.select %114, %107, %72 : vector<4x16xi1>, vector<4x16xf32>
    %cst_27 = arith.constant 0.000000e+00 : f32
    %116 = vector.shape_cast %109 : vector<4x1xi1> to vector<4x1xi1>
    %117 = vector.broadcast %116 : vector<4x1xi1> to vector<4x16xi1>
    %118 = vector.broadcast %cst_27 : f32 to vector<4x16xf32>
    %119 = arith.select %117, %107, %118 : vector<4x16xi1>, vector<4x16xf32>
    %120 = tpu.concatenate %115, %115 in 1 : vector<4x16xf32>, vector<4x16xf32> -> vector<4x32xf32>
    %121 = arith.mulf %120, %29 : vector<4x32xf32>
    %122 = vector.extract_strided_slice %19 {offsets = [0, 2, 0], sizes = [4, 1, 64], strides = [1, 1, 1]} : vector<4x8x64xf32> to vector<4x1x64xf32>
    %123 = vector.shape_cast %122 : vector<4x1x64xf32> to vector<4x64xf32>
    %cst_28 = arith.constant dense<0.000000e+00> : vector<4x64xf32>
    %124 = tpu.matmul %121, %31, %cst_28 {dimension_numbers = #tpu.dot_dimension_numbers<[1], [0], [0], [1], [0, 0, 1, 1], [], []>} : vector<4x32xf32>, vector<32x64xf32>, vector<4x64xf32> -> vector<4x64xf32>
    %125 = arith.addf %123, %124 : vector<4x64xf32>
    %126 = vector.extract_strided_slice %125 {offsets = [0, 0], sizes = [4, 16], strides = [1, 1]} : vector<4x64xf32> to vector<4x16xf32>
    %127 = arith.negf %126 : vector<4x16xf32>
    %128 = math.exp %127 : vector<4x16xf32>
    %cst_29 = arith.constant 1.000000e+00 : f32
    %129 = vector.broadcast %cst_29 : f32 to vector<4x16xf32>
    %130 = arith.addf %129, %128 : vector<4x16xf32>
    %131 = arith.divf %129, %130 : vector<4x16xf32>
    %132 = vector.extract_strided_slice %125 {offsets = [0, 16], sizes = [4, 16], strides = [1, 1]} : vector<4x64xf32> to vector<4x16xf32>
    %133 = arith.negf %132 : vector<4x16xf32>
    %134 = math.exp %133 : vector<4x16xf32>
    %cst_30 = arith.constant 1.000000e+00 : f32
    %135 = vector.broadcast %cst_30 : f32 to vector<4x16xf32>
    %136 = arith.addf %135, %134 : vector<4x16xf32>
    %137 = arith.divf %135, %136 : vector<4x16xf32>
    %138 = vector.extract_strided_slice %125 {offsets = [0, 32], sizes = [4, 16], strides = [1, 1]} : vector<4x64xf32> to vector<4x16xf32>
    %139 = math.tanh %138 : vector<4x16xf32>
    %140 = vector.extract_strided_slice %125 {offsets = [0, 48], sizes = [4, 16], strides = [1, 1]} : vector<4x64xf32> to vector<4x16xf32>
    %141 = arith.negf %140 : vector<4x16xf32>
    %142 = math.exp %141 : vector<4x16xf32>
    %cst_31 = arith.constant 1.000000e+00 : f32
    %143 = vector.broadcast %cst_31 : f32 to vector<4x16xf32>
    %144 = arith.addf %143, %142 : vector<4x16xf32>
    %145 = arith.divf %143, %144 : vector<4x16xf32>
    %146 = arith.mulf %137, %112 : vector<4x16xf32>
    %147 = arith.mulf %131, %139 : vector<4x16xf32>
    %148 = arith.addf %146, %147 : vector<4x16xf32>
    %149 = math.tanh %148 : vector<4x16xf32>
    %150 = arith.mulf %145, %149 : vector<4x16xf32>
    %c2_i32_32 = arith.constant 2 : i32
    %151 = vector.broadcast %c2_i32_32 : i32 to vector<4x1xi32>
    %152 = arith.cmpi sgt, %30, %151 : vector<4x1xi32>
    %153 = vector.shape_cast %152 : vector<4x1xi1> to vector<4x1xi1>
    %154 = vector.broadcast %153 : vector<4x1xi1> to vector<4x16xi1>
    %155 = arith.select %154, %148, %112 : vector<4x16xi1>, vector<4x16xf32>
    %156 = vector.shape_cast %152 : vector<4x1xi1> to vector<4x1xi1>
    %157 = vector.broadcast %156 : vector<4x1xi1> to vector<4x16xi1>
    %158 = arith.select %157, %150, %115 : vector<4x16xi1>, vector<4x16xf32>
    %cst_33 = arith.constant 0.000000e+00 : f32
    %159 = vector.shape_cast %152 : vector<4x1xi1> to vector<4x1xi1>
    %160 = vector.broadcast %159 : vector<4x1xi1> to vector<4x16xi1>
    %161 = vector.broadcast %cst_33 : f32 to vector<4x16xf32>
    %162 = arith.select %160, %150, %161 : vector<4x16xi1>, vector<4x16xf32>
    %163 = tpu.concatenate %158, %158 in 1 : vector<4x16xf32>, vector<4x16xf32> -> vector<4x32xf32>
    %164 = arith.mulf %163, %29 : vector<4x32xf32>
    %165 = vector.extract_strided_slice %19 {offsets = [0, 3, 0], sizes = [4, 1, 64], strides = [1, 1, 1]} : vector<4x8x64xf32> to vector<4x1x64xf32>
    %166 = vector.shape_cast %165 : vector<4x1x64xf32> to vector<4x64xf32>
    %cst_34 = arith.constant dense<0.000000e+00> : vector<4x64xf32>
    %167 = tpu.matmul %164, %31, %cst_34 {dimension_numbers = #tpu.dot_dimension_numbers<[1], [0], [0], [1], [0, 0, 1, 1], [], []>} : vector<4x32xf32>, vector<32x64xf32>, vector<4x64xf32> -> vector<4x64xf32>
    %168 = arith.addf %166, %167 : vector<4x64xf32>
    %169 = vector.extract_strided_slice %168 {offsets = [0, 0], sizes = [4, 16], strides = [1, 1]} : vector<4x64xf32> to vector<4x16xf32>
    %170 = arith.negf %169 : vector<4x16xf32>
    %171 = math.exp %170 : vector<4x16xf32>
    %cst_35 = arith.constant 1.000000e+00 : f32
    %172 = vector.broadcast %cst_35 : f32 to vector<4x16xf32>
    %173 = arith.addf %172, %171 : vector<4x16xf32>
    %174 = arith.divf %172, %173 : vector<4x16xf32>
    %175 = vector.extract_strided_slice %168 {offsets = [0, 16], sizes = [4, 16], strides = [1, 1]} : vector<4x64xf32> to vector<4x16xf32>
    %176 = arith.negf %175 : vector<4x16xf32>
    %177 = math.exp %176 : vector<4x16xf32>
    %cst_36 = arith.constant 1.000000e+00 : f32
    %178 = vector.broadcast %cst_36 : f32 to vector<4x16xf32>
    %179 = arith.addf %178, %177 : vector<4x16xf32>
    %180 = arith.divf %178, %179 : vector<4x16xf32>
    %181 = vector.extract_strided_slice %168 {offsets = [0, 32], sizes = [4, 16], strides = [1, 1]} : vector<4x64xf32> to vector<4x16xf32>
    %182 = math.tanh %181 : vector<4x16xf32>
    %183 = vector.extract_strided_slice %168 {offsets = [0, 48], sizes = [4, 16], strides = [1, 1]} : vector<4x64xf32> to vector<4x16xf32>
    %184 = arith.negf %183 : vector<4x16xf32>
    %185 = math.exp %184 : vector<4x16xf32>
    %cst_37 = arith.constant 1.000000e+00 : f32
    %186 = vector.broadcast %cst_37 : f32 to vector<4x16xf32>
    %187 = arith.addf %186, %185 : vector<4x16xf32>
    %188 = arith.divf %186, %187 : vector<4x16xf32>
    %189 = arith.mulf %180, %155 : vector<4x16xf32>
    %190 = arith.mulf %174, %182 : vector<4x16xf32>
    %191 = arith.addf %189, %190 : vector<4x16xf32>
    %192 = math.tanh %191 : vector<4x16xf32>
    %193 = arith.mulf %188, %192 : vector<4x16xf32>
    %c3_i32 = arith.constant 3 : i32
    %194 = vector.broadcast %c3_i32 : i32 to vector<4x1xi32>
    %195 = arith.cmpi sgt, %30, %194 : vector<4x1xi32>
    %196 = vector.shape_cast %195 : vector<4x1xi1> to vector<4x1xi1>
    %197 = vector.broadcast %196 : vector<4x1xi1> to vector<4x16xi1>
    %198 = arith.select %197, %191, %155 : vector<4x16xi1>, vector<4x16xf32>
    %199 = vector.shape_cast %195 : vector<4x1xi1> to vector<4x1xi1>
    %200 = vector.broadcast %199 : vector<4x1xi1> to vector<4x16xi1>
    %201 = arith.select %200, %193, %158 : vector<4x16xi1>, vector<4x16xf32>
    %cst_38 = arith.constant 0.000000e+00 : f32
    %202 = vector.shape_cast %195 : vector<4x1xi1> to vector<4x1xi1>
    %203 = vector.broadcast %202 : vector<4x1xi1> to vector<4x16xi1>
    %204 = vector.broadcast %cst_38 : f32 to vector<4x16xf32>
    %205 = arith.select %203, %193, %204 : vector<4x16xi1>, vector<4x16xf32>
    %206 = tpu.concatenate %201, %201 in 1 : vector<4x16xf32>, vector<4x16xf32> -> vector<4x32xf32>
    %207 = arith.mulf %206, %29 : vector<4x32xf32>
    %208 = vector.extract_strided_slice %19 {offsets = [0, 4, 0], sizes = [4, 1, 64], strides = [1, 1, 1]} : vector<4x8x64xf32> to vector<4x1x64xf32>
    %209 = vector.shape_cast %208 : vector<4x1x64xf32> to vector<4x64xf32>
    %cst_39 = arith.constant dense<0.000000e+00> : vector<4x64xf32>
    %210 = tpu.matmul %207, %31, %cst_39 {dimension_numbers = #tpu.dot_dimension_numbers<[1], [0], [0], [1], [0, 0, 1, 1], [], []>} : vector<4x32xf32>, vector<32x64xf32>, vector<4x64xf32> -> vector<4x64xf32>
    %211 = arith.addf %209, %210 : vector<4x64xf32>
    %212 = vector.extract_strided_slice %211 {offsets = [0, 0], sizes = [4, 16], strides = [1, 1]} : vector<4x64xf32> to vector<4x16xf32>
    %213 = arith.negf %212 : vector<4x16xf32>
    %214 = math.exp %213 : vector<4x16xf32>
    %cst_40 = arith.constant 1.000000e+00 : f32
    %215 = vector.broadcast %cst_40 : f32 to vector<4x16xf32>
    %216 = arith.addf %215, %214 : vector<4x16xf32>
    %217 = arith.divf %215, %216 : vector<4x16xf32>
    %218 = vector.extract_strided_slice %211 {offsets = [0, 16], sizes = [4, 16], strides = [1, 1]} : vector<4x64xf32> to vector<4x16xf32>
    %219 = arith.negf %218 : vector<4x16xf32>
    %220 = math.exp %219 : vector<4x16xf32>
    %cst_41 = arith.constant 1.000000e+00 : f32
    %221 = vector.broadcast %cst_41 : f32 to vector<4x16xf32>
    %222 = arith.addf %221, %220 : vector<4x16xf32>
    %223 = arith.divf %221, %222 : vector<4x16xf32>
    %224 = vector.extract_strided_slice %211 {offsets = [0, 32], sizes = [4, 16], strides = [1, 1]} : vector<4x64xf32> to vector<4x16xf32>
    %225 = math.tanh %224 : vector<4x16xf32>
    %226 = vector.extract_strided_slice %211 {offsets = [0, 48], sizes = [4, 16], strides = [1, 1]} : vector<4x64xf32> to vector<4x16xf32>
    %227 = arith.negf %226 : vector<4x16xf32>
    %228 = math.exp %227 : vector<4x16xf32>
    %cst_42 = arith.constant 1.000000e+00 : f32
    %229 = vector.broadcast %cst_42 : f32 to vector<4x16xf32>
    %230 = arith.addf %229, %228 : vector<4x16xf32>
    %231 = arith.divf %229, %230 : vector<4x16xf32>
    %232 = arith.mulf %223, %198 : vector<4x16xf32>
    %233 = arith.mulf %217, %225 : vector<4x16xf32>
    %234 = arith.addf %232, %233 : vector<4x16xf32>
    %235 = math.tanh %234 : vector<4x16xf32>
    %236 = arith.mulf %231, %235 : vector<4x16xf32>
    %c4_i32 = arith.constant 4 : i32
    %237 = vector.broadcast %c4_i32 : i32 to vector<4x1xi32>
    %238 = arith.cmpi sgt, %30, %237 : vector<4x1xi32>
    %239 = vector.shape_cast %238 : vector<4x1xi1> to vector<4x1xi1>
    %240 = vector.broadcast %239 : vector<4x1xi1> to vector<4x16xi1>
    %241 = arith.select %240, %234, %198 : vector<4x16xi1>, vector<4x16xf32>
    %242 = vector.shape_cast %238 : vector<4x1xi1> to vector<4x1xi1>
    %243 = vector.broadcast %242 : vector<4x1xi1> to vector<4x16xi1>
    %244 = arith.select %243, %236, %201 : vector<4x16xi1>, vector<4x16xf32>
    %cst_43 = arith.constant 0.000000e+00 : f32
    %245 = vector.shape_cast %238 : vector<4x1xi1> to vector<4x1xi1>
    %246 = vector.broadcast %245 : vector<4x1xi1> to vector<4x16xi1>
    %247 = vector.broadcast %cst_43 : f32 to vector<4x16xf32>
    %248 = arith.select %246, %236, %247 : vector<4x16xi1>, vector<4x16xf32>
    %249 = tpu.concatenate %244, %244 in 1 : vector<4x16xf32>, vector<4x16xf32> -> vector<4x32xf32>
    %250 = arith.mulf %249, %29 : vector<4x32xf32>
    %251 = vector.extract_strided_slice %19 {offsets = [0, 5, 0], sizes = [4, 1, 64], strides = [1, 1, 1]} : vector<4x8x64xf32> to vector<4x1x64xf32>
    %252 = vector.shape_cast %251 : vector<4x1x64xf32> to vector<4x64xf32>
    %cst_44 = arith.constant dense<0.000000e+00> : vector<4x64xf32>
    %253 = tpu.matmul %250, %31, %cst_44 {dimension_numbers = #tpu.dot_dimension_numbers<[1], [0], [0], [1], [0, 0, 1, 1], [], []>} : vector<4x32xf32>, vector<32x64xf32>, vector<4x64xf32> -> vector<4x64xf32>
    %254 = arith.addf %252, %253 : vector<4x64xf32>
    %255 = vector.extract_strided_slice %254 {offsets = [0, 0], sizes = [4, 16], strides = [1, 1]} : vector<4x64xf32> to vector<4x16xf32>
    %256 = arith.negf %255 : vector<4x16xf32>
    %257 = math.exp %256 : vector<4x16xf32>
    %cst_45 = arith.constant 1.000000e+00 : f32
    %258 = vector.broadcast %cst_45 : f32 to vector<4x16xf32>
    %259 = arith.addf %258, %257 : vector<4x16xf32>
    %260 = arith.divf %258, %259 : vector<4x16xf32>
    %261 = vector.extract_strided_slice %254 {offsets = [0, 16], sizes = [4, 16], strides = [1, 1]} : vector<4x64xf32> to vector<4x16xf32>
    %262 = arith.negf %261 : vector<4x16xf32>
    %263 = math.exp %262 : vector<4x16xf32>
    %cst_46 = arith.constant 1.000000e+00 : f32
    %264 = vector.broadcast %cst_46 : f32 to vector<4x16xf32>
    %265 = arith.addf %264, %263 : vector<4x16xf32>
    %266 = arith.divf %264, %265 : vector<4x16xf32>
    %267 = vector.extract_strided_slice %254 {offsets = [0, 32], sizes = [4, 16], strides = [1, 1]} : vector<4x64xf32> to vector<4x16xf32>
    %268 = math.tanh %267 : vector<4x16xf32>
    %269 = vector.extract_strided_slice %254 {offsets = [0, 48], sizes = [4, 16], strides = [1, 1]} : vector<4x64xf32> to vector<4x16xf32>
    %270 = arith.negf %269 : vector<4x16xf32>
    %271 = math.exp %270 : vector<4x16xf32>
    %cst_47 = arith.constant 1.000000e+00 : f32
    %272 = vector.broadcast %cst_47 : f32 to vector<4x16xf32>
    %273 = arith.addf %272, %271 : vector<4x16xf32>
    %274 = arith.divf %272, %273 : vector<4x16xf32>
    %275 = arith.mulf %266, %241 : vector<4x16xf32>
    %276 = arith.mulf %260, %268 : vector<4x16xf32>
    %277 = arith.addf %275, %276 : vector<4x16xf32>
    %278 = math.tanh %277 : vector<4x16xf32>
    %279 = arith.mulf %274, %278 : vector<4x16xf32>
    %c5_i32 = arith.constant 5 : i32
    %280 = vector.broadcast %c5_i32 : i32 to vector<4x1xi32>
    %281 = arith.cmpi sgt, %30, %280 : vector<4x1xi32>
    %282 = vector.shape_cast %281 : vector<4x1xi1> to vector<4x1xi1>
    %283 = vector.broadcast %282 : vector<4x1xi1> to vector<4x16xi1>
    %284 = arith.select %283, %277, %241 : vector<4x16xi1>, vector<4x16xf32>
    %285 = vector.shape_cast %281 : vector<4x1xi1> to vector<4x1xi1>
    %286 = vector.broadcast %285 : vector<4x1xi1> to vector<4x16xi1>
    %287 = arith.select %286, %279, %244 : vector<4x16xi1>, vector<4x16xf32>
    %cst_48 = arith.constant 0.000000e+00 : f32
    %288 = vector.shape_cast %281 : vector<4x1xi1> to vector<4x1xi1>
    %289 = vector.broadcast %288 : vector<4x1xi1> to vector<4x16xi1>
    %290 = vector.broadcast %cst_48 : f32 to vector<4x16xf32>
    %291 = arith.select %289, %279, %290 : vector<4x16xi1>, vector<4x16xf32>
    %292 = tpu.concatenate %287, %287 in 1 : vector<4x16xf32>, vector<4x16xf32> -> vector<4x32xf32>
    %293 = arith.mulf %292, %29 : vector<4x32xf32>
    %294 = vector.extract_strided_slice %19 {offsets = [0, 6, 0], sizes = [4, 1, 64], strides = [1, 1, 1]} : vector<4x8x64xf32> to vector<4x1x64xf32>
    %295 = vector.shape_cast %294 : vector<4x1x64xf32> to vector<4x64xf32>
    %cst_49 = arith.constant dense<0.000000e+00> : vector<4x64xf32>
    %296 = tpu.matmul %293, %31, %cst_49 {dimension_numbers = #tpu.dot_dimension_numbers<[1], [0], [0], [1], [0, 0, 1, 1], [], []>} : vector<4x32xf32>, vector<32x64xf32>, vector<4x64xf32> -> vector<4x64xf32>
    %297 = arith.addf %295, %296 : vector<4x64xf32>
    %298 = vector.extract_strided_slice %297 {offsets = [0, 0], sizes = [4, 16], strides = [1, 1]} : vector<4x64xf32> to vector<4x16xf32>
    %299 = arith.negf %298 : vector<4x16xf32>
    %300 = math.exp %299 : vector<4x16xf32>
    %cst_50 = arith.constant 1.000000e+00 : f32
    %301 = vector.broadcast %cst_50 : f32 to vector<4x16xf32>
    %302 = arith.addf %301, %300 : vector<4x16xf32>
    %303 = arith.divf %301, %302 : vector<4x16xf32>
    %304 = vector.extract_strided_slice %297 {offsets = [0, 16], sizes = [4, 16], strides = [1, 1]} : vector<4x64xf32> to vector<4x16xf32>
    %305 = arith.negf %304 : vector<4x16xf32>
    %306 = math.exp %305 : vector<4x16xf32>
    %cst_51 = arith.constant 1.000000e+00 : f32
    %307 = vector.broadcast %cst_51 : f32 to vector<4x16xf32>
    %308 = arith.addf %307, %306 : vector<4x16xf32>
    %309 = arith.divf %307, %308 : vector<4x16xf32>
    %310 = vector.extract_strided_slice %297 {offsets = [0, 32], sizes = [4, 16], strides = [1, 1]} : vector<4x64xf32> to vector<4x16xf32>
    %311 = math.tanh %310 : vector<4x16xf32>
    %312 = vector.extract_strided_slice %297 {offsets = [0, 48], sizes = [4, 16], strides = [1, 1]} : vector<4x64xf32> to vector<4x16xf32>
    %313 = arith.negf %312 : vector<4x16xf32>
    %314 = math.exp %313 : vector<4x16xf32>
    %cst_52 = arith.constant 1.000000e+00 : f32
    %315 = vector.broadcast %cst_52 : f32 to vector<4x16xf32>
    %316 = arith.addf %315, %314 : vector<4x16xf32>
    %317 = arith.divf %315, %316 : vector<4x16xf32>
    %318 = arith.mulf %309, %284 : vector<4x16xf32>
    %319 = arith.mulf %303, %311 : vector<4x16xf32>
    %320 = arith.addf %318, %319 : vector<4x16xf32>
    %321 = math.tanh %320 : vector<4x16xf32>
    %322 = arith.mulf %317, %321 : vector<4x16xf32>
    %c6_i32 = arith.constant 6 : i32
    %323 = vector.broadcast %c6_i32 : i32 to vector<4x1xi32>
    %324 = arith.cmpi sgt, %30, %323 : vector<4x1xi32>
    %325 = vector.shape_cast %324 : vector<4x1xi1> to vector<4x1xi1>
    %326 = vector.broadcast %325 : vector<4x1xi1> to vector<4x16xi1>
    %327 = arith.select %326, %320, %284 : vector<4x16xi1>, vector<4x16xf32>
    %328 = vector.shape_cast %324 : vector<4x1xi1> to vector<4x1xi1>
    %329 = vector.broadcast %328 : vector<4x1xi1> to vector<4x16xi1>
    %330 = arith.select %329, %322, %287 : vector<4x16xi1>, vector<4x16xf32>
    %cst_53 = arith.constant 0.000000e+00 : f32
    %331 = vector.shape_cast %324 : vector<4x1xi1> to vector<4x1xi1>
    %332 = vector.broadcast %331 : vector<4x1xi1> to vector<4x16xi1>
    %333 = vector.broadcast %cst_53 : f32 to vector<4x16xf32>
    %334 = arith.select %332, %322, %333 : vector<4x16xi1>, vector<4x16xf32>
    %335 = tpu.concatenate %330, %330 in 1 : vector<4x16xf32>, vector<4x16xf32> -> vector<4x32xf32>
    %336 = arith.mulf %335, %29 : vector<4x32xf32>
    %337 = vector.extract_strided_slice %19 {offsets = [0, 7, 0], sizes = [4, 1, 64], strides = [1, 1, 1]} : vector<4x8x64xf32> to vector<4x1x64xf32>
    %338 = vector.shape_cast %337 : vector<4x1x64xf32> to vector<4x64xf32>
    %cst_54 = arith.constant dense<0.000000e+00> : vector<4x64xf32>
    %339 = tpu.matmul %336, %31, %cst_54 {dimension_numbers = #tpu.dot_dimension_numbers<[1], [0], [0], [1], [0, 0, 1, 1], [], []>} : vector<4x32xf32>, vector<32x64xf32>, vector<4x64xf32> -> vector<4x64xf32>
    %340 = arith.addf %338, %339 : vector<4x64xf32>
    %341 = vector.extract_strided_slice %340 {offsets = [0, 0], sizes = [4, 16], strides = [1, 1]} : vector<4x64xf32> to vector<4x16xf32>
    %342 = arith.negf %341 : vector<4x16xf32>
    %343 = math.exp %342 : vector<4x16xf32>
    %cst_55 = arith.constant 1.000000e+00 : f32
    %344 = vector.broadcast %cst_55 : f32 to vector<4x16xf32>
    %345 = arith.addf %344, %343 : vector<4x16xf32>
    %346 = arith.divf %344, %345 : vector<4x16xf32>
    %347 = vector.extract_strided_slice %340 {offsets = [0, 16], sizes = [4, 16], strides = [1, 1]} : vector<4x64xf32> to vector<4x16xf32>
    %348 = arith.negf %347 : vector<4x16xf32>
    %349 = math.exp %348 : vector<4x16xf32>
    %cst_56 = arith.constant 1.000000e+00 : f32
    %350 = vector.broadcast %cst_56 : f32 to vector<4x16xf32>
    %351 = arith.addf %350, %349 : vector<4x16xf32>
    %352 = arith.divf %350, %351 : vector<4x16xf32>
    %353 = vector.extract_strided_slice %340 {offsets = [0, 32], sizes = [4, 16], strides = [1, 1]} : vector<4x64xf32> to vector<4x16xf32>
    %354 = math.tanh %353 : vector<4x16xf32>
    %355 = vector.extract_strided_slice %340 {offsets = [0, 48], sizes = [4, 16], strides = [1, 1]} : vector<4x64xf32> to vector<4x16xf32>
    %356 = arith.negf %355 : vector<4x16xf32>
    %357 = math.exp %356 : vector<4x16xf32>
    %cst_57 = arith.constant 1.000000e+00 : f32
    %358 = vector.broadcast %cst_57 : f32 to vector<4x16xf32>
    %359 = arith.addf %358, %357 : vector<4x16xf32>
    %360 = arith.divf %358, %359 : vector<4x16xf32>
    %361 = arith.mulf %352, %327 : vector<4x16xf32>
    %362 = arith.mulf %346, %354 : vector<4x16xf32>
    %363 = arith.addf %361, %362 : vector<4x16xf32>
    %364 = math.tanh %363 : vector<4x16xf32>
    %365 = arith.mulf %360, %364 : vector<4x16xf32>
    %c7_i32 = arith.constant 7 : i32
    %366 = vector.broadcast %c7_i32 : i32 to vector<4x1xi32>
    %367 = arith.cmpi sgt, %30, %366 : vector<4x1xi32>
    %cst_58 = arith.constant 0.000000e+00 : f32
    %368 = vector.shape_cast %367 : vector<4x1xi1> to vector<4x1xi1>
    %369 = vector.broadcast %368 : vector<4x1xi1> to vector<4x16xi1>
    %370 = vector.broadcast %cst_58 : f32 to vector<4x16xf32>
    %371 = arith.select %369, %365, %370 : vector<4x16xi1>, vector<4x16xf32>
    %372 = tpu.concatenate %76, %119, %162, %205, %248, %291, %334, %371 in 1 : vector<4x16xf32>, vector<4x16xf32>, vector<4x16xf32>, vector<4x16xf32>, vector<4x16xf32>, vector<4x16xf32>, vector<4x16xf32>, vector<4x16xf32> -> vector<4x128xf32>
    %c0_59 = arith.constant 0 : index
    %c0_60 = arith.constant 0 : index
    %373 = vector.load %arg5[%c0_59, %c0_60] : memref<4x128xf32, #tpu.memory_space<vmem>>, vector<4x128xf32>
    tpu.vector_store %arg5[%c0_59, %c0_60], %372 {strides = array<i32>} : memref<4x128xf32, #tpu.memory_space<vmem>>, vector<4x128xf32>,
    return
  }
}

module attributes {stable_mosaic.version = 11 : i64} {
  func.func @_mgan_head_kernel(%arg0: memref<2x8x32xf32, #tpu.memory_space<vmem>>, %arg1: memref<2x4x32xf32, #tpu.memory_space<vmem>>, %arg2: memref<2x8x1xf32, #tpu.memory_space<vmem>>, %arg3: memref<2x1xf32, #tpu.memory_space<vmem>>, %arg4: memref<2x1xf32, #tpu.memory_space<vmem>>, %arg5: memref<3x32xf32, #tpu.memory_space<vmem>>, %arg6: memref<32x32xf32, #tpu.memory_space<vmem>>, %arg7: memref<32x32xf32, #tpu.memory_space<vmem>>, %arg8: memref<128x128xf32, #tpu.memory_space<vmem>>, %arg9: memref<1x128xf32, #tpu.memory_space<vmem>>, %arg10: memref<2x128xf32, #tpu.memory_space<vmem>>) attributes {dimension_semantics = [], scalar_prefetch = 0 : i64, scratch_operands = 0 : i64, tpu.core_type = #tpu.core_type<tc>} {
    %c0 = arith.constant 0 : index
    %c0_0 = arith.constant 0 : index
    %c0_1 = arith.constant 0 : index
    %0 = vector.load %arg0[%c0, %c0_0, %c0_1] : memref<2x8x32xf32, #tpu.memory_space<vmem>>, vector<2x8x32xf32>
    %c0_2 = arith.constant 0 : index
    %c0_3 = arith.constant 0 : index
    %c0_4 = arith.constant 0 : index
    %1 = vector.load %arg2[%c0_2, %c0_3, %c0_4] : memref<2x8x1xf32, #tpu.memory_space<vmem>>, vector<2x8x1xf32>
    %2 = vector.broadcast %1 : vector<2x8x1xf32> to vector<2x8x32xf32>
    %3 = arith.mulf %0, %2 : vector<2x8x32xf32>
    %c0_5 = arith.constant 0 : index
    %c0_6 = arith.constant 0 : index
    %c0_7 = arith.constant 0 : index
    %4 = vector.load %arg1[%c0_5, %c0_6, %c0_7] : memref<2x4x32xf32, #tpu.memory_space<vmem>>, vector<2x4x32xf32>
    %c0_8 = arith.constant 0 : index
    %c0_9 = arith.constant 0 : index
    %5 = vector.load %arg3[%c0_8, %c0_9] : memref<2x1xf32, #tpu.memory_space<vmem>>, vector<2x1xf32>
    %6 = tpu.reciprocal %5 {approx = true} : vector<2x1xf32> -> vector<2x1xf32>
    %c0_10 = arith.constant 0 : index
    %c0_11 = arith.constant 0 : index
    %7 = vector.load %arg4[%c0_10, %c0_11] : memref<2x1xf32, #tpu.memory_space<vmem>>, vector<2x1xf32>
    %8 = tpu.reciprocal %7 {approx = true} : vector<2x1xf32> -> vector<2x1xf32>
    %cst = arith.constant dense<0.000000e+00> : vector<2x32xf32>
    %9 = vector.multi_reduction <add>, %3, %cst [1] : vector<2x8x32xf32> to vector<2x32xf32>
    %10 = vector.broadcast %6 : vector<2x1xf32> to vector<2x32xf32>
    %11 = arith.mulf %9, %10 : vector<2x32xf32>
    %cst_12 = arith.constant dense<0.000000e+00> : vector<2x32xf32>
    %12 = vector.multi_reduction <add>, %4, %cst_12 [1] : vector<2x4x32xf32> to vector<2x32xf32>
    %13 = vector.broadcast %8 : vector<2x1xf32> to vector<2x32xf32>
    %14 = arith.mulf %12, %13 : vector<2x32xf32>
    %c0_13 = arith.constant 0 : index
    %c0_14 = arith.constant 0 : index
    %15 = vector.load %arg5[%c0_13, %c0_14] : memref<3x32xf32, #tpu.memory_space<vmem>>, vector<1x32xf32>
    %16 = vector.shape_cast %15 : vector<1x32xf32> to vector<1x1x32xf32>
    %c1 = arith.constant 1 : index
    %c0_15 = arith.constant 0 : index
    %17 = vector.load %arg5[%c1, %c0_15] : memref<3x32xf32, #tpu.memory_space<vmem>>, vector<1x32xf32>
    %18 = vector.shape_cast %17 : vector<1x32xf32> to vector<1x1x32xf32>
    %c2 = arith.constant 2 : index
    %c0_16 = arith.constant 0 : index
    %19 = vector.load %arg5[%c2, %c0_16] : memref<3x32xf32, #tpu.memory_space<vmem>>, vector<1x32xf32>
    %20 = vector.shape_cast %19 : vector<1x32xf32> to vector<1x1x32xf32>
    %21 = vector.broadcast %16 : vector<1x1x32xf32> to vector<2x8x32xf32>
    %22 = arith.mulf %3, %21 : vector<2x8x32xf32>
    %cst_17 = arith.constant dense<0.000000e+00> : vector<2x8xf32>
    %23 = vector.multi_reduction <add>, %22, %cst_17 [2] : vector<2x8x32xf32> to vector<2x8xf32>
    %24 = vector.broadcast %18 : vector<1x1x32xf32> to vector<2x4x32xf32>
    %25 = arith.mulf %4, %24 : vector<2x4x32xf32>
    %cst_18 = arith.constant dense<0.000000e+00> : vector<2x4xf32>
    %26 = vector.multi_reduction <add>, %25, %cst_18 [2] : vector<2x4x32xf32> to vector<2x4xf32>
    %27 = vector.broadcast %20 : vector<1x1x32xf32> to vector<2x8x32xf32>
    %28 = arith.mulf %3, %27 : vector<2x8x32xf32>
    "tpu.trace_start"() <{level = 10 : i32, message = "bid,bjd->bij"}> : () -> ()
    %cst_19 = arith.constant dense<0.000000e+00> : vector<2x8x4xf32>
    %29 = tpu.matmul %28, %4, %cst_19 {dimension_numbers = #tpu.dot_dimension_numbers<[2], [2], [1], [1], [0, 0, 0, 1, 1, 1], [0], [0]>} : vector<2x8x32xf32>, vector<2x4x32xf32>, vector<2x8x4xf32> -> vector<2x8x4xf32>
    "tpu.trace_stop"() : () -> ()
    %30 = vector.shape_cast %23 : vector<2x8xf32> to vector<2x8x1xf32>
    %31 = vector.shape_cast %26 : vector<2x4xf32> to vector<2x1x4xf32>
    %32 = vector.broadcast %30 : vector<2x8x1xf32> to vector<2x8x4xf32>
    %33 = vector.broadcast %31 : vector<2x1x4xf32> to vector<2x8x4xf32>
    %34 = arith.addf %32, %33 : vector<2x8x4xf32>
    %35 = arith.addf %34, %29 : vector<2x8x4xf32>
    %cst_20 = arith.constant dense<0xFF800000> : vector<2x8xf32>
    %36 = vector.multi_reduction <maximumf>, %35, %cst_20 [2] : vector<2x8x4xf32> to vector<2x8xf32>
    %cst_21 = arith.constant dense<0xFF800000> : vector<2xf32>
    %37 = vector.multi_reduction <maximumf>, %36, %cst_21 [1] : vector<2x8xf32> to vector<2xf32>
    %38 = vector.shape_cast %37 : vector<2xf32> to vector<2x1xf32>
    %39 = vector.broadcast %38 : vector<2x1xf32> to vector<2x8xf32>
    %40 = arith.subf %36, %39 : vector<2x8xf32>
    %41 = math.exp %40 : vector<2x8xf32>
    %cst_22 = arith.constant dense<0.000000e+00> : vector<2xf32>
    %42 = vector.multi_reduction <add>, %41, %cst_22 [1] : vector<2x8xf32> to vector<2xf32>
    %43 = vector.shape_cast %42 : vector<2xf32> to vector<2x1xf32>
    %44 = tpu.reciprocal %43 {approx = true} : vector<2x1xf32> -> vector<2x1xf32>
    %45 = vector.broadcast %44 : vector<2x1xf32> to vector<2x8xf32>
    %46 = arith.mulf %41, %45 : vector<2x8xf32>
    %47 = vector.shape_cast %46 : vector<2x8xf32> to vector<2x8x1xf32>
    %48 = vector.broadcast %47 : vector<2x8x1xf32> to vector<2x8x32xf32>
    %49 = arith.mulf %3, %48 : vector<2x8x32xf32>
    %cst_23 = arith.constant dense<0.000000e+00> : vector<2x32xf32>
    %50 = vector.multi_reduction <add>, %49, %cst_23 [1] : vector<2x8x32xf32> to vector<2x32xf32>
    %cst_24 = arith.constant dense<0xFF800000> : vector<2x4xf32>
    %51 = vector.multi_reduction <maximumf>, %35, %cst_24 [1] : vector<2x8x4xf32> to vector<2x4xf32>
    %cst_25 = arith.constant dense<0xFF800000> : vector<2xf32>
    %52 = vector.multi_reduction <maximumf>, %51, %cst_25 [1] : vector<2x4xf32> to vector<2xf32>
    %53 = vector.shape_cast %52 : vector<2xf32> to vector<2x1xf32>
    %54 = vector.broadcast %53 : vector<2x1xf32> to vector<2x4xf32>
    %55 = arith.subf %51, %54 : vector<2x4xf32>
    %56 = math.exp %55 : vector<2x4xf32>
    %cst_26 = arith.constant dense<0.000000e+00> : vector<2xf32>
    %57 = vector.multi_reduction <add>, %56, %cst_26 [1] : vector<2x4xf32> to vector<2xf32>
    %58 = vector.shape_cast %57 : vector<2xf32> to vector<2x1xf32>
    %59 = tpu.reciprocal %58 {approx = true} : vector<2x1xf32> -> vector<2x1xf32>
    %60 = vector.broadcast %59 : vector<2x1xf32> to vector<2x4xf32>
    %61 = arith.mulf %56, %60 : vector<2x4xf32>
    %62 = vector.shape_cast %61 : vector<2x4xf32> to vector<2x4x1xf32>
    %63 = vector.broadcast %62 : vector<2x4x1xf32> to vector<2x4x32xf32>
    %64 = arith.mulf %4, %63 : vector<2x4x32xf32>
    %cst_27 = arith.constant dense<0.000000e+00> : vector<2x32xf32>
    %65 = vector.multi_reduction <add>, %64, %cst_27 [1] : vector<2x4x32xf32> to vector<2x32xf32>
    %66 = vector.shape_cast %3 : vector<2x8x32xf32> to vector<16x32xf32>
    %c0_28 = arith.constant 0 : index
    %c0_29 = arith.constant 0 : index
    %67 = vector.load %arg6[%c0_28, %c0_29] : memref<32x32xf32, #tpu.memory_space<vmem>>, vector<32x32xf32>
    %cst_30 = arith.constant dense<0.000000e+00> : vector<16x32xf32>
    %68 = tpu.matmul %66, %67, %cst_30 {dimension_numbers = #tpu.dot_dimension_numbers<[1], [0], [0], [1], [0, 0, 1, 1], [], []>} : vector<16x32xf32>, vector<32x32xf32>, vector<16x32xf32> -> vector<16x32xf32>
    %69 = vector.shape_cast %68 : vector<16x32xf32> to vector<2x8x32xf32>
    %70 = vector.shape_cast %14 : vector<2x32xf32> to vector<2x1x32xf32>
    %71 = vector.broadcast %70 : vector<2x1x32xf32> to vector<2x8x32xf32>
    %72 = arith.mulf %69, %71 : vector<2x8x32xf32>
    %cst_31 = arith.constant dense<0.000000e+00> : vector<2x8xf32>
    %73 = vector.multi_reduction <add>, %72, %cst_31 [2] : vector<2x8x32xf32> to vector<2x8xf32>
    %cst_32 = arith.constant dense<0xFF800000> : vector<2xf32>
    %74 = vector.multi_reduction <maximumf>, %73, %cst_32 [1] : vector<2x8xf32> to vector<2xf32>
    %75 = vector.shape_cast %74 : vector<2xf32> to vector<2x1xf32>
    %76 = vector.broadcast %75 : vector<2x1xf32> to vector<2x8xf32>
    %77 = arith.subf %73, %76 : vector<2x8xf32>
    %78 = math.exp %77 : vector<2x8xf32>
    %cst_33 = arith.constant dense<0.000000e+00> : vector<2xf32>
    %79 = vector.multi_reduction <add>, %78, %cst_33 [1] : vector<2x8xf32> to vector<2xf32>
    %80 = vector.shape_cast %79 : vector<2xf32> to vector<2x1xf32>
    %81 = tpu.reciprocal %80 {approx = true} : vector<2x1xf32> -> vector<2x1xf32>
    %82 = vector.broadcast %81 : vector<2x1xf32> to vector<2x8xf32>
    %83 = arith.mulf %78, %82 : vector<2x8xf32>
    %84 = vector.shape_cast %83 : vector<2x8xf32> to vector<2x8x1xf32>
    %85 = vector.broadcast %84 : vector<2x8x1xf32> to vector<2x8x32xf32>
    %86 = arith.mulf %3, %85 : vector<2x8x32xf32>
    %cst_34 = arith.constant dense<0.000000e+00> : vector<2x32xf32>
    %87 = vector.multi_reduction <add>, %86, %cst_34 [1] : vector<2x8x32xf32> to vector<2x32xf32>
    %88 = vector.shape_cast %4 : vector<2x4x32xf32> to vector<8x32xf32>
    %c0_35 = arith.constant 0 : index
    %c0_36 = arith.constant 0 : index
    %89 = vector.load %arg7[%c0_35, %c0_36] : memref<32x32xf32, #tpu.memory_space<vmem>>, vector<32x32xf32>
    %cst_37 = arith.constant dense<0.000000e+00> : vector<8x32xf32>
    %90 = tpu.matmul %88, %89, %cst_37 {dimension_numbers = #tpu.dot_dimension_numbers<[1], [0], [0], [1], [0, 0, 1, 1], [], []>} : vector<8x32xf32>, vector<32x32xf32>, vector<8x32xf32> -> vector<8x32xf32>
    %91 = vector.shape_cast %90 : vector<8x32xf32> to vector<2x4x32xf32>
    %92 = vector.shape_cast %11 : vector<2x32xf32> to vector<2x1x32xf32>
    %93 = vector.broadcast %92 : vector<2x1x32xf32> to vector<2x4x32xf32>
    %94 = arith.mulf %91, %93 : vector<2x4x32xf32>
    %cst_38 = arith.constant dense<0.000000e+00> : vector<2x4xf32>
    %95 = vector.multi_reduction <add>, %94, %cst_38 [2] : vector<2x4x32xf32> to vector<2x4xf32>
    %cst_39 = arith.constant dense<0xFF800000> : vector<2xf32>
    %96 = vector.multi_reduction <maximumf>, %95, %cst_39 [1] : vector<2x4xf32> to vector<2xf32>
    %97 = vector.shape_cast %96 : vector<2xf32> to vector<2x1xf32>
    %98 = vector.broadcast %97 : vector<2x1xf32> to vector<2x4xf32>
    %99 = arith.subf %95, %98 : vector<2x4xf32>
    %100 = math.exp %99 : vector<2x4xf32>
    %cst_40 = arith.constant dense<0.000000e+00> : vector<2xf32>
    %101 = vector.multi_reduction <add>, %100, %cst_40 [1] : vector<2x4xf32> to vector<2xf32>
    %102 = vector.shape_cast %101 : vector<2xf32> to vector<2x1xf32>
    %103 = tpu.reciprocal %102 {approx = true} : vector<2x1xf32> -> vector<2x1xf32>
    %104 = vector.broadcast %103 : vector<2x1xf32> to vector<2x4xf32>
    %105 = arith.mulf %100, %104 : vector<2x4xf32>
    %106 = vector.shape_cast %105 : vector<2x4xf32> to vector<2x4x1xf32>
    %107 = vector.broadcast %106 : vector<2x4x1xf32> to vector<2x4x32xf32>
    %108 = arith.mulf %4, %107 : vector<2x4x32xf32>
    %cst_41 = arith.constant dense<0.000000e+00> : vector<2x32xf32>
    %109 = vector.multi_reduction <add>, %108, %cst_41 [1] : vector<2x4x32xf32> to vector<2x32xf32>
    %110 = tpu.concatenate %87, %50, %65, %109 in 1 : vector<2x32xf32>, vector<2x32xf32>, vector<2x32xf32>, vector<2x32xf32> -> vector<2x128xf32>
    %c0_42 = arith.constant 0 : index
    %c0_43 = arith.constant 0 : index
    %111 = vector.load %arg8[%c0_42, %c0_43] : memref<128x128xf32, #tpu.memory_space<vmem>>, vector<128x128xf32>
    %cst_44 = arith.constant dense<0.000000e+00> : vector<2x128xf32>
    %112 = tpu.matmul %110, %111, %cst_44 {dimension_numbers = #tpu.dot_dimension_numbers<[1], [0], [0], [1], [0, 0, 1, 1], [], []>} : vector<2x128xf32>, vector<128x128xf32>, vector<2x128xf32> -> vector<2x128xf32>
    %c0_45 = arith.constant 0 : index
    %c0_46 = arith.constant 0 : index
    %113 = vector.load %arg9[%c0_45, %c0_46] : memref<1x128xf32, #tpu.memory_space<vmem>>, vector<1x128xf32>
    %114 = vector.broadcast %113 : vector<1x128xf32> to vector<2x128xf32>
    %115 = arith.addf %112, %114 : vector<2x128xf32>
    %c0_47 = arith.constant 0 : index
    %c0_48 = arith.constant 0 : index
    %116 = vector.load %arg10[%c0_47, %c0_48] : memref<2x128xf32, #tpu.memory_space<vmem>>, vector<2x128xf32>
    tpu.vector_store %arg10[%c0_47, %c0_48], %115 {strides = array<i32>} : memref<2x128xf32, #tpu.memory_space<vmem>>, vector<2x128xf32>,
    return
  }
}

</mosaic_0001>

<llo_original>
// kernel: mgan_forward.4
$region0: #{mgan_forward.4}
  #allocation0 [shape = 'u32[]', space=smem, size = 0x4, offset = 0x4, fixed_abs, tag = 'smem constant byte address 0x4 - core index']
  #allocation1 [shape = 'u32[144,128]{1,0:T(1,128)}', space=vmem, size = 0x12000, scoped, tag = 'internal scratch']
  %s0 = inlined_call_operand.vmem [shape: f32[4,4,32], index: 0, kind: input, shape index: {}]
  %s1 = inlined_call_operand.vmem [shape: s32[4,1], index: 1, kind: input, shape index: {}]
  %s2 = inlined_call_operand.vmem [shape: f32[2,32,64], index: 2, kind: input, shape index: {}]
  %s3 = inlined_call_operand.vmem [shape: f32[32,64], index: 3, kind: input, shape index: {}]
  %s4 = inlined_call_operand.vmem [shape: f32[4,64], index: 4, kind: input, shape index: {}]
  %s5 = inlined_call_operand.vmem [shape: f32[4,64], index: 5, kind: output, shape index: {}]
  %s6 = sld [smem:[#allocation0]]
  $region30: #{mgan_forward.4} parent=0
    _
  %s8 = ssub.s32 1, %s6
  %s9 = scalar_select 0, %s8, %s6
  // Predicated region
  $region2: #{mgan_forward.4} parent=0 // pred_check
    _
  $region3: #{mgan_forward.4} parent=0 // pred_check_branch
    %11 = sbr.rel (0) target = $region5
  $region4: #{mgan_forward.4} parent=0 // pred_region
    _
  $region5: #{mgan_forward.4} parent=0 // pred_fallthru
    _
  // Predicated region
  $region6: #{mgan_forward.4} parent=0 // pred_check
    _
  $region7: #{mgan_forward.4} parent=0 // pred_check_branch
    %13 = sbr.rel (0) target = $region9
  $region8: #{mgan_forward.4} parent=0 // pred_region
    _
  $region9: #{mgan_forward.4} parent=0 // pred_fallthru
    _
  // Predicated region
  $region10: #{mgan_forward.4} parent=0 // pred_check
    _
  $region11: #{mgan_forward.4} parent=0 // pred_check_branch
    %15 = sbr.rel (0) target = $region13
  $region12: #{mgan_forward.4} parent=0 // pred_region
    _
  $region13: #{mgan_forward.4} parent=0 // pred_fallthru
    _
  // Predicated region
  $region14: #{mgan_forward.4} parent=0 // pred_check
    _
  $region15: #{mgan_forward.4} parent=0 // pred_check_branch
    %17 = sbr.rel (0) target = $region17
  $region16: #{mgan_forward.4} parent=0 // pred_region
    _
  $region17: #{mgan_forward.4} parent=0 // pred_fallthru
    _
  // Predicated region
  $region18: #{mgan_forward.4} parent=0 // pred_check
    _
  $region19: #{mgan_forward.4} parent=0 // pred_check_branch
    %19 = sbr.rel (0) target = $region21
  $region20: #{mgan_forward.4} parent=0 // pred_region
    _
  $region21: #{mgan_forward.4} parent=0 // pred_fallthru
    _
  %v20 = vld [vmem:[%s0] sm:$0xf]
  %v21 = vld [vmem:[%s0 + $0x4] sm:$0xf]
  %v22 = vld [vmem:[%s0 + $0x8] sm:$0xf]
  %v23 = vld [vmem:[%s0 + $0xc] sm:$0xf]
  %v24 = vld [vmem:[%s2] sm:$0xff]
  %v25 = vld [vmem:[%s2 + $0x8] sm:$0xff]
  %v26 = vld [vmem:[%s2 + $0x10] sm:$0xff]
  %v27 = vld [vmem:[%s2 + $0x18] sm:$0xff]
  %v32 = vcombine.low %v20, %v21
  %v33 = vcombine.low %v22, %v23
  %vm34 = vcmask 261120
  %v35 = vsel %vm34, %v32, 0
  %v37 = vsel %vm34, %v33, 0
  %39 = vmatprep.subr.mxu0 0.0
  %40 = vmatpush1.msra.mxu0 0.0
  %41 = vmatprep.subr.mxu0 0.0
  %42 = vmatpush1.msra.mxu0 0.0
  %43 = vmatprep.subr.mxu0 0.0
  %44 = vmatpush1.msra.mxu0 0.0
  %45 = vmatprep.subr.mxu0 0.0
  %46 = vmatpush1.msra.mxu0 0.0
  %47 = vmatprep.subr.mxu0 0.0
  %48 = vmatpush1.msra.mxu0 0.0
  %49 = vmatprep.subr.mxu0 0.0
  %50 = vmatpush1.msra.mxu0 0.0
  %51 = vmatprep.subr.mxu0 0.0
  %52 = vmatpush1.msra.mxu0 0.0
  %53 = vmatprep.subr.mxu0 0.0
  %54 = vmatpush1.msra.mxu0 0.0
  %55 = vmatprep.subr.mxu0 0.0
  %56 = vmatpush1.msra.mxu0 0.0
  %57 = vmatprep.subr.mxu0 0.0
  %58 = vmatpush1.msra.mxu0 0.0
  %59 = vmatprep.subr.mxu0 0.0
  %60 = vmatpush1.msra.mxu0 0.0
  %61 = vmatprep.subr.mxu0 0.0
  %62 = vmatpush1.msra.mxu0 0.0
  %63 = vmatprep.subr.mxu0 0.0
  %64 = vmatpush1.msra.mxu0 %v27
  %65 = vmatprep.subr.mxu0 0.0
  %66 = vmatpush1.msra.mxu0 %v26
  %67 = vmatprep.subr.mxu0 0.0
  %68 = vmatpush1.msra.mxu0 %v25
  %69 = vmatprep.subr.mxu0 0.0
  %70 = vmatpush1.msra.mxu0 %v24
  %71 = vmatprep.subr.mxu0 0.0
  %72 = vmatpush2.msra.mxu0 0.0
  %73 = vmatprep.subr.mxu0 0.0
  %74 = vmatpush2.msra.mxu0 0.0
  %75 = vmatprep.subr.mxu0 0.0
  %76 = vmatpush2.msra.mxu0 0.0
  %77 = vmatprep.subr.mxu0 0.0
  %78 = vmatpush2.msra.mxu0 0.0
  %79 = vmatprep.subr.mxu0 0.0
  %80 = vmatpush2.msra.mxu0 0.0
  %81 = vmatprep.subr.mxu0 0.0
  %82 = vmatpush2.msra.mxu0 0.0
  %83 = vmatprep.subr.mxu0 0.0
  %84 = vmatpush2.msra.mxu0 0.0
  %85 = vmatprep.subr.mxu0 0.0
  %86 = vmatpush2.msra.mxu0 0.0
  %87 = vmatprep.subr.mxu0 0.0
  %88 = vmatpush2.msra.mxu0 0.0
  %89 = vmatprep.subr.mxu0 0.0
  %90 = vmatpush2.msra.mxu0 0.0
  %91 = vmatprep.subr.mxu0 0.0
  %92 = vmatpush2.msra.mxu0 0.0
  %93 = vmatprep.subr.mxu0 0.0
  %94 = vmatpush2.msra.mxu0 0.0
  %95 = vmatprep.subr.mxu0 0.0
  %96 = vmatpush2.msra.mxu0 0.0
  %97 = vmatprep.subr.mxu0 0.0
  %98 = vmatpush2.msra.mxu0 0.0
  %99 = vmatprep.subr.mxu0 0.0
  %100 = vmatpush2.msra.mxu0 0.0
  %101 = vmatprep.subr.mxu0 0.0
  %102 = vmatpush2.msra.mxu0 0.0
  %103 = vmatprep.mubr.f32.mxu0 0.0
  %104 = vmatmul.mubr.f32.gmra.mxu0 %v35
  %v105 = vpop.f32.mrf.mxu0
  %v106 = vadd.f32 0.0, %v105
  %v107 = vpop.f32.mrf.mxu0
  %108 = vmatprep.mubr.f32.mxu0 0.0
  %109 = vmatmul.mubr.f32.gmra.mxu0 %v37
  %v110 = vpop.f32.mrf.mxu0
  %v111 = vadd.f32 0.0, %v110
  %v112 = vpop.f32.mrf.mxu0
  %113 = vdwg.mxu0
  %v116 = vcombine.high %v106, %v106
  %v117 = vcombine.high %v111, %v111
  %s120 = scalar_lea.vmem %s2, 32
  %v121 = vld [vmem:[%s120] sm:$0xff]
  %v122 = vld [vmem:[%s120 + $0x8] sm:$0xff]
  %v123 = vld [vmem:[%s120 + $0x10] sm:$0xff]
  %v124 = vld [vmem:[%s120 + $0x18] sm:$0xff]
  %125 = vmatprep.subr.mxu0 0.0
  %126 = vmatpush1.msra.mxu0 0.0
  %127 = vmatprep.subr.mxu0 0.0
  %128 = vmatpush1.msra.mxu0 0.0
  %129 = vmatprep.subr.mxu0 0.0
  %130 = vmatpush1.msra.mxu0 0.0
  %131 = vmatprep.subr.mxu0 0.0
  %132 = vmatpush1.msra.mxu0 0.0
  %133 = vmatprep.subr.mxu0 0.0
  %134 = vmatpush1.msra.mxu0 0.0
  %135 = vmatprep.subr.mxu0 0.0
  %136 = vmatpush1.msra.mxu0 0.0
  %137 = vmatprep.subr.mxu0 0.0
  %138 = vmatpush1.msra.mxu0 0.0
  %139 = vmatprep.subr.mxu0 0.0
  %140 = vmatpush1.msra.mxu0 0.0
  %141 = vmatprep.subr.mxu0 0.0
  %142 = vmatpush1.msra.mxu0 0.0
  %143 = vmatprep.subr.mxu0 0.0
  %144 = vmatpush1.msra.mxu0 0.0
  %145 = vmatprep.subr.mxu0 0.0
  %146 = vmatpush1.msra.mxu0 0.0
  %147 = vmatprep.subr.mxu0 0.0
  %148 = vmatpush1.msra.mxu0 0.0
  %149 = vmatprep.subr.mxu0 0.0
  %150 = vmatpush1.msra.mxu0 %v124
  %151 = vmatprep.subr.mxu0 0.0
  %152 = vmatpush1.msra.mxu0 %v123
  %153 = vmatprep.subr.mxu0 0.0
  %154 = vmatpush1.msra.mxu0 %v122
  %155 = vmatprep.subr.mxu0 0.0
  %156 = vmatpush1.msra.mxu0 %v121
  %157 = vmatprep.subr.mxu0 0.0
  %158 = vmatpush2.msra.mxu0 0.0
  %159 = vmatprep.subr.mxu0 0.0
  %160 = vmatpush2.msra.mxu0 0.0
  %161 = vmatprep.subr.mxu0 0.0
  %162 = vmatpush2.msra.mxu0 0.0
  %163 = vmatprep.subr.mxu0 0.0
  %164 = vmatpush2.msra.mxu0 0.0
  %165 = vmatprep.subr.mxu0 0.0
  %166 = vmatpush2.msra.mxu0 0.0
  %167 = vmatprep.subr.mxu0 0.0
  %168 = vmatpush2.msra.mxu0 0.0
  %169 = vmatprep.subr.mxu0 0.0
  %170 = vmatpush2.msra.mxu0 0.0
  %171 = vmatprep.subr.mxu0 0.0
  %172 = vmatpush2.msra.mxu0 0.0
  %173 = vmatprep.subr.mxu0 0.0
  %174 = vmatpush2.msra.mxu0 0.0
  %175 = vmatprep.subr.mxu0 0.0
  %176 = vmatpush2.msra.mxu0 0.0
  %177 = vmatprep.subr.mxu0 0.0
  %178 = vmatpush2.msra.mxu0 0.0
  %179 = vmatprep.subr.mxu0 0.0
  %180 = vmatpush2.msra.mxu0 0.0
  %181 = vmatprep.subr.mxu0 0.0
  %182 = vmatpush2.msra.mxu0 0.0
  %183 = vmatprep.subr.mxu0 0.0
  %184 = vmatpush2.msra.mxu0 0.0
  %185 = vmatprep.subr.mxu0 0.0
  %186 = vmatpush2.msra.mxu0 0.0
  %187 = vmatprep.subr.mxu0 0.0
  %188 = vmatpush2.msra.mxu0 0.0
  %189 = vmatprep.mubr.f32.mxu0 0.0
  %190 = vmatmul.mubr.f32.gmra.mxu0 %v35
  %v191 = vpop.f32.mrf.mxu0
  %v192 = vadd.f32 0.0, %v191
  %v193 = vpop.f32.mrf.mxu0
  %194 = vmatprep.mubr.f32.mxu0 0.0
  %195 = vmatmul.mubr.f32.gmra.mxu0 %v37
  %v196 = vpop.f32.mrf.mxu0
  %v197 = vadd.f32 0.0, %v196
  %v198 = vpop.f32.mrf.mxu0
  %199 = vdwg.mxu0
  %v202 = vcombine.high %v192, %v192
  %v203 = vcombine.high %v197, %v197
  %v206 = vsel 1, %v106, %v192
  %v207 = vsel 1, %v116, %v202
  %v208 = vsel 0, %v111, %v197
  %v209 = vsel 0, %v117, %v203
  %v210 = vld [vmem:[%s4] sm:$0xf]
  %v213 = vunpack.c.l.s4 1966171168
  %v214 = vunpack.c.0.s8 %v213
  %v215 = vlaneseq
  %v216 = vshrl.u32 %v215, 7
  %v217 = vsub.s32 %v214, %v216
  %v218 = vrot.slane %v210, %v217
  %v219 = vcombine.high %v218, %v218
  %v221 = vunpack.c.l.s4 1966171168
  %v222 = vunpack.c.0.s8 %v221
  %v223 = vlaneseq
  %v224 = vshrl.u32 %v223, 7
  %v225 = vsub.s32 %v222, %v224
  %v226 = vrot.slane %v218, %v225
  %v228 = vunpack.c.l.s4 1966171168
  %v229 = vunpack.c.0.s8 %v228
  %v230 = vlaneseq
  %v231 = vshrl.u32 %v230, 7
  %v232 = vsub.s32 %v229, %v231
  %v233 = vrot.slane %v219, %v232
  %v234 = vcombine.high %v226, %v226
  %v235 = vcombine.high %v233, %v233
  %v236 = vlaneseq
  %v237 = vshrl.u32 %v236, 7
  %v238 = vsub.s32 0, %v237
  %v239 = vrot.slane %v226, %v238
  %v240 = vlaneseq
  %v241 = vshrl.u32 %v240, 7
  %v242 = vsub.s32 0, %v241
  %v243 = vrot.slane %v233, %v242
  %v244 = vlaneseq
  %v245 = vshrl.u32 %v244, 7
  %v246 = vsub.s32 0, %v245
  %v247 = vrot.slane %v234, %v246
  %v248 = vlaneseq
  %v249 = vshrl.u32 %v248, 7
  %v250 = vsub.s32 0, %v249
  %v251 = vrot.slane %v235, %v250
  %v256 = vadd.f32 %v206, %v239
  %v257 = vadd.f32 %v207, %v243
  %v258 = vadd.f32 %v208, %v247
  %v259 = vadd.f32 %v209, %v251
  %v260 = vlaneseq
  %v261 = vshrl.u32 %v260, 7
  %vm262 = vcmp.lt.s32.totalorder %v261, 2
  %v263 = vlaneseq
  %v264 = vand.u32 %v263, 127
  %vm265 = vcmp.lt.s32.totalorder %v264, 16
  %vm266 = vmxor %vm262, %vm265
  %vm267 = vmxor %vm266, 1
  %v268 = vsel %vm267, 1, 0
  %v269 = vcvt.s32.f32 %v268
  %v270 = vld [vmem:[%s1] sm:$0xf]
  %v271 = vld [vmem:[%s3] sm:$0xff]
  %v272 = vld [vmem:[%s3 + $0x8] sm:$0xff]
  %v273 = vld [vmem:[%s3 + $0x10] sm:$0xff]
  %v274 = vld [vmem:[%s3 + $0x18] sm:$0xff]
  %v275 = vmul.f32 %v269, 0.0
  %v277 = vsel %vm34, %v275, 0
  %279 = vmatprep.subr.mxu0 0.0
  %280 = vmatpush1.msra.mxu0 0.0
  %281 = vmatprep.subr.mxu0 0.0
  %282 = vmatpush1.msra.mxu0 0.0
  %283 = vmatprep.subr.mxu0 0.0
  %284 = vmatpush1.msra.mxu0 0.0
  %285 = vmatprep.subr.mxu0 0.0
  %286 = vmatpush1.msra.mxu0 0.0
  %287 = vmatprep.subr.mxu0 0.0
  %288 = vmatpush1.msra.mxu0 0.0
  %289 = vmatprep.subr.mxu0 0.0
  %290 = vmatpush1.msra.mxu0 0.0
  %291 = vmatprep.subr.mxu0 0.0
  %292 = vmatpush1.msra.mxu0 0.0
  %293 = vmatprep.subr.mxu0 0.0
  %294 = vmatpush1.msra.mxu0 0.0
  %295 = vmatprep.subr.mxu0 0.0
  %296 = vmatpush1.msra.mxu0 0.0
  %297 = vmatprep.subr.mxu0 0.0
  %298 = vmatpush1.msra.mxu0 0.0
  %299 = vmatprep.subr.mxu0 0.0
  %300 = vmatpush1.msra.mxu0 0.0
  %301 = vmatprep.subr.mxu0 0.0
  %302 = vmatpush1.msra.mxu0 0.0
  %303 = vmatprep.subr.mxu0 0.0
  %304 = vmatpush1.msra.mxu0 %v274
  %305 = vmatprep.subr.mxu0 0.0
  %306 = vmatpush1.msra.mxu0 %v273
  %307 = vmatprep.subr.mxu0 0.0
  %308 = vmatpush1.msra.mxu0 %v272
  %309 = vmatprep.subr.mxu0 0.0
  %310 = vmatpush1.msra.mxu0 %v271
  %311 = vmatprep.subr.mxu0 0.0
  %312 = vmatpush2.msra.mxu0 0.0
  %313 = vmatprep.subr.mxu0 0.0
  %314 = vmatpush2.msra.mxu0 0.0
  %315 = vmatprep.subr.mxu0 0.0
  %316 = vmatpush2.msra.mxu0 0.0
  %317 = vmatprep.subr.mxu0 0.0
  %318 = vmatpush2.msra.mxu0 0.0
  %319 = vmatprep.subr.mxu0 0.0
  %320 = vmatpush2.msra.mxu0 0.0
  %321 = vmatprep.subr.mxu0 0.0
  %322 = vmatpush2.msra.mxu0 0.0
  %323 = vmatprep.subr.mxu0 0.0
  %324 = vmatpush2.msra.mxu0 0.0
  %325 = vmatprep.subr.mxu0 0.0
  %326 = vmatpush2.msra.mxu0 0.0
  %327 = vmatprep.subr.mxu0 0.0
  %328 = vmatpush2.msra.mxu0 0.0
  %329 = vmatprep.subr.mxu0 0.0
  %330 = vmatpush2.msra.mxu0 0.0
  %331 = vmatprep.subr.mxu0 0.0
  %332 = vmatpush2.msra.mxu0 0.0
  %333 = vmatprep.subr.mxu0 0.0
  %334 = vmatpush2.msra.mxu0 0.0
  %335 = vmatprep.subr.mxu0 0.0
  %336 = vmatpush2.msra.mxu0 0.0
  %337 = vmatprep.subr.mxu0 0.0
  %338 = vmatpush2.msra.mxu0 0.0
  %339 = vmatprep.subr.mxu0 0.0
  %340 = vmatpush2.msra.mxu0 0.0
  %341 = vmatprep.subr.mxu0 0.0
  %342 = vmatpush2.msra.mxu0 0.0
  %343 = vmatprep.mubr.f32.mxu0 0.0
  %344 = vmatmul.mubr.f32.gmra.mxu0 %v277
  %v345 = vpop.f32.mrf.mxu0
  %v346 = vadd.f32 0.0, %v345
  %v347 = vpop.f32.mrf.mxu0
  %348 = vdwg.mxu0
  %v350 = vrot.slane %v346, 1
  %v351 = vrot.slane %v346, 2
  %v352 = vrot.slane %v346, 3
  %v357 = vadd.f32 %v256, %v346
  %v358 = vadd.f32 %v257, %v350
  %v359 = vadd.f32 %v258, %v351
  %v360 = vadd.f32 %v259, %v352
  %v361 = vxor.u32 %v357, 2147483648
  %v362 = vxor.u32 %v358, 2147483648
  %v363 = vxor.u32 %v359, 2147483648
  %v364 = vxor.u32 %v360, 2147483648
  %v365 = vmul.f32 %v361, 1.442695
  %v366 = vpow.pop %v365
  %v367 = vmul.f32 %v362, 1.442695
  %v368 = vpow.pop %v367
  %v369 = vmul.f32 %v363, 1.442695
  %v370 = vpow.pop %v369
  %v371 = vmul.f32 %v364, 1.442695
  %v372 = vpow.pop %v371
  %v373 = vadd.f32 %v366, 1.0
  %v374 = vadd.f32 %v368, 1.0
  %v375 = vadd.f32 %v370, 1.0
  %v376 = vadd.f32 %v372, 1.0
  %v377 = vrcp.pop %v373
  %v378 = vmul.f32 1.0, %v377
  %v379 = vrcp.pop %v374
  %v380 = vmul.f32 1.0, %v379
  %v381 = vrcp.pop %v375
  %v382 = vmul.f32 1.0, %v381
  %v383 = vrcp.pop %v376
  %v384 = vmul.f32 1.0, %v383
  %v385 = vtanh.pop %v357
  %v386 = vtanh.pop %v358
  %v387 = vtanh.pop %v359
  %v388 = vtanh.pop %v360
  %v389 = vmul.f32 %v378, 0.0
  %v390 = vmul.f32 %v380, 0.0
  %v391 = vmul.f32 %v382, 0.0
  %v392 = vmul.f32 %v384, 0.0
  %397 = vrot.lane.b32.xlu0 %v385, 96
  %v398 = vpop.permute.xlu0 %397
  %399 = vrot.lane.b32.xlu0 %v386, 96
  %v400 = vpop.permute.xlu0 %399
  %401 = vrot.lane.b32.xlu0 %v387, 96
  %v402 = vpop.permute.xlu0 %401
  %403 = vrot.lane.b32.xlu0 %v388, 96
  %v404 = vpop.permute.xlu0 %403
  %v409 = vmul.f32 %v378, %v398
  %v410 = vmul.f32 %v380, %v400
  %v411 = vmul.f32 %v382, %v402
  %v412 = vmul.f32 %v384, %v404
  %417 = vrot.lane.b32.xlu0 %v409, 16
  %v418 = vpop.permute.xlu0 %417
  %419 = vrot.lane.b32.xlu0 %v410, 16
  %v420 = vpop.permute.xlu0 %419
  %421 = vrot.lane.b32.xlu0 %v411, 16
  %v422 = vpop.permute.xlu0 %421
  %423 = vrot.lane.b32.xlu0 %v412, 16
  %v424 = vpop.permute.xlu0 %423
  %v429 = vadd.f32 %v389, %v418
  %v430 = vadd.f32 %v390, %v420
  %v431 = vadd.f32 %v391, %v422
  %v432 = vadd.f32 %v392, %v424
  %v433 = vtanh.pop %v429
  %v434 = vtanh.pop %v430
  %v435 = vtanh.pop %v431
  %v436 = vtanh.pop %v432
  %441 = vrot.lane.b32.xlu0 %v433, 32
  %v442 = vpop.permute.xlu0 %441
  %443 = vrot.lane.b32.xlu0 %v434, 32
  %v444 = vpop.permute.xlu0 %443
  %445 = vrot.lane.b32.xlu0 %v435, 32
  %v446 = vpop.permute.xlu0 %445
  %447 = vrot.lane.b32.xlu0 %v436, 32
  %v448 = vpop.permute.xlu0 %447
  %v453 = vmul.f32 %v378, %v442
  %v454 = vmul.f32 %v380, %v444
  %v455 = vmul.f32 %v382, %v446
  %v456 = vmul.f32 %v384, %v448
  %vm457 = vcmp.gt.s32.totalorder %v270, 0
  %v458 = vsel %vm457, 1, 0
  %459 = vset.pattern.permute.xlu0 0
  %460 = vperm.xlu0 %459, %v458
  %v461 = vpop.permute.xlu0 %460
  %vm462 = vcmp.eq.s32.totalorder %v461, 1
  %v467 = vlaneseq
  %v468 = vshrl.u32 %v467, 7
  %v469 = vsub.s32 0, %v468
  %v470 = vrot.slane %v429, %v469
  %v471 = vlaneseq
  %v472 = vshrl.u32 %v471, 7
  %v473 = vsub.s32 0, %v472
  %v474 = vrot.slane %v430, %v473
  %v475 = vlaneseq
  %v476 = vshrl.u32 %v475, 7
  %v477 = vsub.s32 0, %v476
  %v478 = vrot.slane %v431, %v477
  %v479 = vlaneseq
  %v480 = vshrl.u32 %v479, 7
  %v481 = vsub.s32 0, %v480
  %v482 = vrot.slane %v432, %v481
  %vm483 = vcmask 1041409
  %v484 = vsel %vm483, %v474, %v470
  %vm485 = vcmask 1042434
  %v486 = vsel %vm485, %v478, %v484
  %vm487 = vcmask 1043459
  %v488 = vsel %vm487, %v482, %v486
  %489 = vrot.lane.b32.xlu0 %v488, 112
  %v490 = vpop.permute.xlu0 %489
  %v492 = vsel %vm462, %v490, 0.0
  %v497 = vlaneseq
  %v498 = vshrl.u32 %v497, 7
  %v499 = vsub.s32 0, %v498
  %v500 = vrot.slane %v453, %v499
  %v501 = vlaneseq
  %v502 = vshrl.u32 %v501, 7
  %v503 = vsub.s32 0, %v502
  %v504 = vrot.slane %v454, %v503
  %v505 = vlaneseq
  %v506 = vshrl.u32 %v505, 7
  %v507 = vsub.s32 0, %v506
  %v508 = vrot.slane %v455, %v507
  %v509 = vlaneseq
  %v510 = vshrl.u32 %v509, 7
  %v511 = vsub.s32 0, %v510
  %v512 = vrot.slane %v456, %v511
  %v513 = vsel %vm483, %v504, %v500
  %v514 = vsel %vm485, %v508, %v513
  %v515 = vsel %vm487, %v512, %v514
  %516 = vrot.lane.b32.xlu0 %v515, 80
  %v517 = vpop.permute.xlu0 %516
  %v519 = vsel %vm462, %v517, 0.0
  %521 = vrot.lane.b32.xlu0 %v519, 16
  %v522 = vpop.permute.xlu0 %521
  %vm524 = vcmask 130048
  %v525 = vsel %vm524, %v519, %v522
  %v526 = vmul.f32 %v525, %v269
  %v528 = vsel %vm34, %v526, 0
  %530 = vmatprep.subr.mxu0 0.0
  %531 = vmatpush1.msra.mxu0 0.0
  %532 = vmatprep.subr.mxu0 0.0
  %533 = vmatpush1.msra.mxu0 0.0
  %534 = vmatprep.subr.mxu0 0.0
  %535 = vmatpush1.msra.mxu0 0.0
  %536 = vmatprep.subr.mxu0 0.0
  %537 = vmatpush1.msra.mxu0 0.0
  %538 = vmatprep.subr.mxu0 0.0
  %539 = vmatpush1.msra.mxu0 0.0
  %540 = vmatprep.subr.mxu0 0.0
  %541 = vmatpush1.msra.mxu0 0.0
  %542 = vmatprep.subr.mxu0 0.0
  %543 = vmatpush1.msra.mxu0 0.0
  %544 = vmatprep.subr.mxu0 0.0
  %545 = vmatpush1.msra.mxu0 0.0
  %546 = vmatprep.subr.mxu0 0.0
  %547 = vmatpush1.msra.mxu0 0.0
  %548 = vmatprep.subr.mxu0 0.0
  %549 = vmatpush1.msra.mxu0 0.0
  %550 = vmatprep.subr.mxu0 0.0
  %551 = vmatpush1.msra.mxu0 0.0
  %552 = vmatprep.subr.mxu0 0.0
  %553 = vmatpush1.msra.mxu0 0.0
  %554 = vmatprep.subr.mxu0 0.0
  %555 = vmatpush1.msra.mxu0 %v274
  %556 = vmatprep.subr.mxu0 0.0
  %557 = vmatpush1.msra.mxu0 %v273
  %558 = vmatprep.subr.mxu0 0.0
  %559 = vmatpush1.msra.mxu0 %v272
  %560 = vmatprep.subr.mxu0 0.0
  %561 = vmatpush1.msra.mxu0 %v271
  %562 = vmatprep.subr.mxu0 0.0
  %563 = vmatpush2.msra.mxu0 0.0
  %564 = vmatprep.subr.mxu0 0.0
  %565 = vmatpush2.msra.mxu0 0.0
  %566 = vmatprep.subr.mxu0 0.0
  %567 = vmatpush2.msra.mxu0 0.0
  %568 = vmatprep.subr.mxu0 0.0
  %569 = vmatpush2.msra.mxu0 0.0
  %570 = vmatprep.subr.mxu0 0.0
  %571 = vmatpush2.msra.mxu0 0.0
  %572 = vmatprep.subr.mxu0 0.0
  %573 = vmatpush2.msra.mxu0 0.0
  %574 = vmatprep.subr.mxu0 0.0
  %575 = vmatpush2.msra.mxu0 0.0
  %576 = vmatprep.subr.mxu0 0.0
  %577 = vmatpush2.msra.mxu0 0.0
  %578 = vmatprep.subr.mxu0 0.0
  %579 = vmatpush2.msra.mxu0 0.0
  %580 = vmatprep.subr.mxu0 0.0
  %581 = vmatpush2.msra.mxu0 0.0
  %582 = vmatprep.subr.mxu0 0.0
  %583 = vmatpush2.msra.mxu0 0.0
  %584 = vmatprep.subr.mxu0 0.0
  %585 = vmatpush2.msra.mxu0 0.0
  %586 = vmatprep.subr.mxu0 0.0
  %587 = vmatpush2.msra.mxu0 0.0
  %588 = vmatprep.subr.mxu0 0.0
  %589 = vmatpush2.msra.mxu0 0.0
  %590 = vmatprep.subr.mxu0 0.0
  %591 = vmatpush2.msra.mxu0 0.0
  %592 = vmatprep.subr.mxu0 0.0
  %593 = vmatpush2.msra.mxu0 0.0
  %594 = vmatprep.mubr.f32.mxu0 0.0
  %595 = vmatmul.mubr.f32.gmra.mxu0 %v528
  %v596 = vpop.f32.mrf.mxu0
  %v597 = vadd.f32 0.0, %v596
  %v598 = vpop.f32.mrf.mxu0
  %599 = vdwg.mxu0
  %v601 = vrot.slane %v597, 7
  %v602 = vrot.slane %v597, 1
  %v603 = vrot.slane %v597, 2
  %v608 = vadd.f32 %v256, %v601
  %v609 = vadd.f32 %v257, %v597
  %v610 = vadd.f32 %v258, %v602
  %v611 = vadd.f32 %v259, %v603
  %v612 = vxor.u32 %v608, 2147483648
  %v613 = vxor.u32 %v609, 2147483648
  %v614 = vxor.u32 %v610, 2147483648
  %v615 = vxor.u32 %v611, 2147483648
  %v616 = vmul.f32 %v612, 1.442695
  %v617 = vpow.pop %v616
  %v618 = vmul.f32 %v613, 1.442695
  %v619 = vpow.pop %v618
  %v620 = vmul.f32 %v614, 1.442695
  %v621 = vpow.pop %v620
  %v622 = vmul.f32 %v615, 1.442695
  %v623 = vpow.pop %v622
  %v624 = vadd.f32 %v617, 1.0
  %v625 = vadd.f32 %v619, 1.0
  %v626 = vadd.f32 %v621, 1.0
  %v627 = vadd.f32 %v623, 1.0
  %v628 = vrcp.pop %v624
  %v629 = vmul.f32 1.0, %v628
  %v630 = vrcp.pop %v625
  %v631 = vmul.f32 1.0, %v630
  %v632 = vrcp.pop %v626
  %v633 = vmul.f32 1.0, %v632
  %v634 = vrcp.pop %v627
  %v635 = vmul.f32 1.0, %v634
  %v636 = vtanh.pop %v608
  %v637 = vtanh.pop %v609
  %v638 = vtanh.pop %v610
  %v639 = vtanh.pop %v611
  %v641 = vrot.slane %v492, 7
  %v642 = vrot.slane %v492, 1
  %v643 = vrot.slane %v492, 2
  %644 = vrot.lane.b32.xlu0 %v641, 16
  %v645 = vpop.permute.xlu0 %644
  %646 = vrot.lane.b32.xlu0 %v492, 16
  %v647 = vpop.permute.xlu0 %646
  %648 = vrot.lane.b32.xlu0 %v642, 16
  %v649 = vpop.permute.xlu0 %648
  %650 = vrot.lane.b32.xlu0 %v643, 16
  %v651 = vpop.permute.xlu0 %650
  %v656 = vmul.f32 %v629, %v645
  %v657 = vmul.f32 %v631, %v647
  %v658 = vmul.f32 %v633, %v649
  %v659 = vmul.f32 %v635, %v651
  %664 = vrot.lane.b32.xlu0 %v636, 96
  %v665 = vpop.permute.xlu0 %664
  %666 = vrot.lane.b32.xlu0 %v637, 96
  %v667 = vpop.permute.xlu0 %666
  %668 = vrot.lane.b32.xlu0 %v638, 96
  %v669 = vpop.permute.xlu0 %668
  %670 = vrot.lane.b32.xlu0 %v639, 96
  %v671 = vpop.permute.xlu0 %670
  %v676 = vmul.f32 %v629, %v665
  %v677 = vmul.f32 %v631, %v667
  %v678 = vmul.f32 %v633, %v669
  %v679 = vmul.f32 %v635, %v671
  %684 = vrot.lane.b32.xlu0 %v676, 16
  %v685 = vpop.permute.xlu0 %684
  %686 = vrot.lane.b32.xlu0 %v677, 16
  %v687 = vpop.permute.xlu0 %686
  %688 = vrot.lane.b32.xlu0 %v678, 16
  %v689 = vpop.permute.xlu0 %688
  %690 = vrot.lane.b32.xlu0 %v679, 16
  %v691 = vpop.permute.xlu0 %690
  %v696 = vadd.f32 %v656, %v685
  %v697 = vadd.f32 %v657, %v687
  %v698 = vadd.f32 %v658, %v689
  %v699 = vadd.f32 %v659, %v691
  %v700 = vtanh.pop %v696
  %v701 = vtanh.pop %v697
  %v702 = vtanh.pop %v698
  %v703 = vtanh.pop %v699
  %708 = vrot.lane.b32.xlu0 %v700, 32
  %v709 = vpop.permute.xlu0 %708
  %710 = vrot.lane.b32.xlu0 %v701, 32
  %v711 = vpop.permute.xlu0 %710
  %712 = vrot.lane.b32.xlu0 %v702, 32
  %v713 = vpop.permute.xlu0 %712
  %714 = vrot.lane.b32.xlu0 %v703, 32
  %v715 = vpop.permute.xlu0 %714
  %v720 = vmul.f32 %v629, %v709
  %v721 = vmul.f32 %v631, %v711
  %v722 = vmul.f32 %v633, %v713
  %v723 = vmul.f32 %v635, %v715
  %vm724 = vcmp.gt.s32.totalorder %v270, 1
  %v725 = vsel %vm724, 1, 0
  %726 = vset.pattern.permute.xlu0 0
  %727 = vperm.xlu0 %726, %v725
  %v728 = vpop.permute.xlu0 %727
  %vm729 = vcmp.eq.s32.totalorder %v728, 1
  %v734 = vlaneseq
  %v735 = vshrl.u32 %v734, 7
  %v736 = vsub.s32 1, %v735
  %v737 = vrot.slane %v696, %v736
  %v738 = vlaneseq
  %v739 = vshrl.u32 %v738, 7
  %v740 = vsub.s32 1, %v739
  %v741 = vrot.slane %v697, %v740
  %v742 = vlaneseq
  %v743 = vshrl.u32 %v742, 7
  %v744 = vsub.s32 1, %v743
  %v745 = vrot.slane %v698, %v744
  %v746 = vlaneseq
  %v747 = vshrl.u32 %v746, 7
  %v748 = vsub.s32 1, %v747
  %v749 = vrot.slane %v699, %v748
  %v750 = vsel %vm483, %v741, %v737
  %v751 = vsel %vm485, %v745, %v750
  %v752 = vsel %vm487, %v749, %v751
  %753 = vrot.lane.b32.xlu0 %v752, 112
  %v754 = vpop.permute.xlu0 %753
  %v756 = vsel %vm729, %v754, %v492
  %v761 = vlaneseq
  %v762 = vshrl.u32 %v761, 7
  %v763 = vsub.s32 1, %v762
  %v764 = vrot.slane %v720, %v763
  %v765 = vlaneseq
  %v766 = vshrl.u32 %v765, 7
  %v767 = vsub.s32 1, %v766
  %v768 = vrot.slane %v721, %v767
  %v769 = vlaneseq
  %v770 = vshrl.u32 %v769, 7
  %v771 = vsub.s32 1, %v770
  %v772 = vrot.slane %v722, %v771
  %v773 = vlaneseq
  %v774 = vshrl.u32 %v773, 7
  %v775 = vsub.s32 1, %v774
  %v776 = vrot.slane %v723, %v775
  %v777 = vsel %vm483, %v768, %v764
  %v778 = vsel %vm485, %v772, %v777
  %v779 = vsel %vm487, %v776, %v778
  %780 = vrot.lane.b32.xlu0 %v779, 80
  %v781 = vpop.permute.xlu0 %780
  %v783 = vsel %vm729, %v781, %v519
  %v784 = vsel %vm729, %v781, 0.0
  %786 = vrot.lane.b32.xlu0 %v783, 16
  %v787 = vpop.permute.xlu0 %786
  %v789 = vsel %vm524, %v783, %v787
  %v790 = vmul.f32 %v789, %v269
  %v792 = vsel %vm34, %v790, 0
  %794 = vmatprep.subr.mxu0 0.0
  %795 = vmatpush1.msra.mxu0 0.0
  %796 = vmatprep.subr.mxu0 0.0
  %797 = vmatpush1.msra.mxu0 0.0
  %798 = vmatprep.subr.mxu0 0.0
  %799 = vmatpush1.msra.mxu0 0.0
  %800 = vmatprep.subr.mxu0 0.0
  %801 = vmatpush1.msra.mxu0 0.0
  %802 = vmatprep.subr.mxu0 0.0
  %803 = vmatpush1.msra.mxu0 0.0
  %804 = vmatprep.subr.mxu0 0.0
  %805 = vmatpush1.msra.mxu0 0.0
  %806 = vmatprep.subr.mxu0 0.0
  %807 = vmatpush1.msra.mxu0 0.0
  %808 = vmatprep.subr.mxu0 0.0
  %809 = vmatpush1.msra.mxu0 0.0
  %810 = vmatprep.subr.mxu0 0.0
  %811 = vmatpush1.msra.mxu0 0.0
  %812 = vmatprep.subr.mxu0 0.0
  %813 = vmatpush1.msra.mxu0 0.0
  %814 = vmatprep.subr.mxu0 0.0
  %815 = vmatpush1.msra.mxu0 0.0
  %816 = vmatprep.subr.mxu0 0.0
  %817 = vmatpush1.msra.mxu0 0.0
  %818 = vmatprep.subr.mxu0 0.0
  %819 = vmatpush1.msra.mxu0 %v274
  %820 = vmatprep.subr.mxu0 0.0
  %821 = vmatpush1.msra.mxu0 %v273
  %822 = vmatprep.subr.mxu0 0.0
  %823 = vmatpush1.msra.mxu0 %v272
  %824 = vmatprep.subr.mxu0 0.0
  %825 = vmatpush1.msra.mxu0 %v271
  %826 = vmatprep.subr.mxu0 0.0
  %827 = vmatpush2.msra.mxu0 0.0
  %828 = vmatprep.subr.mxu0 0.0
  %829 = vmatpush2.msra.mxu0 0.0
  %830 = vmatprep.subr.mxu0 0.0
  %831 = vmatpush2.msra.mxu0 0.0
  %832 = vmatprep.subr.mxu0 0.0
  %833 = vmatpush2.msra.mxu0 0.0
  %834 = vmatprep.subr.mxu0 0.0
  %835 = vmatpush2.msra.mxu0 0.0
  %836 = vmatprep.subr.mxu0 0.0
  %837 = vmatpush2.msra.mxu0 0.0
  %838 = vmatprep.subr.mxu0 0.0
  %839 = vmatpush2.msra.mxu0 0.0
  %840 = vmatprep.subr.mxu0 0.0
  %841 = vmatpush2.msra.mxu0 0.0
  %842 = vmatprep.subr.mxu0 0.0
  %843 = vmatpush2.msra.mxu0 0.0
  %844 = vmatprep.subr.mxu0 0.0
  %845 = vmatpush2.msra.mxu0 0.0
  %846 = vmatprep.subr.mxu0 0.0
  %847 = vmatpush2.msra.mxu0 0.0
  %848 = vmatprep.subr.mxu0 0.0
  %849 = vmatpush2.msra.mxu0 0.0
  %850 = vmatprep.subr.mxu0 0.0
  %851 = vmatpush2.msra.mxu0 0.0
  %852 = vmatprep.subr.mxu0 0.0
  %853 = vmatpush2.msra.mxu0 0.0
  %854 = vmatprep.subr.mxu0 0.0
  %855 = vmatpush2.msra.mxu0 0.0
  %856 = vmatprep.subr.mxu0 0.0
  %857 = vmatpush2.msra.mxu0 0.0
  %858 = vmatprep.mubr.f32.mxu0 0.0
  %859 = vmatmul.mubr.f32.gmra.mxu0 %v792
  %v860 = vpop.f32.mrf.mxu0
  %v861 = vadd.f32 0.0, %v860
  %v862 = vpop.f32.mrf.mxu0
  %863 = vdwg.mxu0
  %v865 = vrot.slane %v861, 6
  %v866 = vrot.slane %v861, 7
  %v867 = vrot.slane %v861, 1
  %v872 = vadd.f32 %v256, %v865
  %v873 = vadd.f32 %v257, %v866
  %v874 = vadd.f32 %v258, %v861
  %v875 = vadd.f32 %v259, %v867
  %v876 = vxor.u32 %v872, 2147483648
  %v877 = vxor.u32 %v873, 2147483648
  %v878 = vxor.u32 %v874, 2147483648
  %v879 = vxor.u32 %v875, 2147483648
  %v880 = vmul.f32 %v876, 1.442695
  %v881 = vpow.pop %v880
  %v882 = vmul.f32 %v877, 1.442695
  %v883 = vpow.pop %v882
  %v884 = vmul.f32 %v878, 1.442695
  %v885 = vpow.pop %v884
  %v886 = vmul.f32 %v879, 1.442695
  %v887 = vpow.pop %v886
  %v888 = vadd.f32 %v881, 1.0
  %v889 = vadd.f32 %v883, 1.0
  %v890 = vadd.f32 %v885, 1.0
  %v891 = vadd.f32 %v887, 1.0
  %v892 = vrcp.pop %v888
  %v893 = vmul.f32 1.0, %v892
  %v894 = vrcp.pop %v889
  %v895 = vmul.f32 1.0, %v894
  %v896 = vrcp.pop %v890
  %v897 = vmul.f32 1.0, %v896
  %v898 = vrcp.pop %v891
  %v899 = vmul.f32 1.0, %v898
  %v900 = vtanh.pop %v872
  %v901 = vtanh.pop %v873
  %v902 = vtanh.pop %v874
  %v903 = vtanh.pop %v875
  %v905 = vrot.slane %v756, 6
  %v906 = vrot.slane %v756, 7
  %v907 = vrot.slane %v756, 1
  %908 = vrot.lane.b32.xlu0 %v905, 16
  %v909 = vpop.permute.xlu0 %908
  %910 = vrot.lane.b32.xlu0 %v906, 16
  %v911 = vpop.permute.xlu0 %910
  %912 = vrot.lane.b32.xlu0 %v756, 16
  %v913 = vpop.permute.xlu0 %912
  %914 = vrot.lane.b32.xlu0 %v907, 16
  %v915 = vpop.permute.xlu0 %914
  %v920 = vmul.f32 %v893, %v909
  %v921 = vmul.f32 %v895, %v911
  %v922 = vmul.f32 %v897, %v913
  %v923 = vmul.f32 %v899, %v915
  %928 = vrot.lane.b32.xlu0 %v900, 96
  %v929 = vpop.permute.xlu0 %928
  %930 = vrot.lane.b32.xlu0 %v901, 96
  %v931 = vpop.permute.xlu0 %930
  %932 = vrot.lane.b32.xlu0 %v902, 96
  %v933 = vpop.permute.xlu0 %932
  %934 = vrot.lane.b32.xlu0 %v903, 96
  %v935 = vpop.permute.xlu0 %934
  %v940 = vmul.f32 %v893, %v929
  %v941 = vmul.f32 %v895, %v931
  %v942 = vmul.f32 %v897, %v933
  %v943 = vmul.f32 %v899, %v935
  %948 = vrot.lane.b32.xlu0 %v940, 16
  %v949 = vpop.permute.xlu0 %948
  %950 = vrot.lane.b32.xlu0 %v941, 16
  %v951 = vpop.permute.xlu0 %950
  %952 = vrot.lane.b32.xlu0 %v942, 16
  %v953 = vpop.permute.xlu0 %952
  %954 = vrot.lane.b32.xlu0 %v943, 16
  %v955 = vpop.permute.xlu0 %954
  %v960 = vadd.f32 %v920, %v949
  %v961 = vadd.f32 %v921, %v951
  %v962 = vadd.f32 %v922, %v953
  %v963 = vadd.f32 %v923, %v955
  %v964 = vtanh.pop %v960
  %v965 = vtanh.pop %v961
  %v966 = vtanh.pop %v962
  %v967 = vtanh.pop %v963
  %972 = vrot.lane.b32.xlu0 %v964, 32
  %v973 = vpop.permute.xlu0 %972
  %974 = vrot.lane.b32.xlu0 %v965, 32
  %v975 = vpop.permute.xlu0 %974
  %976 = vrot.lane.b32.xlu0 %v966, 32
  %v977 = vpop.permute.xlu0 %976
  %978 = vrot.lane.b32.xlu0 %v967, 32
  %v979 = vpop.permute.xlu0 %978
  %v984 = vmul.f32 %v893, %v973
  %v985 = vmul.f32 %v895, %v975
  %v986 = vmul.f32 %v897, %v977
  %v987 = vmul.f32 %v899, %v979
  %vm988 = vcmp.gt.s32.totalorder %v270, 2
  %v989 = vsel %vm988, 1, 0
  %990 = vset.pattern.permute.xlu0 0
  %991 = vperm.xlu0 %990, %v989
  %v992 = vpop.permute.xlu0 %991
  %vm993 = vcmp.eq.s32.totalorder %v992, 1
  %v998 = vlaneseq
  %v999 = vshrl.u32 %v998, 7
  %v1000 = vsub.s32 2, %v999
  %v1001 = vrot.slane %v960, %v1000
  %v1002 = vlaneseq
  %v1003 = vshrl.u32 %v1002, 7
  %v1004 = vsub.s32 2, %v1003
  %v1005 = vrot.slane %v961, %v1004
  %v1006 = vlaneseq
  %v1007 = vshrl.u32 %v1006, 7
  %v1008 = vsub.s32 2, %v1007
  %v1009 = vrot.slane %v962, %v1008
  %v1010 = vlaneseq
  %v1011 = vshrl.u32 %v1010, 7
  %v1012 = vsub.s32 2, %v1011
  %v1013 = vrot.slane %v963, %v1012
  %v1014 = vsel %vm483, %v1005, %v1001
  %v1015 = vsel %vm485, %v1009, %v1014
  %v1016 = vsel %vm487, %v1013, %v1015
  %1017 = vrot.lane.b32.xlu0 %v1016, 112
  %v1018 = vpop.permute.xlu0 %1017
  %v1020 = vsel %vm993, %v1018, %v756
  %v1025 = vlaneseq
  %v1026 = vshrl.u32 %v1025, 7
  %v1027 = vsub.s32 2, %v1026
  %v1028 = vrot.slane %v984, %v1027
  %v1029 = vlaneseq
  %v1030 = vshrl.u32 %v1029, 7
  %v1031 = vsub.s32 2, %v1030
  %v1032 = vrot.slane %v985, %v1031
  %v1033 = vlaneseq
  %v1034 = vshrl.u32 %v1033, 7
  %v1035 = vsub.s32 2, %v1034
  %v1036 = vrot.slane %v986, %v1035
  %v1037 = vlaneseq
  %v1038 = vshrl.u32 %v1037, 7
  %v1039 = vsub.s32 2, %v1038
  %v1040 = vrot.slane %v987, %v1039
  %v1041 = vsel %vm483, %v1032, %v1028
  %v1042 = vsel %vm485, %v1036, %v1041
  %v1043 = vsel %vm487, %v1040, %v1042
  %1044 = vrot.lane.b32.xlu0 %v1043, 80
  %v1045 = vpop.permute.xlu0 %1044
  %v1047 = vsel %vm993, %v1045, %v783
  %v1048 = vsel %vm993, %v1045, 0.0
  %1050 = vrot.lane.b32.xlu0 %v1047, 16
  %v1051 = vpop.permute.xlu0 %1050
  %v1053 = vsel %vm524, %v1047, %v1051
  %v1054 = vmul.f32 %v1053, %v269
  %v1056 = vsel %vm34, %v1054, 0
  %1058 = vmatprep.subr.mxu0 0.0
  %1059 = vmatpush1.msra.mxu0 0.0
  %1060 = vmatprep.subr.mxu0 0.0
  %1061 = vmatpush1.msra.mxu0 0.0
  %1062 = vmatprep.subr.mxu0 0.0
  %1063 = vmatpush1.msra.mxu0 0.0
  %1064 = vmatprep.subr.mxu0 0.0
  %1065 = vmatpush1.msra.mxu0 0.0
  %1066 = vmatprep.subr.mxu0 0.0
  %1067 = vmatpush1.msra.mxu0 0.0
  %1068 = vmatprep.subr.mxu0 0.0
  %1069 = vmatpush1.msra.mxu0 0.0
  %1070 = vmatprep.subr.mxu0 0.0
  %1071 = vmatpush1.msra.mxu0 0.0
  %1072 = vmatprep.subr.mxu0 0.0
  %1073 = vmatpush1.msra.mxu0 0.0
  %1074 = vmatprep.subr.mxu0 0.0
  %1075 = vmatpush1.msra.mxu0 0.0
  %1076 = vmatprep.subr.mxu0 0.0
  %1077 = vmatpush1.msra.mxu0 0.0
  %1078 = vmatprep.subr.mxu0 0.0
  %1079 = vmatpush1.msra.mxu0 0.0
  %1080 = vmatprep.subr.mxu0 0.0
  %1081 = vmatpush1.msra.mxu0 0.0
  %1082 = vmatprep.subr.mxu0 0.0
  %1083 = vmatpush1.msra.mxu0 %v274
  %1084 = vmatprep.subr.mxu0 0.0
  %1085 = vmatpush1.msra.mxu0 %v273
  %1086 = vmatprep.subr.mxu0 0.0
  %1087 = vmatpush1.msra.mxu0 %v272
  %1088 = vmatprep.subr.mxu0 0.0
  %1089 = vmatpush1.msra.mxu0 %v271
  %1090 = vmatprep.subr.mxu0 0.0
  %1091 = vmatpush2.msra.mxu0 0.0
  %1092 = vmatprep.subr.mxu0 0.0
  %1093 = vmatpush2.msra.mxu0 0.0
  %1094 = vmatprep.subr.mxu0 0.0
  %1095 = vmatpush2.msra.mxu0 0.0
  %1096 = vmatprep.subr.mxu0 0.0
  %1097 = vmatpush2.msra.mxu0 0.0
  %1098 = vmatprep.subr.mxu0 0.0
  %1099 = vmatpush2.msra.mxu0 0.0
  %1100 = vmatprep.subr.mxu0 0.0
  %1101 = vmatpush2.msra.mxu0 0.0
  %1102 = vmatprep.subr.mxu0 0.0
  %1103 = vmatpush2.msra.mxu0 0.0
  %1104 = vmatprep.subr.mxu0 0.0
  %1105 = vmatpush2.msra.mxu0 0.0
  %1106 = vmatprep.subr.mxu0 0.0
  %1107 = vmatpush2.msra.mxu0 0.0
  %1108 = vmatprep.subr.mxu0 0.0
  %1109 = vmatpush2.msra.mxu0 0.0
  %1110 = vmatprep.subr.mxu0 0.0
  %1111 = vmatpush2.msra.mxu0 0.0
  %1112 = vmatprep.subr.mxu0 0.0
  %1113 = vmatpush2.msra.mxu0 0.0
  %1114 = vmatprep.subr.mxu0 0.0
  %1115 = vmatpush2.msra.mxu0 0.0
  %1116 = vmatprep.subr.mxu0 0.0
  %1117 = vmatpush2.msra.mxu0 0.0
  %1118 = vmatprep.subr.mxu0 0.0
  %1119 = vmatpush2.msra.mxu0 0.0
  %1120 = vmatprep.subr.mxu0 0.0
  %1121 = vmatpush2.msra.mxu0 0.0
  %1122 = vmatprep.mubr.f32.mxu0 0.0
  %1123 = vmatmul.mubr.f32.gmra.mxu0 %v1056
  %v1124 = vpop.f32.mrf.mxu0
  %v1125 = vadd.f32 0.0, %v1124
  %v1126 = vpop.f32.mrf.mxu0
  %1127 = vdwg.mxu0
  %v1129 = vrot.slane %v1125, 5
  %v1130 = vrot.slane %v1125, 6
  %v1131 = vrot.slane %v1125, 7
  %v1136 = vadd.f32 %v256, %v1129
  %v1137 = vadd.f32 %v257, %v1130
  %v1138 = vadd.f32 %v258, %v1131
  %v1139 = vadd.f32 %v259, %v1125
  %v1140 = vxor.u32 %v1136, 2147483648
  %v1141 = vxor.u32 %v1137, 2147483648
  %v1142 = vxor.u32 %v1138, 2147483648
  %v1143 = vxor.u32 %v1139, 2147483648
  %v1144 = vmul.f32 %v1140, 1.442695
  %v1145 = vpow.pop %v1144
  %v1146 = vmul.f32 %v1141, 1.442695
  %v1147 = vpow.pop %v1146
  %v1148 = vmul.f32 %v1142, 1.442695
  %v1149 = vpow.pop %v1148
  %v1150 = vmul.f32 %v1143, 1.442695
  %v1151 = vpow.pop %v1150
  %v1152 = vadd.f32 %v1145, 1.0
  %v1153 = vadd.f32 %v1147, 1.0
  %v1154 = vadd.f32 %v1149, 1.0
  %v1155 = vadd.f32 %v1151, 1.0
  %v1156 = vrcp.pop %v1152
  %v1157 = vmul.f32 1.0, %v1156
  %v1158 = vrcp.pop %v1153
  %v1159 = vmul.f32 1.0, %v1158
  %v1160 = vrcp.pop %v1154
  %v1161 = vmul.f32 1.0, %v1160
  %v1162 = vrcp.pop %v1155
  %v1163 = vmul.f32 1.0, %v1162
  %v1164 = vtanh.pop %v1136
  %v1165 = vtanh.pop %v1137
  %v1166 = vtanh.pop %v1138
  %v1167 = vtanh.pop %v1139
  %v1169 = vrot.slane %v1020, 5
  %v1170 = vrot.slane %v1020, 6
  %v1171 = vrot.slane %v1020, 7
  %1172 = vrot.lane.b32.xlu0 %v1169, 16
  %v1173 = vpop.permute.xlu0 %1172
  %1174 = vrot.lane.b32.xlu0 %v1170, 16
  %v1175 = vpop.permute.xlu0 %1174
  %1176 = vrot.lane.b32.xlu0 %v1171, 16
  %v1177 = vpop.permute.xlu0 %1176
  %1178 = vrot.lane.b32.xlu0 %v1020, 16
  %v1179 = vpop.permute.xlu0 %1178
  %v1184 = vmul.f32 %v1157, %v1173
  %v1185 = vmul.f32 %v1159, %v1175
  %v1186 = vmul.f32 %v1161, %v1177
  %v1187 = vmul.f32 %v1163, %v1179
  %1192 = vrot.lane.b32.xlu0 %v1164, 96
  %v1193 = vpop.permute.xlu0 %1192
  %1194 = vrot.lane.b32.xlu0 %v1165, 96
  %v1195 = vpop.permute.xlu0 %1194
  %1196 = vrot.lane.b32.xlu0 %v1166, 96
  %v1197 = vpop.permute.xlu0 %1196
  %1198 = vrot.lane.b32.xlu0 %v1167, 96
  %v1199 = vpop.permute.xlu0 %1198
  %v1204 = vmul.f32 %v1157, %v1193
  %v1205 = vmul.f32 %v1159, %v1195
  %v1206 = vmul.f32 %v1161, %v1197
  %v1207 = vmul.f32 %v1163, %v1199
  %1212 = vrot.lane.b32.xlu0 %v1204, 16
  %v1213 = vpop.permute.xlu0 %1212
  %1214 = vrot.lane.b32.xlu0 %v1205, 16
  %v1215 = vpop.permute.xlu0 %1214
  %1216 = vrot.lane.b32.xlu0 %v1206, 16
  %v1217 = vpop.permute.xlu0 %1216
  %1218 = vrot.lane.b32.xlu0 %v1207, 16
  %v1219 = vpop.permute.xlu0 %1218
  %v1224 = vadd.f32 %v1184, %v1213
  %v1225 = vadd.f32 %v1185, %v1215
  %v1226 = vadd.f32 %v1186, %v1217
  %v1227 = vadd.f32 %v1187, %v1219
  %v1228 = vtanh.pop %v1224
  %v1229 = vtanh.pop %v1225
  %v1230 = vtanh.pop %v1226
  %v1231 = vtanh.pop %v1227
  %1236 = vrot.lane.b32.xlu0 %v1228, 32
  %v1237 = vpop.permute.xlu0 %1236
  %1238 = vrot.lane.b32.xlu0 %v1229, 32
  %v1239 = vpop.permute.xlu0 %1238
  %1240 = vrot.lane.b32.xlu0 %v1230, 32
  %v1241 = vpop.permute.xlu0 %1240
  %1242 = vrot.lane.b32.xlu0 %v1231, 32
  %v1243 = vpop.permute.xlu0 %1242
  %v1248 = vmul.f32 %v1157, %v1237
  %v1249 = vmul.f32 %v1159, %v1239
  %v1250 = vmul.f32 %v1161, %v1241
  %v1251 = vmul.f32 %v1163, %v1243
  %vm1252 = vcmp.gt.s32.totalorder %v270, 3
  %v1253 = vsel %vm1252, 1, 0
  %1254 = vset.pattern.permute.xlu0 0
  %1255 = vperm.xlu0 %1254, %v1253
  %v1256 = vpop.permute.xlu0 %1255
  %vm1257 = vcmp.eq.s32.totalorder %v1256, 1
  %v1262 = vlaneseq
  %v1263 = vshrl.u32 %v1262, 7
  %v1264 = vsub.s32 3, %v1263
  %v1265 = vrot.slane %v1248, %v1264
  %v1266 = vlaneseq
  %v1267 = vshrl.u32 %v1266, 7
  %v1268 = vsub.s32 3, %v1267
  %v1269 = vrot.slane %v1249, %v1268
  %v1270 = vlaneseq
  %v1271 = vshrl.u32 %v1270, 7
  %v1272 = vsub.s32 3, %v1271
  %v1273 = vrot.slane %v1250, %v1272
  %v1274 = vlaneseq
  %v1275 = vshrl.u32 %v1274, 7
  %v1276 = vsub.s32 3, %v1275
  %v1277 = vrot.slane %v1251, %v1276
  %v1278 = vsel %vm483, %v1269, %v1265
  %v1279 = vsel %vm485, %v1273, %v1278
  %v1280 = vsel %vm487, %v1277, %v1279
  %1281 = vrot.lane.b32.xlu0 %v1280, 80
  %v1282 = vpop.permute.xlu0 %1281
  %v1284 = vsel %vm1257, %v1282, 0.0
  %1286 = vrot.lane.b32.xlu0 %v784, 16
  %v1287 = vpop.permute.xlu0 %1286
  %1290 = vrot.lane.b32.xlu0 %v1048, 32
  %v1291 = vpop.permute.xlu0 %1290
  %1294 = vrot.lane.b32.xlu0 %v1284, 48
  %v1295 = vpop.permute.xlu0 %1294
  %v1297 = vsel %vm524, %v519, %v1287
  %v1298 = vsel %vm34, %v1297, %v1291
  %vm1299 = vcmask 392192
  %v1300 = vsel %vm1299, %v1298, %v1295
  %vm1301 = vcmask 519168
  %1302 = vst.msk [vmem:[%s5] sm:$0xf] %vm1301, %v1300
  // Predicated region
  $region22: #{mgan_forward.4} parent=0 // pred_check
    _
  $region23: #{mgan_forward.4} parent=0 // pred_check_branch
    %1304 = sbr.rel (0) target = $region25
  $region24: #{mgan_forward.4} parent=0 // pred_region
    _
  $region25: #{mgan_forward.4} parent=0 // pred_fallthru
    _
  // Predicated region
  $region26: #{mgan_forward.4} parent=0 // pred_check
    _
  $region27: #{mgan_forward.4} parent=0 // pred_check_branch
    %1306 = sbr.rel (0) target = $region29
  $region28: #{mgan_forward.4} parent=0 // pred_region
    _
  $region29: #{mgan_forward.4} parent=0 // pred_fallthru
    _

// kernel: mgan_forward.3
$region0: #{mgan_forward.3}
  #allocation0 [shape = 'u32[]', space=smem, size = 0x4, offset = 0x4, fixed_abs, tag = 'smem constant byte address 0x4 - core index']
  #allocation1 [shape = 'u32[144,128]{1,0:T(1,128)}', space=vmem, size = 0x12000, scoped, tag = 'internal scratch']
  %s0 = inlined_call_operand.vmem [shape: f32[4,8,32], index: 0, kind: input, shape index: {}]
  %s1 = inlined_call_operand.vmem [shape: s32[4,1], index: 1, kind: input, shape index: {}]
  %s2 = inlined_call_operand.vmem [shape: f32[2,32,64], index: 2, kind: input, shape index: {}]
  %s3 = inlined_call_operand.vmem [shape: f32[32,64], index: 3, kind: input, shape index: {}]
  %s4 = inlined_call_operand.vmem [shape: f32[4,64], index: 4, kind: input, shape index: {}]
  %s5 = inlined_call_operand.vmem [shape: f32[4,128], index: 5, kind: output, shape index: {}]
  %s6 = sld [smem:[#allocation0]]
  $region30: #{mgan_forward.3} parent=0
    _
  %s8 = ssub.s32 1, %s6
  %s9 = scalar_select 0, %s8, %s6
  // Predicated region
  $region2: #{mgan_forward.3} parent=0 // pred_check
    _
  $region3: #{mgan_forward.3} parent=0 // pred_check_branch
    %11 = sbr.rel (0) target = $region5
  $region4: #{mgan_forward.3} parent=0 // pred_region
    _
  $region5: #{mgan_forward.3} parent=0 // pred_fallthru
    _
  // Predicated region
  $region6: #{mgan_forward.3} parent=0 // pred_check
    _
  $region7: #{mgan_forward.3} parent=0 // pred_check_branch
    %13 = sbr.rel (0) target = $region9
  $region8: #{mgan_forward.3} parent=0 // pred_region
    _
  $region9: #{mgan_forward.3} parent=0 // pred_fallthru
    _
  // Predicated region
  $region10: #{mgan_forward.3} parent=0 // pred_check
    _
  $region11: #{mgan_forward.3} parent=0 // pred_check_branch
    %15 = sbr.rel (0) target = $region13
  $region12: #{mgan_forward.3} parent=0 // pred_region
    _
  $region13: #{mgan_forward.3} parent=0 // pred_fallthru
    _
  // Predicated region
  $region14: #{mgan_forward.3} parent=0 // pred_check
    _
  $region15: #{mgan_forward.3} parent=0 // pred_check_branch
    %17 = sbr.rel (0) target = $region17
  $region16: #{mgan_forward.3} parent=0 // pred_region
    _
  $region17: #{mgan_forward.3} parent=0 // pred_fallthru
    _
  // Predicated region
  $region18: #{mgan_forward.3} parent=0 // pred_check
    _
  $region19: #{mgan_forward.3} parent=0 // pred_check_branch
    %19 = sbr.rel (0) target = $region21
  $region20: #{mgan_forward.3} parent=0 // pred_region
    _
  $region21: #{mgan_forward.3} parent=0 // pred_fallthru
    _
  %v20 = vld [vmem:[%s0] sm:$0xff]
  %v21 = vld [vmem:[%s0 + $0x8] sm:$0xff]
  %v22 = vld [vmem:[%s0 + $0x10] sm:$0xff]
  %v23 = vld [vmem:[%s0 + $0x18] sm:$0xff]
  %v24 = vld [vmem:[%s2] sm:$0xff]
  %v25 = vld [vmem:[%s2 + $0x8] sm:$0xff]
  %v26 = vld [vmem:[%s2 + $0x10] sm:$0xff]
  %v27 = vld [vmem:[%s2 + $0x18] sm:$0xff]
  %vm28 = vcmask 261120
  %v30 = vsel %vm28, %v20, 0
  %v33 = vsel %vm28, %v21, 0
  %v36 = vsel %vm28, %v22, 0
  %v39 = vsel %vm28, %v23, 0
  %41 = vmatprep.subr.mxu0 0.0
  %42 = vmatpush1.msra.mxu0 0.0
  %43 = vmatprep.subr.mxu0 0.0
  %44 = vmatpush1.msra.mxu0 0.0
  %45 = vmatprep.subr.mxu0 0.0
  %46 = vmatpush1.msra.mxu0 0.0
  %47 = vmatprep.subr.mxu0 0.0
  %48 = vmatpush1.msra.mxu0 0.0
  %49 = vmatprep.subr.mxu0 0.0
  %50 = vmatpush1.msra.mxu0 0.0
  %51 = vmatprep.subr.mxu0 0.0
  %52 = vmatpush1.msra.mxu0 0.0
  %53 = vmatprep.subr.mxu0 0.0
  %54 = vmatpush1.msra.mxu0 0.0
  %55 = vmatprep.subr.mxu0 0.0
  %56 = vmatpush1.msra.mxu0 0.0
  %57 = vmatprep.subr.mxu0 0.0
  %58 = vmatpush1.msra.mxu0 0.0
  %59 = vmatprep.subr.mxu0 0.0
  %60 = vmatpush1.msra.mxu0 0.0
  %61 = vmatprep.subr.mxu0 0.0
  %62 = vmatpush1.msra.mxu0 0.0
  %63 = vmatprep.subr.mxu0 0.0
  %64 = vmatpush1.msra.mxu0 0.0
  %65 = vmatprep.subr.mxu0 0.0
  %66 = vmatpush1.msra.mxu0 %v27
  %67 = vmatprep.subr.mxu0 0.0
  %68 = vmatpush1.msra.mxu0 %v26
  %69 = vmatprep.subr.mxu0 0.0
  %70 = vmatpush1.msra.mxu0 %v25
  %71 = vmatprep.subr.mxu0 0.0
  %72 = vmatpush1.msra.mxu0 %v24
  %73 = vmatprep.subr.mxu0 0.0
  %74 = vmatpush2.msra.mxu0 0.0
  %75 = vmatprep.subr.mxu0 0.0
  %76 = vmatpush2.msra.mxu0 0.0
  %77 = vmatprep.subr.mxu0 0.0
  %78 = vmatpush2.msra.mxu0 0.0
  %79 = vmatprep.subr.mxu0 0.0
  %80 = vmatpush2.msra.mxu0 0.0
  %81 = vmatprep.subr.mxu0 0.0
  %82 = vmatpush2.msra.mxu0 0.0
  %83 = vmatprep.subr.mxu0 0.0
  %84 = vmatpush2.msra.mxu0 0.0
  %85 = vmatprep.subr.mxu0 0.0
  %86 = vmatpush2.msra.mxu0 0.0
  %87 = vmatprep.subr.mxu0 0.0
  %88 = vmatpush2.msra.mxu0 0.0
  %89 = vmatprep.subr.mxu0 0.0
  %90 = vmatpush2.msra.mxu0 0.0
  %91 = vmatprep.subr.mxu0 0.0
  %92 = vmatpush2.msra.mxu0 0.0
  %93 = vmatprep.subr.mxu0 0.0
  %94 = vmatpush2.msra.mxu0 0.0
  %95 = vmatprep.subr.mxu0 0.0
  %96 = vmatpush2.msra.mxu0 0.0
  %97 = vmatprep.subr.mxu0 0.0
  %98 = vmatpush2.msra.mxu0 0.0
  %99 = vmatprep.subr.mxu0 0.0
  %100 = vmatpush2.msra.mxu0 0.0
  %101 = vmatprep.subr.mxu0 0.0
  %102 = vmatpush2.msra.mxu0 0.0
  %103 = vmatprep.subr.mxu0 0.0
  %104 = vmatpush2.msra.mxu0 0.0
  %105 = vmatprep.mubr.f32.mxu0 0.0
  %106 = vmatmul.mubr.f32.gmra.mxu0 %v30
  %v107 = vpop.f32.mrf.mxu0
  %v108 = vadd.f32 0.0, %v107
  %v109 = vpop.f32.mrf.mxu0
  %110 = vmatprep.mubr.f32.mxu0 0.0
  %111 = vmatmul.mubr.f32.gmra.mxu0 %v33
  %v112 = vpop.f32.mrf.mxu0
  %v113 = vadd.f32 0.0, %v112
  %v114 = vpop.f32.mrf.mxu0
  %115 = vmatprep.mubr.f32.mxu0 0.0
  %116 = vmatmul.mubr.f32.gmra.mxu0 %v36
  %v117 = vpop.f32.mrf.mxu0
  %v118 = vadd.f32 0.0, %v117
  %v119 = vpop.f32.mrf.mxu0
  %120 = vmatprep.mubr.f32.mxu0 0.0
  %121 = vmatmul.mubr.f32.gmra.mxu0 %v39
  %v122 = vpop.f32.mrf.mxu0
  %v123 = vadd.f32 0.0, %v122
  %v124 = vpop.f32.mrf.mxu0
  %125 = vdwg.mxu0
  %s126 = scalar_lea.vmem %s2, 32
  %v127 = vld [vmem:[%s126] sm:$0xff]
  %v128 = vld [vmem:[%s126 + $0x8] sm:$0xff]
  %v129 = vld [vmem:[%s126 + $0x10] sm:$0xff]
  %v130 = vld [vmem:[%s126 + $0x18] sm:$0xff]
  %131 = vmatprep.subr.mxu0 0.0
  %132 = vmatpush1.msra.mxu0 0.0
  %133 = vmatprep.subr.mxu0 0.0
  %134 = vmatpush1.msra.mxu0 0.0
  %135 = vmatprep.subr.mxu0 0.0
  %136 = vmatpush1.msra.mxu0 0.0
  %137 = vmatprep.subr.mxu0 0.0
  %138 = vmatpush1.msra.mxu0 0.0
  %139 = vmatprep.subr.mxu0 0.0
  %140 = vmatpush1.msra.mxu0 0.0
  %141 = vmatprep.subr.mxu0 0.0
  %142 = vmatpush1.msra.mxu0 0.0
  %143 = vmatprep.subr.mxu0 0.0
  %144 = vmatpush1.msra.mxu0 0.0
  %145 = vmatprep.subr.mxu0 0.0
  %146 = vmatpush1.msra.mxu0 0.0
  %147 = vmatprep.subr.mxu0 0.0
  %148 = vmatpush1.msra.mxu0 0.0
  %149 = vmatprep.subr.mxu0 0.0
  %150 = vmatpush1.msra.mxu0 0.0
  %151 = vmatprep.subr.mxu0 0.0
  %152 = vmatpush1.msra.mxu0 0.0
  %153 = vmatprep.subr.mxu0 0.0
  %154 = vmatpush1.msra.mxu0 0.0
  %155 = vmatprep.subr.mxu0 0.0
  %156 = vmatpush1.msra.mxu0 %v130
  %157 = vmatprep.subr.mxu0 0.0
  %158 = vmatpush1.msra.mxu0 %v129
  %159 = vmatprep.subr.mxu0 0.0
  %160 = vmatpush1.msra.mxu0 %v128
  %161 = vmatprep.subr.mxu0 0.0
  %162 = vmatpush1.msra.mxu0 %v127
  %163 = vmatprep.subr.mxu0 0.0
  %164 = vmatpush2.msra.mxu0 0.0
  %165 = vmatprep.subr.mxu0 0.0
  %166 = vmatpush2.msra.mxu0 0.0
  %167 = vmatprep.subr.mxu0 0.0
  %168 = vmatpush2.msra.mxu0 0.0
  %169 = vmatprep.subr.mxu0 0.0
  %170 = vmatpush2.msra.mxu0 0.0
  %171 = vmatprep.subr.mxu0 0.0
  %172 = vmatpush2.msra.mxu0 0.0
  %173 = vmatprep.subr.mxu0 0.0
  %174 = vmatpush2.msra.mxu0 0.0
  %175 = vmatprep.subr.mxu0 0.0
  %176 = vmatpush2.msra.mxu0 0.0
  %177 = vmatprep.subr.mxu0 0.0
  %178 = vmatpush2.msra.mxu0 0.0
  %179 = vmatprep.subr.mxu0 0.0
  %180 = vmatpush2.msra.mxu0 0.0
  %181 = vmatprep.subr.mxu0 0.0
  %182 = vmatpush2.msra.mxu0 0.0
  %183 = vmatprep.subr.mxu0 0.0
  %184 = vmatpush2.msra.mxu0 0.0
  %185 = vmatprep.subr.mxu0 0.0
  %186 = vmatpush2.msra.mxu0 0.0
  %187 = vmatprep.subr.mxu0 0.0
  %188 = vmatpush2.msra.mxu0 0.0
  %189 = vmatprep.subr.mxu0 0.0
  %190 = vmatpush2.msra.mxu0 0.0
  %191 = vmatprep.subr.mxu0 0.0
  %192 = vmatpush2.msra.mxu0 0.0
  %193 = vmatprep.subr.mxu0 0.0
  %194 = vmatpush2.msra.mxu0 0.0
  %195 = vmatprep.mubr.f32.mxu0 0.0
  %196 = vmatmul.mubr.f32.gmra.mxu0 %v30
  %v197 = vpop.f32.mrf.mxu0
  %v198 = vadd.f32 0.0, %v197
  %v199 = vpop.f32.mrf.mxu0
  %200 = vmatprep.mubr.f32.mxu0 0.0
  %201 = vmatmul.mubr.f32.gmra.mxu0 %v33
  %v202 = vpop.f32.mrf.mxu0
  %v203 = vadd.f32 0.0, %v202
  %v204 = vpop.f32.mrf.mxu0
  %205 = vmatprep.mubr.f32.mxu0 0.0
  %206 = vmatmul.mubr.f32.gmra.mxu0 %v36
  %v207 = vpop.f32.mrf.mxu0
  %v208 = vadd.f32 0.0, %v207
  %v209 = vpop.f32.mrf.mxu0
  %210 = vmatprep.mubr.f32.mxu0 0.0
  %211 = vmatmul.mubr.f32.gmra.mxu0 %v39
  %v212 = vpop.f32.mrf.mxu0
  %v213 = vadd.f32 0.0, %v212
  %v214 = vpop.f32.mrf.mxu0
  %215 = vdwg.mxu0
  %v216 = vsel 1, %v108, %v198
  %v217 = vsel 1, %v113, %v203
  %v218 = vsel 0, %v118, %v208
  %v219 = vsel 0, %v123, %v213
  %v220 = vld [vmem:[%s4] sm:$0xf]
  %v223 = vunpack.c.l.s4 1966171168
  %v224 = vunpack.c.0.s8 %v223
  %v225 = vlaneseq
  %v226 = vshrl.u32 %v225, 7
  %v227 = vsub.s32 %v224, %v226
  %v228 = vrot.slane %v220, %v227
  %v229 = vcombine.high %v228, %v228
  %v231 = vunpack.c.l.s4 1966171168
  %v232 = vunpack.c.0.s8 %v231
  %v233 = vlaneseq
  %v234 = vshrl.u32 %v233, 7
  %v235 = vsub.s32 %v232, %v234
  %v236 = vrot.slane %v228, %v235
  %v238 = vunpack.c.l.s4 1966171168
  %v239 = vunpack.c.0.s8 %v238
  %v240 = vlaneseq
  %v241 = vshrl.u32 %v240, 7
  %v242 = vsub.s32 %v239, %v241
  %v243 = vrot.slane %v229, %v242
  %v244 = vcombine.high %v236, %v236
  %v245 = vcombine.high %v243, %v243
  %v246 = vlaneseq
  %v247 = vshrl.u32 %v246, 7
  %v248 = vsub.s32 0, %v247
  %v249 = vrot.slane %v236, %v248
  %v250 = vlaneseq
  %v251 = vshrl.u32 %v250, 7
  %v252 = vsub.s32 0, %v251
  %v253 = vrot.slane %v243, %v252
  %v254 = vlaneseq
  %v255 = vshrl.u32 %v254, 7
  %v256 = vsub.s32 0, %v255
  %v257 = vrot.slane %v244, %v256
  %v258 = vlaneseq
  %v259 = vshrl.u32 %v258, 7
  %v260 = vsub.s32 0, %v259
  %v261 = vrot.slane %v245, %v260
  %v266 = vadd.f32 %v216, %v249
  %v267 = vadd.f32 %v217, %v253
  %v268 = vadd.f32 %v218, %v257
  %v269 = vadd.f32 %v219, %v261
  %v270 = vlaneseq
  %v271 = vshrl.u32 %v270, 7
  %vm272 = vcmp.lt.s32.totalorder %v271, 2
  %v273 = vlaneseq
  %v274 = vand.u32 %v273, 127
  %vm275 = vcmp.lt.s32.totalorder %v274, 16
  %vm276 = vmxor %vm272, %vm275
  %vm277 = vmxor %vm276, 1
  %v278 = vsel %vm277, 1, 0
  %v279 = vcvt.s32.f32 %v278
  %v280 = vld [vmem:[%s1] sm:$0xf]
  %v281 = vld [vmem:[%s3] sm:$0xff]
  %v282 = vld [vmem:[%s3 + $0x8] sm:$0xff]
  %v283 = vld [vmem:[%s3 + $0x10] sm:$0xff]
  %v284 = vld [vmem:[%s3 + $0x18] sm:$0xff]
  %v285 = vmul.f32 %v279, 0.0
  %v287 = vsel %vm28, %v285, 0
  %289 = vmatprep.subr.mxu0 0.0
  %290 = vmatpush1.msra.mxu0 0.0
  %291 = vmatprep.subr.mxu0 0.0
  %292 = vmatpush1.msra.mxu0 0.0
  %293 = vmatprep.subr.mxu0 0.0
  %294 = vmatpush1.msra.mxu0 0.0
  %295 = vmatprep.subr.mxu0 0.0
  %296 = vmatpush1.msra.mxu0 0.0
  %297 = vmatprep.subr.mxu0 0.0
  %298 = vmatpush1.msra.mxu0 0.0
  %299 = vmatprep.subr.mxu0 0.0
  %300 = vmatpush1.msra.mxu0 0.0
  %301 = vmatprep.subr.mxu0 0.0
  %302 = vmatpush1.msra.mxu0 0.0
  %303 = vmatprep.subr.mxu0 0.0
  %304 = vmatpush1.msra.mxu0 0.0
  %305 = vmatprep.subr.mxu0 0.0
  %306 = vmatpush1.msra.mxu0 0.0
  %307 = vmatprep.subr.mxu0 0.0
  %308 = vmatpush1.msra.mxu0 0.0
  %309 = vmatprep.subr.mxu0 0.0
  %310 = vmatpush1.msra.mxu0 0.0
  %311 = vmatprep.subr.mxu0 0.0
  %312 = vmatpush1.msra.mxu0 0.0
  %313 = vmatprep.subr.mxu0 0.0
  %314 = vmatpush1.msra.mxu0 %v284
  %315 = vmatprep.subr.mxu0 0.0
  %316 = vmatpush1.msra.mxu0 %v283
  %317 = vmatprep.subr.mxu0 0.0
  %318 = vmatpush1.msra.mxu0 %v282
  %319 = vmatprep.subr.mxu0 0.0
  %320 = vmatpush1.msra.mxu0 %v281
  %321 = vmatprep.subr.mxu0 0.0
  %322 = vmatpush2.msra.mxu0 0.0
  %323 = vmatprep.subr.mxu0 0.0
  %324 = vmatpush2.msra.mxu0 0.0
  %325 = vmatprep.subr.mxu0 0.0
  %326 = vmatpush2.msra.mxu0 0.0
  %327 = vmatprep.subr.mxu0 0.0
  %328 = vmatpush2.msra.mxu0 0.0
  %329 = vmatprep.subr.mxu0 0.0
  %330 = vmatpush2.msra.mxu0 0.0
  %331 = vmatprep.subr.mxu0 0.0
  %332 = vmatpush2.msra.mxu0 0.0
  %333 = vmatprep.subr.mxu0 0.0
  %334 = vmatpush2.msra.mxu0 0.0
  %335 = vmatprep.subr.mxu0 0.0
  %336 = vmatpush2.msra.mxu0 0.0
  %337 = vmatprep.subr.mxu0 0.0
  %338 = vmatpush2.msra.mxu0 0.0
  %339 = vmatprep.subr.mxu0 0.0
  %340 = vmatpush2.msra.mxu0 0.0
  %341 = vmatprep.subr.mxu0 0.0
  %342 = vmatpush2.msra.mxu0 0.0
  %343 = vmatprep.subr.mxu0 0.0
  %344 = vmatpush2.msra.mxu0 0.0
  %345 = vmatprep.subr.mxu0 0.0
  %346 = vmatpush2.msra.mxu0 0.0
  %347 = vmatprep.subr.mxu0 0.0
  %348 = vmatpush2.msra.mxu0 0.0
  %349 = vmatprep.subr.mxu0 0.0
  %350 = vmatpush2.msra.mxu0 0.0
  %351 = vmatprep.subr.mxu0 0.0
  %352 = vmatpush2.msra.mxu0 0.0
  %353 = vmatprep.mubr.f32.mxu0 0.0
  %354 = vmatmul.mubr.f32.gmra.mxu0 %v287
  %v355 = vpop.f32.mrf.mxu0
  %v356 = vadd.f32 0.0, %v355
  %v357 = vpop.f32.mrf.mxu0
  %358 = vdwg.mxu0
  %v360 = vrot.slane %v356, 1
  %v361 = vrot.slane %v356, 2
  %v362 = vrot.slane %v356, 3
  %v367 = vadd.f32 %v266, %v356
  %v368 = vadd.f32 %v267, %v360
  %v369 = vadd.f32 %v268, %v361
  %v370 = vadd.f32 %v269, %v362
  %v371 = vxor.u32 %v367, 2147483648
  %v372 = vxor.u32 %v368, 2147483648
  %v373 = vxor.u32 %v369, 2147483648
  %v374 = vxor.u32 %v370, 2147483648
  %v375 = vmul.f32 %v371, 1.442695
  %v376 = vpow.pop %v375
  %v377 = vmul.f32 %v372, 1.442695
  %v378 = vpow.pop %v377
  %v379 = vmul.f32 %v373, 1.442695
  %v380 = vpow.pop %v379
  %v381 = vmul.f32 %v374, 1.442695
  %v382 = vpow.pop %v381
  %v383 = vadd.f32 %v376, 1.0
  %v384 = vadd.f32 %v378, 1.0
  %v385 = vadd.f32 %v380, 1.0
  %v386 = vadd.f32 %v382, 1.0
  %v387 = vrcp.pop %v383
  %v388 = vmul.f32 1.0, %v387
  %v389 = vrcp.pop %v384
  %v390 = vmul.f32 1.0, %v389
  %v391 = vrcp.pop %v385
  %v392 = vmul.f32 1.0, %v391
  %v393 = vrcp.pop %v386
  %v394 = vmul.f32 1.0, %v393
  %v395 = vtanh.pop %v367
  %v396 = vtanh.pop %v368
  %v397 = vtanh.pop %v369
  %v398 = vtanh.pop %v370
  %v399 = vmul.f32 %v388, 0.0
  %v400 = vmul.f32 %v390, 0.0
  %v401 = vmul.f32 %v392, 0.0
  %v402 = vmul.f32 %v394, 0.0
  %407 = vrot.lane.b32.xlu0 %v395, 96
  %v408 = vpop.permute.xlu0 %407
  %409 = vrot.lane.b32.xlu0 %v396, 96
  %v410 = vpop.permute.xlu0 %409
  %411 = vrot.lane.b32.xlu0 %v397, 96
  %v412 = vpop.permute.xlu0 %411
  %413 = vrot.lane.b32.xlu0 %v398, 96
  %v414 = vpop.permute.xlu0 %413
  %v419 = vmul.f32 %v388, %v408
  %v420 = vmul.f32 %v390, %v410
  %v421 = vmul.f32 %v392, %v412
  %v422 = vmul.f32 %v394, %v414
  %427 = vrot.lane.b32.xlu0 %v419, 16
  %v428 = vpop.permute.xlu0 %427
  %429 = vrot.lane.b32.xlu0 %v420, 16
  %v430 = vpop.permute.xlu0 %429
  %431 = vrot.lane.b32.xlu0 %v421, 16
  %v432 = vpop.permute.xlu0 %431
  %433 = vrot.lane.b32.xlu0 %v422, 16
  %v434 = vpop.permute.xlu0 %433
  %v439 = vadd.f32 %v399, %v428
  %v440 = vadd.f32 %v400, %v430
  %v441 = vadd.f32 %v401, %v432
  %v442 = vadd.f32 %v402, %v434
  %v443 = vtanh.pop %v439
  %v444 = vtanh.pop %v440
  %v445 = vtanh.pop %v441
  %v446 = vtanh.pop %v442
  %451 = vrot.lane.b32.xlu0 %v443, 32
  %v452 = vpop.permute.xlu0 %451
  %453 = vrot.lane.b32.xlu0 %v444, 32
  %v454 = vpop.permute.xlu0 %453
  %455 = vrot.lane.b32.xlu0 %v445, 32
  %v456 = vpop.permute.xlu0 %455
  %457 = vrot.lane.b32.xlu0 %v446, 32
  %v458 = vpop.permute.xlu0 %457
  %v463 = vmul.f32 %v388, %v452
  %v464 = vmul.f32 %v390, %v454
  %v465 = vmul.f32 %v392, %v456
  %v466 = vmul.f32 %v394, %v458
  %vm467 = vcmp.gt.s32.totalorder %v280, 0
  %v468 = vsel %vm467, 1, 0
  %469 = vset.pattern.permute.xlu0 0
  %470 = vperm.xlu0 %469, %v468
  %v471 = vpop.permute.xlu0 %470
  %vm472 = vcmp.eq.s32.totalorder %v471, 1
  %v477 = vrot.slane %v440, 7
  %vm478 = vcmask 1041409
  %v479 = vsel %vm478, %v477, %v439
  %v480 = vrot.slane %v441, 6
  %vm481 = vcmask 1042434
  %v482 = vsel %vm481, %v480, %v479
  %v483 = vrot.slane %v442, 5
  %vm484 = vcmask 1043459
  %v485 = vsel %vm484, %v483, %v482
  %486 = vrot.lane.b32.xlu0 %v485, 112
  %v487 = vpop.permute.xlu0 %486
  %v489 = vsel %vm472, %v487, 0.0
  %v494 = vrot.slane %v464, 7
  %v495 = vsel %vm478, %v494, %v463
  %v496 = vrot.slane %v465, 6
  %v497 = vsel %vm481, %v496, %v495
  %v498 = vrot.slane %v466, 5
  %v499 = vsel %vm484, %v498, %v497
  %500 = vrot.lane.b32.xlu0 %v499, 80
  %v501 = vpop.permute.xlu0 %500
  %v503 = vsel %vm472, %v501, 0.0
  %505 = vrot.lane.b32.xlu0 %v503, 16
  %v506 = vpop.permute.xlu0 %505
  %vm508 = vcmask 130048
  %v509 = vsel %vm508, %v503, %v506
  %v510 = vmul.f32 %v509, %v279
  %v512 = vsel %vm28, %v510, 0
  %514 = vmatprep.subr.mxu0 0.0
  %515 = vmatpush1.msra.mxu0 0.0
  %516 = vmatprep.subr.mxu0 0.0
  %517 = vmatpush1.msra.mxu0 0.0
  %518 = vmatprep.subr.mxu0 0.0
  %519 = vmatpush1.msra.mxu0 0.0
  %520 = vmatprep.subr.mxu0 0.0
  %521 = vmatpush1.msra.mxu0 0.0
  %522 = vmatprep.subr.mxu0 0.0
  %523 = vmatpush1.msra.mxu0 0.0
  %524 = vmatprep.subr.mxu0 0.0
  %525 = vmatpush1.msra.mxu0 0.0
  %526 = vmatprep.subr.mxu0 0.0
  %527 = vmatpush1.msra.mxu0 0.0
  %528 = vmatprep.subr.mxu0 0.0
  %529 = vmatpush1.msra.mxu0 0.0
  %530 = vmatprep.subr.mxu0 0.0
  %531 = vmatpush1.msra.mxu0 0.0
  %532 = vmatprep.subr.mxu0 0.0
  %533 = vmatpush1.msra.mxu0 0.0
  %534 = vmatprep.subr.mxu0 0.0
  %535 = vmatpush1.msra.mxu0 0.0
  %536 = vmatprep.subr.mxu0 0.0
  %537 = vmatpush1.msra.mxu0 0.0
  %538 = vmatprep.subr.mxu0 0.0
  %539 = vmatpush1.msra.mxu0 %v284
  %540 = vmatprep.subr.mxu0 0.0
  %541 = vmatpush1.msra.mxu0 %v283
  %542 = vmatprep.subr.mxu0 0.0
  %543 = vmatpush1.msra.mxu0 %v282
  %544 = vmatprep.subr.mxu0 0.0
  %545 = vmatpush1.msra.mxu0 %v281
  %546 = vmatprep.subr.mxu0 0.0
  %547 = vmatpush2.msra.mxu0 0.0
  %548 = vmatprep.subr.mxu0 0.0
  %549 = vmatpush2.msra.mxu0 0.0
  %550 = vmatprep.subr.mxu0 0.0
  %551 = vmatpush2.msra.mxu0 0.0
  %552 = vmatprep.subr.mxu0 0.0
  %553 = vmatpush2.msra.mxu0 0.0
  %554 = vmatprep.subr.mxu0 0.0
  %555 = vmatpush2.msra.mxu0 0.0
  %556 = vmatprep.subr.mxu0 0.0
  %557 = vmatpush2.msra.mxu0 0.0
  %558 = vmatprep.subr.mxu0 0.0
  %559 = vmatpush2.msra.mxu0 0.0
  %560 = vmatprep.subr.mxu0 0.0
  %561 = vmatpush2.msra.mxu0 0.0
  %562 = vmatprep.subr.mxu0 0.0
  %563 = vmatpush2.msra.mxu0 0.0
  %564 = vmatprep.subr.mxu0 0.0
  %565 = vmatpush2.msra.mxu0 0.0
  %566 = vmatprep.subr.mxu0 0.0
  %567 = vmatpush2.msra.mxu0 0.0
  %568 = vmatprep.subr.mxu0 0.0
  %569 = vmatpush2.msra.mxu0 0.0
  %570 = vmatprep.subr.mxu0 0.0
  %571 = vmatpush2.msra.mxu0 0.0
  %572 = vmatprep.subr.mxu0 0.0
  %573 = vmatpush2.msra.mxu0 0.0
  %574 = vmatprep.subr.mxu0 0.0
  %575 = vmatpush2.msra.mxu0 0.0
  %576 = vmatprep.subr.mxu0 0.0
  %577 = vmatpush2.msra.mxu0 0.0
  %578 = vmatprep.mubr.f32.mxu0 0.0
  %579 = vmatmul.mubr.f32.gmra.mxu0 %v512
  %v580 = vpop.f32.mrf.mxu0
  %v581 = vadd.f32 0.0, %v580
  %v582 = vpop.f32.mrf.mxu0
  %583 = vdwg.mxu0
  %v585 = vrot.slane %v581, 7
  %v586 = vrot.slane %v581, 1
  %v587 = vrot.slane %v581, 2
  %v592 = vadd.f32 %v266, %v585
  %v593 = vadd.f32 %v267, %v581
  %v594 = vadd.f32 %v268, %v586
  %v595 = vadd.f32 %v269, %v587
  %v596 = vxor.u32 %v592, 2147483648
  %v597 = vxor.u32 %v593, 2147483648
  %v598 = vxor.u32 %v594, 2147483648
  %v599 = vxor.u32 %v595, 2147483648
  %v600 = vmul.f32 %v596, 1.442695
  %v601 = vpow.pop %v600
  %v602 = vmul.f32 %v597, 1.442695
  %v603 = vpow.pop %v602
  %v604 = vmul.f32 %v598, 1.442695
  %v605 = vpow.pop %v604
  %v606 = vmul.f32 %v599, 1.442695
  %v607 = vpow.pop %v606
  %v608 = vadd.f32 %v601, 1.0
  %v609 = vadd.f32 %v603, 1.0
  %v610 = vadd.f32 %v605, 1.0
  %v611 = vadd.f32 %v607, 1.0
  %v612 = vrcp.pop %v608
  %v613 = vmul.f32 1.0, %v612
  %v614 = vrcp.pop %v609
  %v615 = vmul.f32 1.0, %v614
  %v616 = vrcp.pop %v610
  %v617 = vmul.f32 1.0, %v616
  %v618 = vrcp.pop %v611
  %v619 = vmul.f32 1.0, %v618
  %v620 = vtanh.pop %v592
  %v621 = vtanh.pop %v593
  %v622 = vtanh.pop %v594
  %v623 = vtanh.pop %v595
  %v625 = vrot.slane %v489, 7
  %v626 = vrot.slane %v489, 1
  %v627 = vrot.slane %v489, 2
  %628 = vrot.lane.b32.xlu0 %v625, 16
  %v629 = vpop.permute.xlu0 %628
  %630 = vrot.lane.b32.xlu0 %v489, 16
  %v631 = vpop.permute.xlu0 %630
  %632 = vrot.lane.b32.xlu0 %v626, 16
  %v633 = vpop.permute.xlu0 %632
  %634 = vrot.lane.b32.xlu0 %v627, 16
  %v635 = vpop.permute.xlu0 %634
  %v640 = vmul.f32 %v613, %v629
  %v641 = vmul.f32 %v615, %v631
  %v642 = vmul.f32 %v617, %v633
  %v643 = vmul.f32 %v619, %v635
  %648 = vrot.lane.b32.xlu0 %v620, 96
  %v649 = vpop.permute.xlu0 %648
  %650 = vrot.lane.b32.xlu0 %v621, 96
  %v651 = vpop.permute.xlu0 %650
  %652 = vrot.lane.b32.xlu0 %v622, 96
  %v653 = vpop.permute.xlu0 %652
  %654 = vrot.lane.b32.xlu0 %v623, 96
  %v655 = vpop.permute.xlu0 %654
  %v660 = vmul.f32 %v613, %v649
  %v661 = vmul.f32 %v615, %v651
  %v662 = vmul.f32 %v617, %v653
  %v663 = vmul.f32 %v619, %v655
  %668 = vrot.lane.b32.xlu0 %v660, 16
  %v669 = vpop.permute.xlu0 %668
  %670 = vrot.lane.b32.xlu0 %v661, 16
  %v671 = vpop.permute.xlu0 %670
  %672 = vrot.lane.b32.xlu0 %v662, 16
  %v673 = vpop.permute.xlu0 %672
  %674 = vrot.lane.b32.xlu0 %v663, 16
  %v675 = vpop.permute.xlu0 %674
  %v680 = vadd.f32 %v640, %v669
  %v681 = vadd.f32 %v641, %v671
  %v682 = vadd.f32 %v642, %v673
  %v683 = vadd.f32 %v643, %v675
  %v684 = vtanh.pop %v680
  %v685 = vtanh.pop %v681
  %v686 = vtanh.pop %v682
  %v687 = vtanh.pop %v683
  %692 = vrot.lane.b32.xlu0 %v684, 32
  %v693 = vpop.permute.xlu0 %692
  %694 = vrot.lane.b32.xlu0 %v685, 32
  %v695 = vpop.permute.xlu0 %694
  %696 = vrot.lane.b32.xlu0 %v686, 32
  %v697 = vpop.permute.xlu0 %696
  %698 = vrot.lane.b32.xlu0 %v687, 32
  %v699 = vpop.permute.xlu0 %698
  %v704 = vmul.f32 %v613, %v693
  %v705 = vmul.f32 %v615, %v695
  %v706 = vmul.f32 %v617, %v697
  %v707 = vmul.f32 %v619, %v699
  %vm708 = vcmp.gt.s32.totalorder %v280, 1
  %v709 = vsel %vm708, 1, 0
  %710 = vset.pattern.permute.xlu0 0
  %711 = vperm.xlu0 %710, %v709
  %v712 = vpop.permute.xlu0 %711
  %vm713 = vcmp.eq.s32.totalorder %v712, 1
  %v718 = vrot.slane %v680, 1
  %v719 = vsel %vm478, %v681, %v718
  %v720 = vrot.slane %v682, 7
  %v721 = vsel %vm481, %v720, %v719
  %v722 = vrot.slane %v683, 6
  %v723 = vsel %vm484, %v722, %v721
  %724 = vrot.lane.b32.xlu0 %v723, 112
  %v725 = vpop.permute.xlu0 %724
  %v727 = vsel %vm713, %v725, %v489
  %v732 = vrot.slane %v704, 1
  %v733 = vsel %vm478, %v705, %v732
  %v734 = vrot.slane %v706, 7
  %v735 = vsel %vm481, %v734, %v733
  %v736 = vrot.slane %v707, 6
  %v737 = vsel %vm484, %v736, %v735
  %738 = vrot.lane.b32.xlu0 %v737, 80
  %v739 = vpop.permute.xlu0 %738
  %v741 = vsel %vm713, %v739, %v503
  %v742 = vsel %vm713, %v739, 0.0
  %744 = vrot.lane.b32.xlu0 %v741, 16
  %v745 = vpop.permute.xlu0 %744
  %v747 = vsel %vm508, %v741, %v745
  %v748 = vmul.f32 %v747, %v279
  %v750 = vsel %vm28, %v748, 0
  %752 = vmatprep.subr.mxu0 0.0
  %753 = vmatpush1.msra.mxu0 0.0
  %754 = vmatprep.subr.mxu0 0.0
  %755 = vmatpush1.msra.mxu0 0.0
  %756 = vmatprep.subr.mxu0 0.0
  %757 = vmatpush1.msra.mxu0 0.0
  %758 = vmatprep.subr.mxu0 0.0
  %759 = vmatpush1.msra.mxu0 0.0
  %760 = vmatprep.subr.mxu0 0.0
  %761 = vmatpush1.msra.mxu0 0.0
  %762 = vmatprep.subr.mxu0 0.0
  %763 = vmatpush1.msra.mxu0 0.0
  %764 = vmatprep.subr.mxu0 0.0
  %765 = vmatpush1.msra.mxu0 0.0
  %766 = vmatprep.subr.mxu0 0.0
  %767 = vmatpush1.msra.mxu0 0.0
  %768 = vmatprep.subr.mxu0 0.0
  %769 = vmatpush1.msra.mxu0 0.0
  %770 = vmatprep.subr.mxu0 0.0
  %771 = vmatpush1.msra.mxu0 0.0
  %772 = vmatprep.subr.mxu0 0.0
  %773 = vmatpush1.msra.mxu0 0.0
  %774 = vmatprep.subr.mxu0 0.0
  %775 = vmatpush1.msra.mxu0 0.0
  %776 = vmatprep.subr.mxu0 0.0
  %777 = vmatpush1.msra.mxu0 %v284
  %778 = vmatprep.subr.mxu0 0.0
  %779 = vmatpush1.msra.mxu0 %v283
  %780 = vmatprep.subr.mxu0 0.0
  %781 = vmatpush1.msra.mxu0 %v282
  %782 = vmatprep.subr.mxu0 0.0
  %783 = vmatpush1.msra.mxu0 %v281
  %784 = vmatprep.subr.mxu0 0.0
  %785 = vmatpush2.msra.mxu0 0.0
  %786 = vmatprep.subr.mxu0 0.0
  %787 = vmatpush2.msra.mxu0 0.0
  %788 = vmatprep.subr.mxu0 0.0
  %789 = vmatpush2.msra.mxu0 0.0
  %790 = vmatprep.subr.mxu0 0.0
  %791 = vmatpush2.msra.mxu0 0.0
  %792 = vmatprep.subr.mxu0 0.0
  %793 = vmatpush2.msra.mxu0 0.0
  %794 = vmatprep.subr.mxu0 0.0
  %795 = vmatpush2.msra.mxu0 0.0
  %796 = vmatprep.subr.mxu0 0.0
  %797 = vmatpush2.msra.mxu0 0.0
  %798 = vmatprep.subr.mxu0 0.0
  %799 = vmatpush2.msra.mxu0 0.0
  %800 = vmatprep.subr.mxu0 0.0
  %801 = vmatpush2.msra.mxu0 0.0
  %802 = vmatprep.subr.mxu0 0.0
  %803 = vmatpush2.msra.mxu0 0.0
  %804 = vmatprep.subr.mxu0 0.0
  %805 = vmatpush2.msra.mxu0 0.0
  %806 = vmatprep.subr.mxu0 0.0
  %807 = vmatpush2.msra.mxu0 0.0
  %808 = vmatprep.subr.mxu0 0.0
  %809 = vmatpush2.msra.mxu0 0.0
  %810 = vmatprep.subr.mxu0 0.0
  %811 = vmatpush2.msra.mxu0 0.0
  %812 = vmatprep.subr.mxu0 0.0
  %813 = vmatpush2.msra.mxu0 0.0
  %814 = vmatprep.subr.mxu0 0.0
  %815 = vmatpush2.msra.mxu0 0.0
  %816 = vmatprep.mubr.f32.mxu0 0.0
  %817 = vmatmul.mubr.f32.gmra.mxu0 %v750
  %v818 = vpop.f32.mrf.mxu0
  %v819 = vadd.f32 0.0, %v818
  %v820 = vpop.f32.mrf.mxu0
  %821 = vdwg.mxu0
  %v823 = vrot.slane %v819, 6
  %v824 = vrot.slane %v819, 7
  %v825 = vrot.slane %v819, 1
  %v830 = vadd.f32 %v266, %v823
  %v831 = vadd.f32 %v267, %v824
  %v832 = vadd.f32 %v268, %v819
  %v833 = vadd.f32 %v269, %v825
  %v834 = vxor.u32 %v830, 2147483648
  %v835 = vxor.u32 %v831, 2147483648
  %v836 = vxor.u32 %v832, 2147483648
  %v837 = vxor.u32 %v833, 2147483648
  %v838 = vmul.f32 %v834, 1.442695
  %v839 = vpow.pop %v838
  %v840 = vmul.f32 %v835, 1.442695
  %v841 = vpow.pop %v840
  %v842 = vmul.f32 %v836, 1.442695
  %v843 = vpow.pop %v842
  %v844 = vmul.f32 %v837, 1.442695
  %v845 = vpow.pop %v844
  %v846 = vadd.f32 %v839, 1.0
  %v847 = vadd.f32 %v841, 1.0
  %v848 = vadd.f32 %v843, 1.0
  %v849 = vadd.f32 %v845, 1.0
  %v850 = vrcp.pop %v846
  %v851 = vmul.f32 1.0, %v850
  %v852 = vrcp.pop %v847
  %v853 = vmul.f32 1.0, %v852
  %v854 = vrcp.pop %v848
  %v855 = vmul.f32 1.0, %v854
  %v856 = vrcp.pop %v849
  %v857 = vmul.f32 1.0, %v856
  %v858 = vtanh.pop %v830
  %v859 = vtanh.pop %v831
  %v860 = vtanh.pop %v832
  %v861 = vtanh.pop %v833
  %v863 = vrot.slane %v727, 6
  %v864 = vrot.slane %v727, 7
  %v865 = vrot.slane %v727, 1
  %866 = vrot.lane.b32.xlu0 %v863, 16
  %v867 = vpop.permute.xlu0 %866
  %868 = vrot.lane.b32.xlu0 %v864, 16
  %v869 = vpop.permute.xlu0 %868
  %870 = vrot.lane.b32.xlu0 %v727, 16
  %v871 = vpop.permute.xlu0 %870
  %872 = vrot.lane.b32.xlu0 %v865, 16
  %v873 = vpop.permute.xlu0 %872
  %v878 = vmul.f32 %v851, %v867
  %v879 = vmul.f32 %v853, %v869
  %v880 = vmul.f32 %v855, %v871
  %v881 = vmul.f32 %v857, %v873
  %886 = vrot.lane.b32.xlu0 %v858, 96
  %v887 = vpop.permute.xlu0 %886
  %888 = vrot.lane.b32.xlu0 %v859, 96
  %v889 = vpop.permute.xlu0 %888
  %890 = vrot.lane.b32.xlu0 %v860, 96
  %v891 = vpop.permute.xlu0 %890
  %892 = vrot.lane.b32.xlu0 %v861, 96
  %v893 = vpop.permute.xlu0 %892
  %v898 = vmul.f32 %v851, %v887
  %v899 = vmul.f32 %v853, %v889
  %v900 = vmul.f32 %v855, %v891
  %v901 = vmul.f32 %v857, %v893
  %906 = vrot.lane.b32.xlu0 %v898, 16
  %v907 = vpop.permute.xlu0 %906
  %908 = vrot.lane.b32.xlu0 %v899, 16
  %v909 = vpop.permute.xlu0 %908
  %910 = vrot.lane.b32.xlu0 %v900, 16
  %v911 = vpop.permute.xlu0 %910
  %912 = vrot.lane.b32.xlu0 %v901, 16
  %v913 = vpop.permute.xlu0 %912
  %v918 = vadd.f32 %v878, %v907
  %v919 = vadd.f32 %v879, %v909
  %v920 = vadd.f32 %v880, %v911
  %v921 = vadd.f32 %v881, %v913
  %v922 = vtanh.pop %v918
  %v923 = vtanh.pop %v919
  %v924 = vtanh.pop %v920
  %v925 = vtanh.pop %v921
  %930 = vrot.lane.b32.xlu0 %v922, 32
  %v931 = vpop.permute.xlu0 %930
  %932 = vrot.lane.b32.xlu0 %v923, 32
  %v933 = vpop.permute.xlu0 %932
  %934 = vrot.lane.b32.xlu0 %v924, 32
  %v935 = vpop.permute.xlu0 %934
  %936 = vrot.lane.b32.xlu0 %v925, 32
  %v937 = vpop.permute.xlu0 %936
  %v942 = vmul.f32 %v851, %v931
  %v943 = vmul.f32 %v853, %v933
  %v944 = vmul.f32 %v855, %v935
  %v945 = vmul.f32 %v857, %v937
  %vm946 = vcmp.gt.s32.totalorder %v280, 2
  %v947 = vsel %vm946, 1, 0
  %948 = vset.pattern.permute.xlu0 0
  %949 = vperm.xlu0 %948, %v947
  %v950 = vpop.permute.xlu0 %949
  %vm951 = vcmp.eq.s32.totalorder %v950, 1
  %v956 = vrot.slane %v918, 2
  %v957 = vrot.slane %v919, 1
  %v958 = vsel %vm478, %v957, %v956
  %v959 = vsel %vm481, %v920, %v958
  %v960 = vrot.slane %v921, 7
  %v961 = vsel %vm484, %v960, %v959
  %962 = vrot.lane.b32.xlu0 %v961, 112
  %v963 = vpop.permute.xlu0 %962
  %v965 = vsel %vm951, %v963, %v727
  %v970 = vrot.slane %v942, 2
  %v971 = vrot.slane %v943, 1
  %v972 = vsel %vm478, %v971, %v970
  %v973 = vsel %vm481, %v944, %v972
  %v974 = vrot.slane %v945, 7
  %v975 = vsel %vm484, %v974, %v973
  %976 = vrot.lane.b32.xlu0 %v975, 80
  %v977 = vpop.permute.xlu0 %976
  %v979 = vsel %vm951, %v977, %v741
  %v980 = vsel %vm951, %v977, 0.0
  %982 = vrot.lane.b32.xlu0 %v979, 16
  %v983 = vpop.permute.xlu0 %982
  %v985 = vsel %vm508, %v979, %v983
  %v986 = vmul.f32 %v985, %v279
  %v988 = vsel %vm28, %v986, 0
  %990 = vmatprep.subr.mxu0 0.0
  %991 = vmatpush1.msra.mxu0 0.0
  %992 = vmatprep.subr.mxu0 0.0
  %993 = vmatpush1.msra.mxu0 0.0
  %994 = vmatprep.subr.mxu0 0.0
  %995 = vmatpush1.msra.mxu0 0.0
  %996 = vmatprep.subr.mxu0 0.0
  %997 = vmatpush1.msra.mxu0 0.0
  %998 = vmatprep.subr.mxu0 0.0
  %999 = vmatpush1.msra.mxu0 0.0
  %1000 = vmatprep.subr.mxu0 0.0
  %1001 = vmatpush1.msra.mxu0 0.0
  %1002 = vmatprep.subr.mxu0 0.0
  %1003 = vmatpush1.msra.mxu0 0.0
  %1004 = vmatprep.subr.mxu0 0.0
  %1005 = vmatpush1.msra.mxu0 0.0
  %1006 = vmatprep.subr.mxu0 0.0
  %1007 = vmatpush1.msra.mxu0 0.0
  %1008 = vmatprep.subr.mxu0 0.0
  %1009 = vmatpush1.msra.mxu0 0.0
  %1010 = vmatprep.subr.mxu0 0.0
  %1011 = vmatpush1.msra.mxu0 0.0
  %1012 = vmatprep.subr.mxu0 0.0
  %1013 = vmatpush1.msra.mxu0 0.0
  %1014 = vmatprep.subr.mxu0 0.0
  %1015 = vmatpush1.msra.mxu0 %v284
  %1016 = vmatprep.subr.mxu0 0.0
  %1017 = vmatpush1.msra.mxu0 %v283
  %1018 = vmatprep.subr.mxu0 0.0
  %1019 = vmatpush1.msra.mxu0 %v282
  %1020 = vmatprep.subr.mxu0 0.0
  %1021 = vmatpush1.msra.mxu0 %v281
  %1022 = vmatprep.subr.mxu0 0.0
  %1023 = vmatpush2.msra.mxu0 0.0
  %1024 = vmatprep.subr.mxu0 0.0
  %1025 = vmatpush2.msra.mxu0 0.0
  %1026 = vmatprep.subr.mxu0 0.0
  %1027 = vmatpush2.msra.mxu0 0.0
  %1028 = vmatprep.subr.mxu0 0.0
  %1029 = vmatpush2.msra.mxu0 0.0
  %1030 = vmatprep.subr.mxu0 0.0
  %1031 = vmatpush2.msra.mxu0 0.0
  %1032 = vmatprep.subr.mxu0 0.0
  %1033 = vmatpush2.msra.mxu0 0.0
  %1034 = vmatprep.subr.mxu0 0.0
  %1035 = vmatpush2.msra.mxu0 0.0
  %1036 = vmatprep.subr.mxu0 0.0
  %1037 = vmatpush2.msra.mxu0 0.0
  %1038 = vmatprep.subr.mxu0 0.0
  %1039 = vmatpush2.msra.mxu0 0.0
  %1040 = vmatprep.subr.mxu0 0.0
  %1041 = vmatpush2.msra.mxu0 0.0
  %1042 = vmatprep.subr.mxu0 0.0
  %1043 = vmatpush2.msra.mxu0 0.0
  %1044 = vmatprep.subr.mxu0 0.0
  %1045 = vmatpush2.msra.mxu0 0.0
  %1046 = vmatprep.subr.mxu0 0.0
  %1047 = vmatpush2.msra.mxu0 0.0
  %1048 = vmatprep.subr.mxu0 0.0
  %1049 = vmatpush2.msra.mxu0 0.0
  %1050 = vmatprep.subr.mxu0 0.0
  %1051 = vmatpush2.msra.mxu0 0.0
  %1052 = vmatprep.subr.mxu0 0.0
  %1053 = vmatpush2.msra.mxu0 0.0
  %1054 = vmatprep.mubr.f32.mxu0 0.0
  %1055 = vmatmul.mubr.f32.gmra.mxu0 %v988
  %v1056 = vpop.f32.mrf.mxu0
  %v1057 = vadd.f32 0.0, %v1056
  %v1058 = vpop.f32.mrf.mxu0
  %1059 = vdwg.mxu0
  %v1061 = vrot.slane %v1057, 5
  %v1062 = vrot.slane %v1057, 6
  %v1063 = vrot.slane %v1057, 7
  %v1068 = vadd.f32 %v266, %v1061
  %v1069 = vadd.f32 %v267, %v1062
  %v1070 = vadd.f32 %v268, %v1063
  %v1071 = vadd.f32 %v269, %v1057
  %v1072 = vxor.u32 %v1068, 2147483648
  %v1073 = vxor.u32 %v1069, 2147483648
  %v1074 = vxor.u32 %v1070, 2147483648
  %v1075 = vxor.u32 %v1071, 2147483648
  %v1076 = vmul.f32 %v1072, 1.442695
  %v1077 = vpow.pop %v1076
  %v1078 = vmul.f32 %v1073, 1.442695
  %v1079 = vpow.pop %v1078
  %v1080 = vmul.f32 %v1074, 1.442695
  %v1081 = vpow.pop %v1080
  %v1082 = vmul.f32 %v1075, 1.442695
  %v1083 = vpow.pop %v1082
  %v1084 = vadd.f32 %v1077, 1.0
  %v1085 = vadd.f32 %v1079, 1.0
  %v1086 = vadd.f32 %v1081, 1.0
  %v1087 = vadd.f32 %v1083, 1.0
  %v1088 = vrcp.pop %v1084
  %v1089 = vmul.f32 1.0, %v1088
  %v1090 = vrcp.pop %v1085
  %v1091 = vmul.f32 1.0, %v1090
  %v1092 = vrcp.pop %v1086
  %v1093 = vmul.f32 1.0, %v1092
  %v1094 = vrcp.pop %v1087
  %v1095 = vmul.f32 1.0, %v1094
  %v1096 = vtanh.pop %v1068
  %v1097 = vtanh.pop %v1069
  %v1098 = vtanh.pop %v1070
  %v1099 = vtanh.pop %v1071
  %v1101 = vrot.slane %v965, 5
  %v1102 = vrot.slane %v965, 6
  %v1103 = vrot.slane %v965, 7
  %1104 = vrot.lane.b32.xlu0 %v1101, 16
  %v1105 = vpop.permute.xlu0 %1104
  %1106 = vrot.lane.b32.xlu0 %v1102, 16
  %v1107 = vpop.permute.xlu0 %1106
  %1108 = vrot.lane.b32.xlu0 %v1103, 16
  %v1109 = vpop.permute.xlu0 %1108
  %1110 = vrot.lane.b32.xlu0 %v965, 16
  %v1111 = vpop.permute.xlu0 %1110
  %v1116 = vmul.f32 %v1089, %v1105
  %v1117 = vmul.f32 %v1091, %v1107
  %v1118 = vmul.f32 %v1093, %v1109
  %v1119 = vmul.f32 %v1095, %v1111
  %1124 = vrot.lane.b32.xlu0 %v1096, 96
  %v1125 = vpop.permute.xlu0 %1124
  %1126 = vrot.lane.b32.xlu0 %v1097, 96
  %v1127 = vpop.permute.xlu0 %1126
  %1128 = vrot.lane.b32.xlu0 %v1098, 96
  %v1129 = vpop.permute.xlu0 %1128
  %1130 = vrot.lane.b32.xlu0 %v1099, 96
  %v1131 = vpop.permute.xlu0 %1130
  %v1136 = vmul.f32 %v1089, %v1125
  %v1137 = vmul.f32 %v1091, %v1127
  %v1138 = vmul.f32 %v1093, %v1129
  %v1139 = vmul.f32 %v1095, %v1131
  %1144 = vrot.lane.b32.xlu0 %v1136, 16
  %v1145 = vpop.permute.xlu0 %1144
  %1146 = vrot.lane.b32.xlu0 %v1137, 16
  %v1147 = vpop.permute.xlu0 %1146
  %1148 = vrot.lane.b32.xlu0 %v1138, 16
  %v1149 = vpop.permute.xlu0 %1148
  %1150 = vrot.lane.b32.xlu0 %v1139, 16
  %v1151 = vpop.permute.xlu0 %1150
  %v1156 = vadd.f32 %v1116, %v1145
  %v1157 = vadd.f32 %v1117, %v1147
  %v1158 = vadd.f32 %v1118, %v1149
  %v1159 = vadd.f32 %v1119, %v1151
  %v1160 = vtanh.pop %v1156
  %v1161 = vtanh.pop %v1157
  %v1162 = vtanh.pop %v1158
  %v1163 = vtanh.pop %v1159
  %1168 = vrot.lane.b32.xlu0 %v1160, 32
  %v1169 = vpop.permute.xlu0 %1168
  %1170 = vrot.lane.b32.xlu0 %v1161, 32
  %v1171 = vpop.permute.xlu0 %1170
  %1172 = vrot.lane.b32.xlu0 %v1162, 32
  %v1173 = vpop.permute.xlu0 %1172
  %1174 = vrot.lane.b32.xlu0 %v1163, 32
  %v1175 = vpop.permute.xlu0 %1174
  %v1180 = vmul.f32 %v1089, %v1169
  %v1181 = vmul.f32 %v1091, %v1171
  %v1182 = vmul.f32 %v1093, %v1173
  %v1183 = vmul.f32 %v1095, %v1175
  %vm1184 = vcmp.gt.s32.totalorder %v280, 3
  %v1185 = vsel %vm1184, 1, 0
  %1186 = vset.pattern.permute.xlu0 0
  %1187 = vperm.xlu0 %1186, %v1185
  %v1188 = vpop.permute.xlu0 %1187
  %vm1189 = vcmp.eq.s32.totalorder %v1188, 1
  %v1194 = vrot.slane %v1156, 3
  %v1195 = vrot.slane %v1157, 2
  %v1196 = vsel %vm478, %v1195, %v1194
  %v1197 = vrot.slane %v1158, 1
  %v1198 = vsel %vm481, %v1197, %v1196
  %v1199 = vsel %vm484, %v1159, %v1198
  %1200 = vrot.lane.b32.xlu0 %v1199, 112
  %v1201 = vpop.permute.xlu0 %1200
  %v1203 = vsel %vm1189, %v1201, %v965
  %v1208 = vrot.slane %v1180, 3
  %v1209 = vrot.slane %v1181, 2
  %v1210 = vsel %vm478, %v1209, %v1208
  %v1211 = vrot.slane %v1182, 1
  %v1212 = vsel %vm481, %v1211, %v1210
  %v1213 = vsel %vm484, %v1183, %v1212
  %1214 = vrot.lane.b32.xlu0 %v1213, 80
  %v1215 = vpop.permute.xlu0 %1214
  %v1217 = vsel %vm1189, %v1215, %v979
  %v1218 = vsel %vm1189, %v1215, 0.0
  %1220 = vrot.lane.b32.xlu0 %v1217, 16
  %v1221 = vpop.permute.xlu0 %1220
  %v1223 = vsel %vm508, %v1217, %v1221
  %v1224 = vmul.f32 %v1223, %v279
  %v1226 = vsel %vm28, %v1224, 0
  %1228 = vmatprep.subr.mxu0 0.0
  %1229 = vmatpush1.msra.mxu0 0.0
  %1230 = vmatprep.subr.mxu0 0.0
  %1231 = vmatpush1.msra.mxu0 0.0
  %1232 = vmatprep.subr.mxu0 0.0
  %1233 = vmatpush1.msra.mxu0 0.0
  %1234 = vmatprep.subr.mxu0 0.0
  %1235 = vmatpush1.msra.mxu0 0.0
  %1236 = vmatprep.subr.mxu0 0.0
  %1237 = vmatpush1.msra.mxu0 0.0
  %1238 = vmatprep.subr.mxu0 0.0
  %1239 = vmatpush1.msra.mxu0 0.0
  %1240 = vmatprep.subr.mxu0 0.0
  %1241 = vmatpush1.msra.mxu0 0.0
  %1242 = vmatprep.subr.mxu0 0.0
  %1243 = vmatpush1.msra.mxu0 0.0
  %1244 = vmatprep.subr.mxu0 0.0
  %1245 = vmatpush1.msra.mxu0 0.0
  %1246 = vmatprep.subr.mxu0 0.0
  %1247 = vmatpush1.msra.mxu0 0.0
  %1248 = vmatprep.subr.mxu0 0.0
  %1249 = vmatpush1.msra.mxu0 0.0
  %1250 = vmatprep.subr.mxu0 0.0
  %1251 = vmatpush1.msra.mxu0 0.0
  %1252 = vmatprep.subr.mxu0 0.0
  %1253 = vmatpush1.msra.mxu0 %v284
  %1254 = vmatprep.subr.mxu0 0.0
  %1255 = vmatpush1.msra.mxu0 %v283
  %1256 = vmatprep.subr.mxu0 0.0
  %1257 = vmatpush1.msra.mxu0 %v282
  %1258 = vmatprep.subr.mxu0 0.0
  %1259 = vmatpush1.msra.mxu0 %v281
  %1260 = vmatprep.subr.mxu0 0.0
  %1261 = vmatpush2.msra.mxu0 0.0
  %1262 = vmatprep.subr.mxu0 0.0
  %1263 = vmatpush2.msra.mxu0 0.0
  %1264 = vmatprep.subr.mxu0 0.0
  %1265 = vmatpush2.msra.mxu0 0.0
  %1266 = vmatprep.subr.mxu0 0.0
  %1267 = vmatpush2.msra.mxu0 0.0
  %1268 = vmatprep.subr.mxu0 0.0
  %1269 = vmatpush2.msra.mxu0 0.0
  %1270 = vmatprep.subr.mxu0 0.0
  %1271 = vmatpush2.msra.mxu0 0.0
  %1272 = vmatprep.subr.mxu0 0.0
  %1273 = vmatpush2.msra.mxu0 0.0
  %1274 = vmatprep.subr.mxu0 0.0
  %1275 = vmatpush2.msra.mxu0 0.0
  %1276 = vmatprep.subr.mxu0 0.0
  %1277 = vmatpush2.msra.mxu0 0.0
  %1278 = vmatprep.subr.mxu0 0.0
  %1279 = vmatpush2.msra.mxu0 0.0
  %1280 = vmatprep.subr.mxu0 0.0
  %1281 = vmatpush2.msra.mxu0 0.0
  %1282 = vmatprep.subr.mxu0 0.0
  %1283 = vmatpush2.msra.mxu0 0.0
  %1284 = vmatprep.subr.mxu0 0.0
  %1285 = vmatpush2.msra.mxu0 0.0
  %1286 = vmatprep.subr.mxu0 0.0
  %1287 = vmatpush2.msra.mxu0 0.0
  %1288 = vmatprep.subr.mxu0 0.0
  %1289 = vmatpush2.msra.mxu0 0.0
  %1290 = vmatprep.subr.mxu0 0.0
  %1291 = vmatpush2.msra.mxu0 0.0
  %1292 = vmatprep.mubr.f32.mxu0 0.0
  %1293 = vmatmul.mubr.f32.gmra.mxu0 %v1226
  %v1294 = vpop.f32.mrf.mxu0
  %v1295 = vadd.f32 0.0, %v1294
  %v1296 = vpop.f32.mrf.mxu0
  %1297 = vdwg.mxu0
  %v1299 = vrot.slane %v1295, 4
  %v1300 = vrot.slane %v1295, 5
  %v1301 = vrot.slane %v1295, 6
  %v1302 = vrot.slane %v1295, 7
  %v1307 = vadd.f32 %v266, %v1299
  %v1308 = vadd.f32 %v267, %v1300
  %v1309 = vadd.f32 %v268, %v1301
  %v1310 = vadd.f32 %v269, %v1302
  %v1311 = vxor.u32 %v1307, 2147483648
  %v1312 = vxor.u32 %v1308, 2147483648
  %v1313 = vxor.u32 %v1309, 2147483648
  %v1314 = vxor.u32 %v1310, 2147483648
  %v1315 = vmul.f32 %v1311, 1.442695
  %v1316 = vpow.pop %v1315
  %v1317 = vmul.f32 %v1312, 1.442695
  %v1318 = vpow.pop %v1317
  %v1319 = vmul.f32 %v1313, 1.442695
  %v1320 = vpow.pop %v1319
  %v1321 = vmul.f32 %v1314, 1.442695
  %v1322 = vpow.pop %v1321
  %v1323 = vadd.f32 %v1316, 1.0
  %v1324 = vadd.f32 %v1318, 1.0
  %v1325 = vadd.f32 %v1320, 1.0
  %v1326 = vadd.f32 %v1322, 1.0
  %v1327 = vrcp.pop %v1323
  %v1328 = vmul.f32 1.0, %v1327
  %v1329 = vrcp.pop %v1324
  %v1330 = vmul.f32 1.0, %v1329
  %v1331 = vrcp.pop %v1325
  %v1332 = vmul.f32 1.0, %v1331
  %v1333 = vrcp.pop %v1326
  %v1334 = vmul.f32 1.0, %v1333
  %v1335 = vtanh.pop %v1307
  %v1336 = vtanh.pop %v1308
  %v1337 = vtanh.pop %v1309
  %v1338 = vtanh.pop %v1310
  %v1340 = vrot.slane %v1203, 4
  %v1341 = vrot.slane %v1203, 5
  %v1342 = vrot.slane %v1203, 6
  %v1343 = vrot.slane %v1203, 7
  %1344 = vrot.lane.b32.xlu0 %v1340, 16
  %v1345 = vpop.permute.xlu0 %1344
  %1346 = vrot.lane.b32.xlu0 %v1341, 16
  %v1347 = vpop.permute.xlu0 %1346
  %1348 = vrot.lane.b32.xlu0 %v1342, 16
  %v1349 = vpop.permute.xlu0 %1348
  %1350 = vrot.lane.b32.xlu0 %v1343, 16
  %v1351 = vpop.permute.xlu0 %1350
  %v1356 = vmul.f32 %v1328, %v1345
  %v1357 = vmul.f32 %v1330, %v1347
  %v1358 = vmul.f32 %v1332, %v1349
  %v1359 = vmul.f32 %v1334, %v1351
  %1364 = vrot.lane.b32.xlu0 %v1335, 96
  %v1365 = vpop.permute.xlu0 %1364
  %1366 = vrot.lane.b32.xlu0 %v1336, 96
  %v1367 = vpop.permute.xlu0 %1366
  %1368 = vrot.lane.b32.xlu0 %v1337, 96
  %v1369 = vpop.permute.xlu0 %1368
  %1370 = vrot.lane.b32.xlu0 %v1338, 96
  %v1371 = vpop.permute.xlu0 %1370
  %v1376 = vmul.f32 %v1328, %v1365
  %v1377 = vmul.f32 %v1330, %v1367
  %v1378 = vmul.f32 %v1332, %v1369
  %v1379 = vmul.f32 %v1334, %v1371
  %1384 = vrot.lane.b32.xlu0 %v1376, 16
  %v1385 = vpop.permute.xlu0 %1384
  %1386 = vrot.lane.b32.xlu0 %v1377, 16
  %v1387 = vpop.permute.xlu0 %1386
  %1388 = vrot.lane.b32.xlu0 %v1378, 16
  %v1389 = vpop.permute.xlu0 %1388
  %1390 = vrot.lane.b32.xlu0 %v1379, 16
  %v1391 = vpop.permute.xlu0 %1390
  %v1396 = vadd.f32 %v1356, %v1385
  %v1397 = vadd.f32 %v1357, %v1387
  %v1398 = vadd.f32 %v1358, %v1389
  %v1399 = vadd.f32 %v1359, %v1391
  %v1400 = vtanh.pop %v1396
  %v1401 = vtanh.pop %v1397
  %v1402 = vtanh.pop %v1398
  %v1403 = vtanh.pop %v1399
  %1408 = vrot.lane.b32.xlu0 %v1400, 32
  %v1409 = vpop.permute.xlu0 %1408
  %1410 = vrot.lane.b32.xlu0 %v1401, 32
  %v1411 = vpop.permute.xlu0 %1410
  %1412 = vrot.lane.b32.xlu0 %v1402, 32
  %v1413 = vpop.permute.xlu0 %1412
  %1414 = vrot.lane.b32.xlu0 %v1403, 32
  %v1415 = vpop.permute.xlu0 %1414
  %v1420 = vmul.f32 %v1328, %v1409
  %v1421 = vmul.f32 %v1330, %v1411
  %v1422 = vmul.f32 %v1332, %v1413
  %v1423 = vmul.f32 %v1334, %v1415
  %vm1424 = vcmp.gt.s32.totalorder %v280, 4
  %v1425 = vsel %vm1424, 1, 0
  %1426 = vset.pattern.permute.xlu0 0
  %1427 = vperm.xlu0 %1426, %v1425
  %v1428 = vpop.permute.xlu0 %1427
  %vm1429 = vcmp.eq.s32.totalorder %v1428, 1
  %v1434 = vrot.slane %v1396, 4
  %v1435 = vrot.slane %v1397, 3
  %v1436 = vsel %vm478, %v1435, %v1434
  %v1437 = vrot.slane %v1398, 2
  %v1438 = vsel %vm481, %v1437, %v1436
  %v1439 = vrot.slane %v1399, 1
  %v1440 = vsel %vm484, %v1439, %v1438
  %1441 = vrot.lane.b32.xlu0 %v1440, 112
  %v1442 = vpop.permute.xlu0 %1441
  %v1444 = vsel %vm1429, %v1442, %v1203
  %v1449 = vrot.slane %v1420, 4
  %v1450 = vrot.slane %v1421, 3
  %v1451 = vsel %vm478, %v1450, %v1449
  %v1452 = vrot.slane %v1422, 2
  %v1453 = vsel %vm481, %v1452, %v1451
  %v1454 = vrot.slane %v1423, 1
  %v1455 = vsel %vm484, %v1454, %v1453
  %1456 = vrot.lane.b32.xlu0 %v1455, 80
  %v1457 = vpop.permute.xlu0 %1456
  %v1459 = vsel %vm1429, %v1457, %v1217
  %v1460 = vsel %vm1429, %v1457, 0.0
  %1462 = vrot.lane.b32.xlu0 %v1459, 16
  %v1463 = vpop.permute.xlu0 %1462
  %v1465 = vsel %vm508, %v1459, %v1463
  %v1466 = vmul.f32 %v1465, %v279
  %v1468 = vsel %vm28, %v1466, 0
  %1470 = vmatprep.subr.mxu0 0.0
  %1471 = vmatpush1.msra.mxu0 0.0
  %1472 = vmatprep.subr.mxu0 0.0
  %1473 = vmatpush1.msra.mxu0 0.0
  %1474 = vmatprep.subr.mxu0 0.0
  %1475 = vmatpush1.msra.mxu0 0.0
  %1476 = vmatprep.subr.mxu0 0.0
  %1477 = vmatpush1.msra.mxu0 0.0
  %1478 = vmatprep.subr.mxu0 0.0
  %1479 = vmatpush1.msra.mxu0 0.0
  %1480 = vmatprep.subr.mxu0 0.0
  %1481 = vmatpush1.msra.mxu0 0.0
  %1482 = vmatprep.subr.mxu0 0.0
  %1483 = vmatpush1.msra.mxu0 0.0
  %1484 = vmatprep.subr.mxu0 0.0
  %1485 = vmatpush1.msra.mxu0 0.0
  %1486 = vmatprep.subr.mxu0 0.0
  %1487 = vmatpush1.msra.mxu0 0.0
  %1488 = vmatprep.subr.mxu0 0.0
  %1489 = vmatpush1.msra.mxu0 0.0
  %1490 = vmatprep.subr.mxu0 0.0
  %1491 = vmatpush1.msra.mxu0 0.0
  %1492 = vmatprep.subr.mxu0 0.0
  %1493 = vmatpush1.msra.mxu0 0.0
  %1494 = vmatprep.subr.mxu0 0.0
  %1495 = vmatpush1.msra.mxu0 %v284
  %1496 = vmatprep.subr.mxu0 0.0
  %1497 = vmatpush1.msra.mxu0 %v283
  %1498 = vmatprep.subr.mxu0 0.0
  %1499 = vmatpush1.msra.mxu0 %v282
  %1500 = vmatprep.subr.mxu0 0.0
  %1501 = vmatpush1.msra.mxu0 %v281
  %1502 = vmatprep.subr.mxu0 0.0
  %1503 = vmatpush2.msra.mxu0 0.0
  %1504 = vmatprep.subr.mxu0 0.0
  %1505 = vmatpush2.msra.mxu0 0.0
  %1506 = vmatprep.subr.mxu0 0.0
  %1507 = vmatpush2.msra.mxu0 0.0
  %1508 = vmatprep.subr.mxu0 0.0
  %1509 = vmatpush2.msra.mxu0 0.0
  %1510 = vmatprep.subr.mxu0 0.0
  %1511 = vmatpush2.msra.mxu0 0.0
  %1512 = vmatprep.subr.mxu0 0.0
  %1513 = vmatpush2.msra.mxu0 0.0
  %1514 = vmatprep.subr.mxu0 0.0
  %1515 = vmatpush2.msra.mxu0 0.0
  %1516 = vmatprep.subr.mxu0 0.0
  %1517 = vmatpush2.msra.mxu0 0.0
  %1518 = vmatprep.subr.mxu0 0.0
  %1519 = vmatpush2.msra.mxu0 0.0
  %1520 = vmatprep.subr.mxu0 0.0
  %1521 = vmatpush2.msra.mxu0 0.0
  %1522 = vmatprep.subr.mxu0 0.0
  %1523 = vmatpush2.msra.mxu0 0.0
  %1524 = vmatprep.subr.mxu0 0.0
  %1525 = vmatpush2.msra.mxu0 0.0
  %1526 = vmatprep.subr.mxu0 0.0
  %1527 = vmatpush2.msra.mxu0 0.0
  %1528 = vmatprep.subr.mxu0 0.0
  %1529 = vmatpush2.msra.mxu0 0.0
  %1530 = vmatprep.subr.mxu0 0.0
  %1531 = vmatpush2.msra.mxu0 0.0
  %1532 = vmatprep.subr.mxu0 0.0
  %1533 = vmatpush2.msra.mxu0 0.0
  %1534 = vmatprep.mubr.f32.mxu0 0.0
  %1535 = vmatmul.mubr.f32.gmra.mxu0 %v1468
  %v1536 = vpop.f32.mrf.mxu0
  %v1537 = vadd.f32 0.0, %v1536
  %v1538 = vpop.f32.mrf.mxu0
  %1539 = vdwg.mxu0
  %v1541 = vrot.slane %v1537, 3
  %v1542 = vrot.slane %v1537, 4
  %v1543 = vrot.slane %v1537, 5
  %v1544 = vrot.slane %v1537, 6
  %v1549 = vadd.f32 %v266, %v1541
  %v1550 = vadd.f32 %v267, %v1542
  %v1551 = vadd.f32 %v268, %v1543
  %v1552 = vadd.f32 %v269, %v1544
  %v1553 = vxor.u32 %v1549, 2147483648
  %v1554 = vxor.u32 %v1550, 2147483648
  %v1555 = vxor.u32 %v1551, 2147483648
  %v1556 = vxor.u32 %v1552, 2147483648
  %v1557 = vmul.f32 %v1553, 1.442695
  %v1558 = vpow.pop %v1557
  %v1559 = vmul.f32 %v1554, 1.442695
  %v1560 = vpow.pop %v1559
  %v1561 = vmul.f32 %v1555, 1.442695
  %v1562 = vpow.pop %v1561
  %v1563 = vmul.f32 %v1556, 1.442695
  %v1564 = vpow.pop %v1563
  %v1565 = vadd.f32 %v1558, 1.0
  %v1566 = vadd.f32 %v1560, 1.0
  %v1567 = vadd.f32 %v1562, 1.0
  %v1568 = vadd.f32 %v1564, 1.0
  %v1569 = vrcp.pop %v1565
  %v1570 = vmul.f32 1.0, %v1569
  %v1571 = vrcp.pop %v1566
  %v1572 = vmul.f32 1.0, %v1571
  %v1573 = vrcp.pop %v1567
  %v1574 = vmul.f32 1.0, %v1573
  %v1575 = vrcp.pop %v1568
  %v1576 = vmul.f32 1.0, %v1575
  %v1577 = vtanh.pop %v1549
  %v1578 = vtanh.pop %v1550
  %v1579 = vtanh.pop %v1551
  %v1580 = vtanh.pop %v1552
  %v1582 = vrot.slane %v1444, 3
  %v1583 = vrot.slane %v1444, 4
  %v1584 = vrot.slane %v1444, 5
  %v1585 = vrot.slane %v1444, 6
  %1586 = vrot.lane.b32.xlu0 %v1582, 16
  %v1587 = vpop.permute.xlu0 %1586
  %1588 = vrot.lane.b32.xlu0 %v1583, 16
  %v1589 = vpop.permute.xlu0 %1588
  %1590 = vrot.lane.b32.xlu0 %v1584, 16
  %v1591 = vpop.permute.xlu0 %1590
  %1592 = vrot.lane.b32.xlu0 %v1585, 16
  %v1593 = vpop.permute.xlu0 %1592
  %v1598 = vmul.f32 %v1570, %v1587
  %v1599 = vmul.f32 %v1572, %v1589
  %v1600 = vmul.f32 %v1574, %v1591
  %v1601 = vmul.f32 %v1576, %v1593
  %1606 = vrot.lane.b32.xlu0 %v1577, 96
  %v1607 = vpop.permute.xlu0 %1606
  %1608 = vrot.lane.b32.xlu0 %v1578, 96
  %v1609 = vpop.permute.xlu0 %1608
  %1610 = vrot.lane.b32.xlu0 %v1579, 96
  %v1611 = vpop.permute.xlu0 %1610
  %1612 = vrot.lane.b32.xlu0 %v1580, 96
  %v1613 = vpop.permute.xlu0 %1612
  %v1618 = vmul.f32 %v1570, %v1607
  %v1619 = vmul.f32 %v1572, %v1609
  %v1620 = vmul.f32 %v1574, %v1611
  %v1621 = vmul.f32 %v1576, %v1613
  %1626 = vrot.lane.b32.xlu0 %v1618, 16
  %v1627 = vpop.permute.xlu0 %1626
  %1628 = vrot.lane.b32.xlu0 %v1619, 16
  %v1629 = vpop.permute.xlu0 %1628
  %1630 = vrot.lane.b32.xlu0 %v1620, 16
  %v1631 = vpop.permute.xlu0 %1630
  %1632 = vrot.lane.b32.xlu0 %v1621, 16
  %v1633 = vpop.permute.xlu0 %1632
  %v1638 = vadd.f32 %v1598, %v1627
  %v1639 = vadd.f32 %v1599, %v1629
  %v1640 = vadd.f32 %v1600, %v1631
  %v1641 = vadd.f32 %v1601, %v1633
  %v1642 = vtanh.pop %v1638
  %v1643 = vtanh.pop %v1639
  %v1644 = vtanh.pop %v1640
  %v1645 = vtanh.pop %v1641
  %1650 = vrot.lane.b32.xlu0 %v1642, 32
  %v1651 = vpop.permute.xlu0 %1650
  %1652 = vrot.lane.b32.xlu0 %v1643, 32
  %v1653 = vpop.permute.xlu0 %1652
  %1654 = vrot.lane.b32.xlu0 %v1644, 32
  %v1655 = vpop.permute.xlu0 %1654
  %1656 = vrot.lane.b32.xlu0 %v1645, 32
  %v1657 = vpop.permute.xlu0 %1656
  %v1662 = vmul.f32 %v1570, %v1651
  %v1663 = vmul.f32 %v1572, %v1653
  %v1664 = vmul.f32 %v1574, %v1655
  %v1665 = vmul.f32 %v1576, %v1657
  %vm1666 = vcmp.gt.s32.totalorder %v280, 5
  %v1667 = vsel %vm1666, 1, 0
  %1668 = vset.pattern.permute.xlu0 0
  %1669 = vperm.xlu0 %1668, %v1667
  %v1670 = vpop.permute.xlu0 %1669
  %vm1671 = vcmp.eq.s32.totalorder %v1670, 1
  %v1676 = vrot.slane %v1638, 5
  %v1677 = vrot.slane %v1639, 4
  %v1678 = vsel %vm478, %v1677, %v1676
  %v1679 = vrot.slane %v1640, 3
  %v1680 = vsel %vm481, %v1679, %v1678
  %v1681 = vrot.slane %v1641, 2
  %v1682 = vsel %vm484, %v1681, %v1680
  %1683 = vrot.lane.b32.xlu0 %v1682, 112
  %v1684 = vpop.permute.xlu0 %1683
  %v1686 = vsel %vm1671, %v1684, %v1444
  %v1691 = vrot.slane %v1662, 5
  %v1692 = vrot.slane %v1663, 4
  %v1693 = vsel %vm478, %v1692, %v1691
  %v1694 = vrot.slane %v1664, 3
  %v1695 = vsel %vm481, %v1694, %v1693
  %v1696 = vrot.slane %v1665, 2
  %v1697 = vsel %vm484, %v1696, %v1695
  %1698 = vrot.lane.b32.xlu0 %v1697, 80
  %v1699 = vpop.permute.xlu0 %1698
  %v1701 = vsel %vm1671, %v1699, %v1459
  %v1702 = vsel %vm1671, %v1699, 0.0
  %1704 = vrot.lane.b32.xlu0 %v1701, 16
  %v1705 = vpop.permute.xlu0 %1704
  %v1707 = vsel %vm508, %v1701, %v1705
  %v1708 = vmul.f32 %v1707, %v279
  %v1710 = vsel %vm28, %v1708, 0
  %1712 = vmatprep.subr.mxu0 0.0
  %1713 = vmatpush1.msra.mxu0 0.0
  %1714 = vmatprep.subr.mxu0 0.0
  %1715 = vmatpush1.msra.mxu0 0.0
  %1716 = vmatprep.subr.mxu0 0.0
  %1717 = vmatpush1.msra.mxu0 0.0
  %1718 = vmatprep.subr.mxu0 0.0
  %1719 = vmatpush1.msra.mxu0 0.0
  %1720 = vmatprep.subr.mxu0 0.0
  %1721 = vmatpush1.msra.mxu0 0.0
  %1722 = vmatprep.subr.mxu0 0.0
  %1723 = vmatpush1.msra.mxu0 0.0
  %1724 = vmatprep.subr.mxu0 0.0
  %1725 = vmatpush1.msra.mxu0 0.0
  %1726 = vmatprep.subr.mxu0 0.0
  %1727 = vmatpush1.msra.mxu0 0.0
  %1728 = vmatprep.subr.mxu0 0.0
  %1729 = vmatpush1.msra.mxu0 0.0
  %1730 = vmatprep.subr.mxu0 0.0
  %1731 = vmatpush1.msra.mxu0 0.0
  %1732 = vmatprep.subr.mxu0 0.0
  %1733 = vmatpush1.msra.mxu0 0.0
  %1734 = vmatprep.subr.mxu0 0.0
  %1735 = vmatpush1.msra.mxu0 0.0
  %1736 = vmatprep.subr.mxu0 0.0
  %1737 = vmatpush1.msra.mxu0 %v284
  %1738 = vmatprep.subr.mxu0 0.0
  %1739 = vmatpush1.msra.mxu0 %v283
  %1740 = vmatprep.subr.mxu0 0.0
  %1741 = vmatpush1.msra.mxu0 %v282
  %1742 = vmatprep.subr.mxu0 0.0
  %1743 = vmatpush1.msra.mxu0 %v281
  %1744 = vmatprep.subr.mxu0 0.0
  %1745 = vmatpush2.msra.mxu0 0.0
  %1746 = vmatprep.subr.mxu0 0.0
  %1747 = vmatpush2.msra.mxu0 0.0
  %1748 = vmatprep.subr.mxu0 0.0
  %1749 = vmatpush2.msra.mxu0 0.0
  %1750 = vmatprep.subr.mxu0 0.0
  %1751 = vmatpush2.msra.mxu0 0.0
  %1752 = vmatprep.subr.mxu0 0.0
  %1753 = vmatpush2.msra.mxu0 0.0
  %1754 = vmatprep.subr.mxu0 0.0
  %1755 = vmatpush2.msra.mxu0 0.0
  %1756 = vmatprep.subr.mxu0 0.0
  %1757 = vmatpush2.msra.mxu0 0.0
  %1758 = vmatprep.subr.mxu0 0.0
  %1759 = vmatpush2.msra.mxu0 0.0
  %1760 = vmatprep.subr.mxu0 0.0
  %1761 = vmatpush2.msra.mxu0 0.0
  %1762 = vmatprep.subr.mxu0 0.0
  %1763 = vmatpush2.msra.mxu0 0.0
  %1764 = vmatprep.subr.mxu0 0.0
  %1765 = vmatpush2.msra.mxu0 0.0
  %1766 = vmatprep.subr.mxu0 0.0
  %1767 = vmatpush2.msra.mxu0 0.0
  %1768 = vmatprep.subr.mxu0 0.0
  %1769 = vmatpush2.msra.mxu0 0.0
  %1770 = vmatprep.subr.mxu0 0.0
  %1771 = vmatpush2.msra.mxu0 0.0
  %1772 = vmatprep.subr.mxu0 0.0
  %1773 = vmatpush2.msra.mxu0 0.0
  %1774 = vmatprep.subr.mxu0 0.0
  %1775 = vmatpush2.msra.mxu0 0.0
  %1776 = vmatprep.mubr.f32.mxu0 0.0
  %1777 = vmatmul.mubr.f32.gmra.mxu0 %v1710
  %v1778 = vpop.f32.mrf.mxu0
  %v1779 = vadd.f32 0.0, %v1778
  %v1780 = vpop.f32.mrf.mxu0
  %1781 = vdwg.mxu0
  %v1783 = vrot.slane %v1779, 2
  %v1784 = vrot.slane %v1779, 3
  %v1785 = vrot.slane %v1779, 4
  %v1786 = vrot.slane %v1779, 5
  %v1791 = vadd.f32 %v266, %v1783
  %v1792 = vadd.f32 %v267, %v1784
  %v1793 = vadd.f32 %v268, %v1785
  %v1794 = vadd.f32 %v269, %v1786
  %v1795 = vxor.u32 %v1791, 2147483648
  %v1796 = vxor.u32 %v1792, 2147483648
  %v1797 = vxor.u32 %v1793, 2147483648
  %v1798 = vxor.u32 %v1794, 2147483648
  %v1799 = vmul.f32 %v1795, 1.442695
  %v1800 = vpow.pop %v1799
  %v1801 = vmul.f32 %v1796, 1.442695
  %v1802 = vpow.pop %v1801
  %v1803 = vmul.f32 %v1797, 1.442695
  %v1804 = vpow.pop %v1803
  %v1805 = vmul.f32 %v1798, 1.442695
  %v1806 = vpow.pop %v1805
  %v1807 = vadd.f32 %v1800, 1.0
  %v1808 = vadd.f32 %v1802, 1.0
  %v1809 = vadd.f32 %v1804, 1.0
  %v1810 = vadd.f32 %v1806, 1.0
  %v1811 = vrcp.pop %v1807
  %v1812 = vmul.f32 1.0, %v1811
  %v1813 = vrcp.pop %v1808
  %v1814 = vmul.f32 1.0, %v1813
  %v1815 = vrcp.pop %v1809
  %v1816 = vmul.f32 1.0, %v1815
  %v1817 = vrcp.pop %v1810
  %v1818 = vmul.f32 1.0, %v1817
  %v1819 = vtanh.pop %v1791
  %v1820 = vtanh.pop %v1792
  %v1821 = vtanh.pop %v1793
  %v1822 = vtanh.pop %v1794
  %v1824 = vrot.slane %v1686, 2
  %v1825 = vrot.slane %v1686, 3
  %v1826 = vrot.slane %v1686, 4
  %v1827 = vrot.slane %v1686, 5
  %1828 = vrot.lane.b32.xlu0 %v1824, 16
  %v1829 = vpop.permute.xlu0 %1828
  %1830 = vrot.lane.b32.xlu0 %v1825, 16
  %v1831 = vpop.permute.xlu0 %1830
  %1832 = vrot.lane.b32.xlu0 %v1826, 16
  %v1833 = vpop.permute.xlu0 %1832
  %1834 = vrot.lane.b32.xlu0 %v1827, 16
  %v1835 = vpop.permute.xlu0 %1834
  %v1840 = vmul.f32 %v1812, %v1829
  %v1841 = vmul.f32 %v1814, %v1831
  %v1842 = vmul.f32 %v1816, %v1833
  %v1843 = vmul.f32 %v1818, %v1835
  %1848 = vrot.lane.b32.xlu0 %v1819, 96
  %v1849 = vpop.permute.xlu0 %1848
  %1850 = vrot.lane.b32.xlu0 %v1820, 96
  %v1851 = vpop.permute.xlu0 %1850
  %1852 = vrot.lane.b32.xlu0 %v1821, 96
  %v1853 = vpop.permute.xlu0 %1852
  %1854 = vrot.lane.b32.xlu0 %v1822, 96
  %v1855 = vpop.permute.xlu0 %1854
  %v1860 = vmul.f32 %v1812, %v1849
  %v1861 = vmul.f32 %v1814, %v1851
  %v1862 = vmul.f32 %v1816, %v1853
  %v1863 = vmul.f32 %v1818, %v1855
  %1868 = vrot.lane.b32.xlu0 %v1860, 16
  %v1869 = vpop.permute.xlu0 %1868
  %1870 = vrot.lane.b32.xlu0 %v1861, 16
  %v1871 = vpop.permute.xlu0 %1870
  %1872 = vrot.lane.b32.xlu0 %v1862, 16
  %v1873 = vpop.permute.xlu0 %1872
  %1874 = vrot.lane.b32.xlu0 %v1863, 16
  %v1875 = vpop.permute.xlu0 %1874
  %v1880 = vadd.f32 %v1840, %v1869
  %v1881 = vadd.f32 %v1841, %v1871
  %v1882 = vadd.f32 %v1842, %v1873
  %v1883 = vadd.f32 %v1843, %v1875
  %v1884 = vtanh.pop %v1880
  %v1885 = vtanh.pop %v1881
  %v1886 = vtanh.pop %v1882
  %v1887 = vtanh.pop %v1883
  %1892 = vrot.lane.b32.xlu0 %v1884, 32
  %v1893 = vpop.permute.xlu0 %1892
  %1894 = vrot.lane.b32.xlu0 %v1885, 32
  %v1895 = vpop.permute.xlu0 %1894
  %1896 = vrot.lane.b32.xlu0 %v1886, 32
  %v1897 = vpop.permute.xlu0 %1896
  %1898 = vrot.lane.b32.xlu0 %v1887, 32
  %v1899 = vpop.permute.xlu0 %1898
  %v1904 = vmul.f32 %v1812, %v1893
  %v1905 = vmul.f32 %v1814, %v1895
  %v1906 = vmul.f32 %v1816, %v1897
  %v1907 = vmul.f32 %v1818, %v1899
  %vm1908 = vcmp.gt.s32.totalorder %v280, 6
  %v1909 = vsel %vm1908, 1, 0
  %1910 = vset.pattern.permute.xlu0 0
  %1911 = vperm.xlu0 %1910, %v1909
  %v1912 = vpop.permute.xlu0 %1911
  %vm1913 = vcmp.eq.s32.totalorder %v1912, 1
  %v1918 = vrot.slane %v1880, 6
  %v1919 = vrot.slane %v1881, 5
  %v1920 = vsel %vm478, %v1919, %v1918
  %v1921 = vrot.slane %v1882, 4
  %v1922 = vsel %vm481, %v1921, %v1920
  %v1923 = vrot.slane %v1883, 3
  %v1924 = vsel %vm484, %v1923, %v1922
  %1925 = vrot.lane.b32.xlu0 %v1924, 112
  %v1926 = vpop.permute.xlu0 %1925
  %v1928 = vsel %vm1913, %v1926, %v1686
  %v1933 = vrot.slane %v1904, 6
  %v1934 = vrot.slane %v1905, 5
  %v1935 = vsel %vm478, %v1934, %v1933
  %v1936 = vrot.slane %v1906, 4
  %v1937 = vsel %vm481, %v1936, %v1935
  %v1938 = vrot.slane %v1907, 3
  %v1939 = vsel %vm484, %v1938, %v1937
  %1940 = vrot.lane.b32.xlu0 %v1939, 80
  %v1941 = vpop.permute.xlu0 %1940
  %v1943 = vsel %vm1913, %v1941, %v1701
  %v1944 = vsel %vm1913, %v1941, 0.0
  %1946 = vrot.lane.b32.xlu0 %v1943, 16
  %v1947 = vpop.permute.xlu0 %1946
  %v1949 = vsel %vm508, %v1943, %v1947
  %v1950 = vmul.f32 %v1949, %v279
  %v1952 = vsel %vm28, %v1950, 0
  %1954 = vmatprep.subr.mxu0 0.0
  %1955 = vmatpush1.msra.mxu0 0.0
  %1956 = vmatprep.subr.mxu0 0.0
  %1957 = vmatpush1.msra.mxu0 0.0
  %1958 = vmatprep.subr.mxu0 0.0
  %1959 = vmatpush1.msra.mxu0 0.0
  %1960 = vmatprep.subr.mxu0 0.0
  %1961 = vmatpush1.msra.mxu0 0.0
  %1962 = vmatprep.subr.mxu0 0.0
  %1963 = vmatpush1.msra.mxu0 0.0
  %1964 = vmatprep.subr.mxu0 0.0
  %1965 = vmatpush1.msra.mxu0 0.0
  %1966 = vmatprep.subr.mxu0 0.0
  %1967 = vmatpush1.msra.mxu0 0.0
  %1968 = vmatprep.subr.mxu0 0.0
  %1969 = vmatpush1.msra.mxu0 0.0
  %1970 = vmatprep.subr.mxu0 0.0
  %1971 = vmatpush1.msra.mxu0 0.0
  %1972 = vmatprep.subr.mxu0 0.0
  %1973 = vmatpush1.msra.mxu0 0.0
  %1974 = vmatprep.subr.mxu0 0.0
  %1975 = vmatpush1.msra.mxu0 0.0
  %1976 = vmatprep.subr.mxu0 0.0
  %1977 = vmatpush1.msra.mxu0 0.0
  %1978 = vmatprep.subr.mxu0 0.0
  %1979 = vmatpush1.msra.mxu0 %v284
  %1980 = vmatprep.subr.mxu0 0.0
  %1981 = vmatpush1.msra.mxu0 %v283
  %1982 = vmatprep.subr.mxu0 0.0
  %1983 = vmatpush1.msra.mxu0 %v282
  %1984 = vmatprep.subr.mxu0 0.0
  %1985 = vmatpush1.msra.mxu0 %v281
  %1986 = vmatprep.subr.mxu0 0.0
  %1987 = vmatpush2.msra.mxu0 0.0
  %1988 = vmatprep.subr.mxu0 0.0
  %1989 = vmatpush2.msra.mxu0 0.0
  %1990 = vmatprep.subr.mxu0 0.0
  %1991 = vmatpush2.msra.mxu0 0.0
  %1992 = vmatprep.subr.mxu0 0.0
  %1993 = vmatpush2.msra.mxu0 0.0
  %1994 = vmatprep.subr.mxu0 0.0
  %1995 = vmatpush2.msra.mxu0 0.0
  %1996 = vmatprep.subr.mxu0 0.0
  %1997 = vmatpush2.msra.mxu0 0.0
  %1998 = vmatprep.subr.mxu0 0.0
  %1999 = vmatpush2.msra.mxu0 0.0
  %2000 = vmatprep.subr.mxu0 0.0
  %2001 = vmatpush2.msra.mxu0 0.0
  %2002 = vmatprep.subr.mxu0 0.0
  %2003 = vmatpush2.msra.mxu0 0.0
  %2004 = vmatprep.subr.mxu0 0.0
  %2005 = vmatpush2.msra.mxu0 0.0
  %2006 = vmatprep.subr.mxu0 0.0
  %2007 = vmatpush2.msra.mxu0 0.0
  %2008 = vmatprep.subr.mxu0 0.0
  %2009 = vmatpush2.msra.mxu0 0.0
  %2010 = vmatprep.subr.mxu0 0.0
  %2011 = vmatpush2.msra.mxu0 0.0
  %2012 = vmatprep.subr.mxu0 0.0
  %2013 = vmatpush2.msra.mxu0 0.0
  %2014 = vmatprep.subr.mxu0 0.0
  %2015 = vmatpush2.msra.mxu0 0.0
  %2016 = vmatprep.subr.mxu0 0.0
  %2017 = vmatpush2.msra.mxu0 0.0
  %2018 = vmatprep.mubr.f32.mxu0 0.0
  %2019 = vmatmul.mubr.f32.gmra.mxu0 %v1952
  %v2020 = vpop.f32.mrf.mxu0
  %v2021 = vadd.f32 0.0, %v2020
  %v2022 = vpop.f32.mrf.mxu0
  %2023 = vdwg.mxu0
  %v2025 = vrot.slane %v2021, 1
  %v2026 = vrot.slane %v2021, 2
  %v2027 = vrot.slane %v2021, 3
  %v2028 = vrot.slane %v2021, 4
  %v2033 = vadd.f32 %v266, %v2025
  %v2034 = vadd.f32 %v267, %v2026
  %v2035 = vadd.f32 %v268, %v2027
  %v2036 = vadd.f32 %v269, %v2028
  %v2037 = vxor.u32 %v2033, 2147483648
  %v2038 = vxor.u32 %v2034, 2147483648
  %v2039 = vxor.u32 %v2035, 2147483648
  %v2040 = vxor.u32 %v2036, 2147483648
  %v2041 = vmul.f32 %v2037, 1.442695
  %v2042 = vpow.pop %v2041
  %v2043 = vmul.f32 %v2038, 1.442695
  %v2044 = vpow.pop %v2043
  %v2045 = vmul.f32 %v2039, 1.442695
  %v2046 = vpow.pop %v2045
  %v2047 = vmul.f32 %v2040, 1.442695
  %v2048 = vpow.pop %v2047
  %v2049 = vadd.f32 %v2042, 1.0
  %v2050 = vadd.f32 %v2044, 1.0
  %v2051 = vadd.f32 %v2046, 1.0
  %v2052 = vadd.f32 %v2048, 1.0
  %v2053 = vrcp.pop %v2049
  %v2054 = vmul.f32 1.0, %v2053
  %v2055 = vrcp.pop %v2050
  %v2056 = vmul.f32 1.0, %v2055
  %v2057 = vrcp.pop %v2051
  %v2058 = vmul.f32 1.0, %v2057
  %v2059 = vrcp.pop %v2052
  %v2060 = vmul.f32 1.0, %v2059
  %v2061 = vtanh.pop %v2033
  %v2062 = vtanh.pop %v2034
  %v2063 = vtanh.pop %v2035
  %v2064 = vtanh.pop %v2036
  %v2066 = vrot.slane %v1928, 1
  %v2067 = vrot.slane %v1928, 2
  %v2068 = vrot.slane %v1928, 3
  %v2069 = vrot.slane %v1928, 4
  %2070 = vrot.lane.b32.xlu0 %v2066, 16
  %v2071 = vpop.permute.xlu0 %2070
  %2072 = vrot.lane.b32.xlu0 %v2067, 16
  %v2073 = vpop.permute.xlu0 %2072
  %2074 = vrot.lane.b32.xlu0 %v2068, 16
  %v2075 = vpop.permute.xlu0 %2074
  %2076 = vrot.lane.b32.xlu0 %v2069, 16
  %v2077 = vpop.permute.xlu0 %2076
  %v2082 = vmul.f32 %v2054, %v2071
  %v2083 = vmul.f32 %v2056, %v2073
  %v2084 = vmul.f32 %v2058, %v2075
  %v2085 = vmul.f32 %v2060, %v2077
  %2090 = vrot.lane.b32.xlu0 %v2061, 96
  %v2091 = vpop.permute.xlu0 %2090
  %2092 = vrot.lane.b32.xlu0 %v2062, 96
  %v2093 = vpop.permute.xlu0 %2092
  %2094 = vrot.lane.b32.xlu0 %v2063, 96
  %v2095 = vpop.permute.xlu0 %2094
  %2096 = vrot.lane.b32.xlu0 %v2064, 96
  %v2097 = vpop.permute.xlu0 %2096
  %v2102 = vmul.f32 %v2054, %v2091
  %v2103 = vmul.f32 %v2056, %v2093
  %v2104 = vmul.f32 %v2058, %v2095
  %v2105 = vmul.f32 %v2060, %v2097
  %2110 = vrot.lane.b32.xlu0 %v2102, 16
  %v2111 = vpop.permute.xlu0 %2110
  %2112 = vrot.lane.b32.xlu0 %v2103, 16
  %v2113 = vpop.permute.xlu0 %2112
  %2114 = vrot.lane.b32.xlu0 %v2104, 16
  %v2115 = vpop.permute.xlu0 %2114
  %2116 = vrot.lane.b32.xlu0 %v2105, 16
  %v2117 = vpop.permute.xlu0 %2116
  %v2122 = vadd.f32 %v2082, %v2111
  %v2123 = vadd.f32 %v2083, %v2113
  %v2124 = vadd.f32 %v2084, %v2115
  %v2125 = vadd.f32 %v2085, %v2117
  %v2126 = vtanh.pop %v2122
  %v2127 = vtanh.pop %v2123
  %v2128 = vtanh.pop %v2124
  %v2129 = vtanh.pop %v2125
  %2134 = vrot.lane.b32.xlu0 %v2126, 32
  %v2135 = vpop.permute.xlu0 %2134
  %2136 = vrot.lane.b32.xlu0 %v2127, 32
  %v2137 = vpop.permute.xlu0 %2136
  %2138 = vrot.lane.b32.xlu0 %v2128, 32
  %v2139 = vpop.permute.xlu0 %2138
  %2140 = vrot.lane.b32.xlu0 %v2129, 32
  %v2141 = vpop.permute.xlu0 %2140
  %v2146 = vmul.f32 %v2054, %v2135
  %v2147 = vmul.f32 %v2056, %v2137
  %v2148 = vmul.f32 %v2058, %v2139
  %v2149 = vmul.f32 %v2060, %v2141
  %vm2150 = vcmp.gt.s32.totalorder %v280, 7
  %v2151 = vsel %vm2150, 1, 0
  %2152 = vset.pattern.permute.xlu0 0
  %2153 = vperm.xlu0 %2152, %v2151
  %v2154 = vpop.permute.xlu0 %2153
  %vm2155 = vcmp.eq.s32.totalorder %v2154, 1
  %v2160 = vrot.slane %v2146, 7
  %v2161 = vrot.slane %v2147, 6
  %v2162 = vsel %vm478, %v2161, %v2160
  %v2163 = vrot.slane %v2148, 5
  %v2164 = vsel %vm481, %v2163, %v2162
  %v2165 = vrot.slane %v2149, 4
  %v2166 = vsel %vm484, %v2165, %v2164
  %2167 = vrot.lane.b32.xlu0 %v2166, 80
  %v2168 = vpop.permute.xlu0 %2167
  %v2170 = vsel %vm2155, %v2168, 0.0
  %2172 = vrot.lane.b32.xlu0 %v742, 16
  %v2173 = vpop.permute.xlu0 %2172
  %2176 = vrot.lane.b32.xlu0 %v980, 32
  %v2177 = vpop.permute.xlu0 %2176
  %2180 = vrot.lane.b32.xlu0 %v1218, 48
  %v2181 = vpop.permute.xlu0 %2180
  %2184 = vrot.lane.b32.xlu0 %v1460, 64
  %v2185 = vpop.permute.xlu0 %2184
  %2188 = vrot.lane.b32.xlu0 %v1702, 80
  %v2189 = vpop.permute.xlu0 %2188
  %2192 = vrot.lane.b32.xlu0 %v1944, 96
  %v2193 = vpop.permute.xlu0 %2192
  %2196 = vrot.lane.b32.xlu0 %v2170, 112
  %v2197 = vpop.permute.xlu0 %2196
  %v2199 = vsel %vm508, %v503, %v2173
  %v2200 = vsel %vm28, %v2199, %v2177
  %vm2201 = vcmask 392192
  %v2202 = vsel %vm2201, %v2200, %v2181
  %vm2203 = vcmask 523264
  %v2204 = vsel %vm2203, %v2202, %v2185
  %vm2205 = vcmask 654336
  %v2206 = vsel %vm2205, %v2204, %v2189
  %vm2207 = vcmask 785408
  %v2208 = vsel %vm2207, %v2206, %v2193
  %vm2209 = vcmask 916480
  %v2210 = vsel %vm2209, %v2208, %v2197
  %2211 = vst [vmem:[%s5] sm:$0xf] %v2210
  // Predicated region
  $region22: #{mgan_forward.3} parent=0 // pred_check
    _
  $region23: #{mgan_forward.3} parent=0 // pred_check_branch
    %2213 = sbr.rel (0) target = $region25
  $region24: #{mgan_forward.3} parent=0 // pred_region
    _
  $region25: #{mgan_forward.3} parent=0 // pred_fallthru
    _
  // Predicated region
  $region26: #{mgan_forward.3} parent=0 // pred_check
    _
  $region27: #{mgan_forward.3} parent=0 // pred_check_branch
    %2215 = sbr.rel (0) target = $region29
  $region28: #{mgan_forward.3} parent=0 // pred_region
    _
  $region29: #{mgan_forward.3} parent=0 // pred_fallthru
    _

// kernel: mgan_forward.5
$region0: #{mgan_forward.5}
  #allocation0 [shape = 'u32[]', space=smem, size = 0x4, offset = 0x4, fixed_abs, tag = 'smem constant byte address 0x4 - core index']
  #allocation1 [shape = 'u32[144,128]{1,0:T(1,128)}', space=vmem, size = 0x12000, scoped, tag = 'internal scratch']
  %s0 = inlined_call_operand.vmem [shape: f32[2,8,32], index: 0, kind: input, shape index: {}]
  %s1 = inlined_call_operand.vmem [shape: f32[2,4,32], index: 1, kind: input, shape index: {}]
  %s2 = inlined_call_operand.vmem [shape: f32[2,8,1], index: 2, kind: input, shape index: {}]
  %s3 = inlined_call_operand.vmem [shape: f32[2,1], index: 3, kind: input, shape index: {}]
  %s4 = inlined_call_operand.vmem [shape: f32[2,1], index: 4, kind: input, shape index: {}]
  %s5 = inlined_call_operand.vmem [shape: f32[3,32], index: 5, kind: input, shape index: {}]
  %s6 = inlined_call_operand.vmem [shape: f32[32,32], index: 6, kind: input, shape index: {}]
  %s7 = inlined_call_operand.vmem [shape: f32[32,32], index: 7, kind: input, shape index: {}]
  %s8 = inlined_call_operand.vmem [shape: f32[128,128], index: 8, kind: input, shape index: {}]
  %s9 = inlined_call_operand.vmem [shape: f32[1,128], index: 9, kind: input, shape index: {}]
  %s10 = inlined_call_operand.hbm [shape: f32[2,128], index: 10, kind: output, shape index: {}]
  %s11 = sld [smem:[#allocation0]]
  $region50: #{mgan_forward.5} parent=0
    _
  %s13 = ssub.s32 1, %s11
  %s14 = scalar_select 0, %s13, %s11
  $region1: #{mgan_forward.5} parent=0
    #allocation2 [shape = 'u8[1024]{0}', space=vmem, size = 0x400, scoped, tag = 'output window, operand 0, single buffered']
    #allocation3 [shape = 's32[1]{0}', space=sflag, size = 0x4, scoped, tag = 'scoped memory for mgan_forward.5']
    %15 = vsyncpa [#allocation3], 0
    // Predicated region
    $region2: #{mgan_forward.5} parent=1 // pred_check
      _
    $region3: #{mgan_forward.5} parent=1 // pred_check_branch
      %17 = sbr.rel (0) target = $region5
    $region4: #{mgan_forward.5} parent=1 // pred_region
      _
    $region5: #{mgan_forward.5} parent=1 // pred_fallthru
      _
    // Predicated region
    $region6: #{mgan_forward.5} parent=1 // pred_check
      _
    $region7: #{mgan_forward.5} parent=1 // pred_check_branch
      %19 = sbr.rel (0) target = $region9
    $region8: #{mgan_forward.5} parent=1 // pred_region
      _
    $region9: #{mgan_forward.5} parent=1 // pred_fallthru
      _
    // Predicated region
    $region10: #{mgan_forward.5} parent=1 // pred_check
      _
    $region11: #{mgan_forward.5} parent=1 // pred_check_branch
      %21 = sbr.rel (0) target = $region13
    $region12: #{mgan_forward.5} parent=1 // pred_region
      _
    $region13: #{mgan_forward.5} parent=1 // pred_fallthru
      _
    // Predicated region
    $region14: #{mgan_forward.5} parent=1 // pred_check
      _
    $region15: #{mgan_forward.5} parent=1 // pred_check_branch
      %23 = sbr.rel (0) target = $region17
    $region16: #{mgan_forward.5} parent=1 // pred_region
      _
    $region17: #{mgan_forward.5} parent=1 // pred_fallthru
      _
    // Predicated region
    $region18: #{mgan_forward.5} parent=1 // pred_check
      _
    $region19: #{mgan_forward.5} parent=1 // pred_check_branch
      %25 = sbr.rel (0) target = $region21
    $region20: #{mgan_forward.5} parent=1 // pred_region
      _
    $region21: #{mgan_forward.5} parent=1 // pred_fallthru
      _
    // Predicated region
    $region22: #{mgan_forward.5} parent=1 // pred_check
      _
    $region23: #{mgan_forward.5} parent=1 // pred_check_branch
      %27 = sbr.rel (0) target = $region25
    $region24: #{mgan_forward.5} parent=1 // pred_region
      _
    $region25: #{mgan_forward.5} parent=1 // pred_fallthru
      _
    // Predicated region
    $region26: #{mgan_forward.5} parent=1 // pred_check
      _
    $region27: #{mgan_forward.5} parent=1 // pred_check_branch
      %29 = sbr.rel (0) target = $region29
    $region28: #{mgan_forward.5} parent=1 // pred_region
      _
    $region29: #{mgan_forward.5} parent=1 // pred_fallthru
      _
    // Predicated region
    $region30: #{mgan_forward.5} parent=1 // pred_check
      _
    $region31: #{mgan_forward.5} parent=1 // pred_check_branch
      %31 = sbr.rel (0) target = $region33
    $region32: #{mgan_forward.5} parent=1 // pred_region
      _
    $region33: #{mgan_forward.5} parent=1 // pred_fallthru
      _
    // Predicated region
    $region34: #{mgan_forward.5} parent=1 // pred_check
      _
    $region35: #{mgan_forward.5} parent=1 // pred_check_branch
      %33 = sbr.rel (0) target = $region37
    $region36: #{mgan_forward.5} parent=1 // pred_region
      _
    $region37: #{mgan_forward.5} parent=1 // pred_fallthru
      _
    // Predicated region
    $region38: #{mgan_forward.5} parent=1 // pred_check
      _
    $region39: #{mgan_forward.5} parent=1 // pred_check_branch
      %35 = sbr.rel (0) target = $region41
    $region40: #{mgan_forward.5} parent=1 // pred_region
      _
    $region41: #{mgan_forward.5} parent=1 // pred_fallthru
      _
    %v36 = vld [vmem:[%s0] sm:$0xff]
    %v37 = vld [vmem:[%s0 + $0x8] sm:$0xff]
    %v38 = vld [vmem:[%s2] sm:$0xff]
    %v39 = vld [vmem:[%s2 + $0x8] sm:$0xff]
    %41 = vset.pattern.permute.xlu0 0
    %42 = vperm.xlu0 %41, %v38
    %v43 = vpop.permute.xlu0 %42
    %46 = vset.pattern.permute.xlu0 0
    %47 = vperm.xlu0 %46, %v39
    %v48 = vpop.permute.xlu0 %47
    %v50 = vmul.f32 %v36, %v43
    %v51 = vmul.f32 %v37, %v48
    %v52 = vld [vmem:[%s1] sm:$0xf]
    %v53 = vld [vmem:[%s1 + $0x4] sm:$0xf]
    %v54 = vld [vmem:[%s3] sm:$0x3]
    %v55 = vrcp.pop %v54
    %v56 = vld [vmem:[%s4] sm:$0x3]
    %v57 = vrcp.pop %v56
    %vm58 = vcmask 261120
    %v59 = vsel %vm58, %v50, 0.0
    %v60 = vrot.slane %v59, 4
    %v61 = vadd.f32 %v59, %v60
    %v62 = vrot.slane %v61, 2
    %v63 = vadd.f32 %v61, %v62
    %v64 = vrot.slane %v63, 1
    %v65 = vadd.f32 %v63, %v64
    %v66 = vsel %vm58, %v51, 0.0
    %v67 = vrot.slane %v66, 4
    %v68 = vadd.f32 %v66, %v67
    %v69 = vrot.slane %v68, 2
    %v70 = vadd.f32 %v68, %v69
    %v71 = vrot.slane %v70, 1
    %v72 = vadd.f32 %v70, %v71
    %74 = vset.pattern.permute.xlu0 0
    %75 = vperm.xlu0 %74, %v55
    %v76 = vpop.permute.xlu0 %75
    %v77 = vrot.slane %v76, 1
    %v80 = vmul.f32 %v65, %v76
    %v81 = vmul.f32 %v72, %v77
    %vm82 = vcmask 257024
    %v83 = vsel %vm82, %v52, 0.0
    %v84 = vrot.slane %v83, 4
    %v85 = vadd.f32 %v83, %v84
    %v86 = vrot.slane %v85, 2
    %v87 = vadd.f32 %v85, %v86
    %v88 = vrot.slane %v87, 1
    %v89 = vadd.f32 %v87, %v88
    %v90 = vsel %vm82, %v53, 0.0
    %v91 = vrot.slane %v90, 4
    %v92 = vadd.f32 %v90, %v91
    %v93 = vrot.slane %v92, 2
    %v94 = vadd.f32 %v92, %v93
    %v95 = vrot.slane %v94, 1
    %v96 = vadd.f32 %v94, %v95
    %98 = vset.pattern.permute.xlu0 0
    %99 = vperm.xlu0 %98, %v57
    %v100 = vpop.permute.xlu0 %99
    %v101 = vrot.slane %v100, 1
    %v104 = vmul.f32 %v89, %v100
    %v105 = vmul.f32 %v96, %v101
    %v106 = vld [vmem:[%s5] sm:$0x1]
    %v107 = vld [vmem:[%s5 + $0x1] sm:$0x1]
    %v108 = vld [vmem:[%s5 + $0x2] sm:$0x1]
    %v109 = vlaneseq
    %v110 = vshrl.u32 %v109, 7
    %v111 = vsub.s32 0, %v110
    %v112 = vrot.slane %v106, %v111
    %v113 = vmul.f32 %v50, %v112
    %v114 = vmul.f32 %v51, %v112
    %v115 = vsel %vm58, %v113, 0.0
    %116 = vadd.xlane.f32.xlu0 %v115
    %v117 = vpop.xlane.xlu0 %116
    %v118 = vsel %vm58, %v114, 0.0
    %119 = vadd.xlane.f32.xlu0 %v118
    %v120 = vpop.xlane.xlu0 %119
    %v121 = vlaneseq
    %v122 = vshrl.u32 %v121, 7
    %v123 = vsub.s32 0, %v122
    %v124 = vrot.slane %v107, %v123
    %v125 = vmul.f32 %v52, %v124
    %v126 = vmul.f32 %v53, %v124
    %v127 = vsel %vm82, %v125, 0.0
    %128 = vadd.xlane.f32.xlu0 %v127
    %v129 = vpop.xlane.xlu0 %128
    %v130 = vsel %vm82, %v126, 0.0
    %131 = vadd.xlane.f32.xlu0 %v130
    %v132 = vpop.xlane.xlu0 %131
    %v133 = vlaneseq
    %v134 = vshrl.u32 %v133, 7
    %v135 = vsub.s32 0, %v134
    %v136 = vrot.slane %v108, %v135
    %v137 = vmul.f32 %v50, %v136
    %v138 = vmul.f32 %v51, %v136
    %v140 = vsel %vm58, %v137, 0
    %v143 = vsel %vm58, %v52, 0
    %145 = vmatprep.subr.mxu0 0.0
    %146 = vmatpush1.xpose.msra.mxu0 0.0
    %147 = vmatprep.subr.mxu0 0.0
    %148 = vmatpush1.xpose.msra.mxu0 0.0
    %149 = vmatprep.subr.mxu0 0.0
    %150 = vmatpush1.xpose.msra.mxu0 0.0
    %151 = vmatprep.subr.mxu0 0.0
    %152 = vmatpush1.xpose.msra.mxu0 0.0
    %153 = vmatprep.subr.mxu0 0.0
    %154 = vmatpush1.xpose.msra.mxu0 0.0
    %155 = vmatprep.subr.mxu0 0.0
    %156 = vmatpush1.xpose.msra.mxu0 0.0
    %157 = vmatprep.subr.mxu0 0.0
    %158 = vmatpush1.xpose.msra.mxu0 0.0
    %159 = vmatprep.subr.mxu0 0.0
    %160 = vmatpush1.xpose.msra.mxu0 0.0
    %161 = vmatprep.subr.mxu0 0.0
    %162 = vmatpush1.xpose.msra.mxu0 0.0
    %163 = vmatprep.subr.mxu0 0.0
    %164 = vmatpush1.xpose.msra.mxu0 0.0
    %165 = vmatprep.subr.mxu0 0.0
    %166 = vmatpush1.xpose.msra.mxu0 0.0
    %167 = vmatprep.subr.mxu0 0.0
    %168 = vmatpush1.xpose.msra.mxu0 0.0
    %169 = vmatprep.subr.mxu0 0.0
    %170 = vmatpush1.xpose.msra.mxu0 0.0
    %171 = vmatprep.subr.mxu0 0.0
    %172 = vmatpush1.xpose.msra.mxu0 0.0
    %173 = vmatprep.subr.mxu0 0.0
    %174 = vmatpush1.xpose.msra.mxu0 0.0
    %175 = vmatprep.subr.mxu0 0.0
    %176 = vmatpush1.xpose.msra.mxu0 %v143
    %177 = vmatprep.subr.mxu0 0.0
    %178 = vmatpush2.xpose.msra.mxu0 0.0
    %179 = vmatprep.subr.mxu0 0.0
    %180 = vmatpush2.xpose.msra.mxu0 0.0
    %181 = vmatprep.subr.mxu0 0.0
    %182 = vmatpush2.xpose.msra.mxu0 0.0
    %183 = vmatprep.subr.mxu0 0.0
    %184 = vmatpush2.xpose.msra.mxu0 0.0
    %185 = vmatprep.subr.mxu0 0.0
    %186 = vmatpush2.xpose.msra.mxu0 0.0
    %187 = vmatprep.subr.mxu0 0.0
    %188 = vmatpush2.xpose.msra.mxu0 0.0
    %189 = vmatprep.subr.mxu0 0.0
    %190 = vmatpush2.xpose.msra.mxu0 0.0
    %191 = vmatprep.subr.mxu0 0.0
    %192 = vmatpush2.xpose.msra.mxu0 0.0
    %193 = vmatprep.subr.mxu0 0.0
    %194 = vmatpush2.xpose.msra.mxu0 0.0
    %195 = vmatprep.subr.mxu0 0.0
    %196 = vmatpush2.xpose.msra.mxu0 0.0
    %197 = vmatprep.subr.mxu0 0.0
    %198 = vmatpush2.xpose.msra.mxu0 0.0
    %199 = vmatprep.subr.mxu0 0.0
    %200 = vmatpush2.xpose.msra.mxu0 0.0
    %201 = vmatprep.subr.mxu0 0.0
    %202 = vmatpush2.xpose.msra.mxu0 0.0
    %203 = vmatprep.subr.mxu0 0.0
    %204 = vmatpush2.xpose.msra.mxu0 0.0
    %205 = vmatprep.subr.mxu0 0.0
    %206 = vmatpush2.xpose.msra.mxu0 0.0
    %207 = vmatprep.subr.mxu0 0.0
    %208 = vmatpush2.xpose.msra.mxu0 0.0
    %209 = vmatprep.mubr.f32.mxu0 0.0
    %210 = vmatmul.mubr.f32.gmra.mxu0 %v140
    %v211 = vpop.f32.mrf.mxu0
    %v212 = vadd.f32 0.0, %v211
    %v213 = vpop.f32.mrf.mxu0
    %214 = vdwg.mxu0
    %v216 = vsel %vm58, %v138, 0
    %v219 = vsel %vm58, %v53, 0
    %221 = vmatprep.subr.mxu0 0.0
    %222 = vmatpush1.xpose.msra.mxu0 0.0
    %223 = vmatprep.subr.mxu0 0.0
    %224 = vmatpush1.xpose.msra.mxu0 0.0
    %225 = vmatprep.subr.mxu0 0.0
    %226 = vmatpush1.xpose.msra.mxu0 0.0
    %227 = vmatprep.subr.mxu0 0.0
    %228 = vmatpush1.xpose.msra.mxu0 0.0
    %229 = vmatprep.subr.mxu0 0.0
    %230 = vmatpush1.xpose.msra.mxu0 0.0
    %231 = vmatprep.subr.mxu0 0.0
    %232 = vmatpush1.xpose.msra.mxu0 0.0
    %233 = vmatprep.subr.mxu0 0.0
    %234 = vmatpush1.xpose.msra.mxu0 0.0
    %235 = vmatprep.subr.mxu0 0.0
    %236 = vmatpush1.xpose.msra.mxu0 0.0
    %237 = vmatprep.subr.mxu0 0.0
    %238 = vmatpush1.xpose.msra.mxu0 0.0
    %239 = vmatprep.subr.mxu0 0.0
    %240 = vmatpush1.xpose.msra.mxu0 0.0
    %241 = vmatprep.subr.mxu0 0.0
    %242 = vmatpush1.xpose.msra.mxu0 0.0
    %243 = vmatprep.subr.mxu0 0.0
    %244 = vmatpush1.xpose.msra.mxu0 0.0
    %245 = vmatprep.subr.mxu0 0.0
    %246 = vmatpush1.xpose.msra.mxu0 0.0
    %247 = vmatprep.subr.mxu0 0.0
    %248 = vmatpush1.xpose.msra.mxu0 0.0
    %249 = vmatprep.subr.mxu0 0.0
    %250 = vmatpush1.xpose.msra.mxu0 0.0
    %251 = vmatprep.subr.mxu0 0.0
    %252 = vmatpush1.xpose.msra.mxu0 %v219
    %253 = vmatprep.subr.mxu0 0.0
    %254 = vmatpush2.xpose.msra.mxu0 0.0
    %255 = vmatprep.subr.mxu0 0.0
    %256 = vmatpush2.xpose.msra.mxu0 0.0
    %257 = vmatprep.subr.mxu0 0.0
    %258 = vmatpush2.xpose.msra.mxu0 0.0
    %259 = vmatprep.subr.mxu0 0.0
    %260 = vmatpush2.xpose.msra.mxu0 0.0
    %261 = vmatprep.subr.mxu0 0.0
    %262 = vmatpush2.xpose.msra.mxu0 0.0
    %263 = vmatprep.subr.mxu0 0.0
    %264 = vmatpush2.xpose.msra.mxu0 0.0
    %265 = vmatprep.subr.mxu0 0.0
    %266 = vmatpush2.xpose.msra.mxu0 0.0
    %267 = vmatprep.subr.mxu0 0.0
    %268 = vmatpush2.xpose.msra.mxu0 0.0
    %269 = vmatprep.subr.mxu0 0.0
    %270 = vmatpush2.xpose.msra.mxu0 0.0
    %271 = vmatprep.subr.mxu0 0.0
    %272 = vmatpush2.xpose.msra.mxu0 0.0
    %273 = vmatprep.subr.mxu0 0.0
    %274 = vmatpush2.xpose.msra.mxu0 0.0
    %275 = vmatprep.subr.mxu0 0.0
    %276 = vmatpush2.xpose.msra.mxu0 0.0
    %277 = vmatprep.subr.mxu0 0.0
    %278 = vmatpush2.xpose.msra.mxu0 0.0
    %279 = vmatprep.subr.mxu0 0.0
    %280 = vmatpush2.xpose.msra.mxu0 0.0
    %281 = vmatprep.subr.mxu0 0.0
    %282 = vmatpush2.xpose.msra.mxu0 0.0
    %283 = vmatprep.subr.mxu0 0.0
    %284 = vmatpush2.xpose.msra.mxu0 0.0
    %285 = vmatprep.mubr.f32.mxu0 0.0
    %286 = vmatmul.mubr.f32.gmra.mxu0 %v216
    %v287 = vpop.f32.mrf.mxu0
    %v288 = vadd.f32 0.0, %v287
    %v289 = vpop.f32.mrf.mxu0
    %290 = vdwg.mxu0
    %v293 = vlaneseq
    %v294 = vand.u32 %v293, 127
    %v295 = vlaneseq
    %v296 = vshrl.u32 %v295, 7
    %v297 = vsub.s32 %v294, %v296
    %v298 = vrot.slane %v129, %v297
    %v299 = vlaneseq
    %v300 = vshrl.u32 %v299, 7
    %v301 = vsub.s32 %v294, %v300
    %v302 = vrot.slane %v132, %v301
    %vm303 = vcmask 1041409
    %vm304 = vcmask 1042434
    %v305 = vsel %vm304, %v298, %v298
    %vm306 = vcmask 1043459
    %v307 = vsel %vm306, %v298, %v305
    %vm308 = vcmask 1044484
    %v309 = vsel %vm308, %v298, %v307
    %vm310 = vcmask 1045509
    %v311 = vsel %vm310, %v298, %v309
    %vm312 = vcmask 1046534
    %v313 = vsel %vm312, %v298, %v311
    %vm314 = vcmask 1047559
    %v315 = vsel %vm314, %v298, %v313
    %v316 = vsel %vm304, %v302, %v302
    %v317 = vsel %vm306, %v302, %v316
    %v318 = vsel %vm308, %v302, %v317
    %v319 = vsel %vm310, %v302, %v318
    %v320 = vsel %vm312, %v302, %v319
    %v321 = vsel %vm314, %v302, %v320
    %v324 = vadd.f32 %v117, %v315
    %v325 = vadd.f32 %v120, %v321
    %v326 = vadd.f32 %v324, %v212
    %v327 = vadd.f32 %v325, %v288
    %vm328 = vcmask 31744
    %v329 = vsel %vm328, %v326, -inf
    %330 = vmax.xlane.f32.xlu0 %v329
    %v331 = vpop.xlane.xlu0 %330
    %v332 = vsel %vm328, %v327, -inf
    %333 = vmax.xlane.f32.xlu0 %v332
    %v334 = vpop.xlane.xlu0 %333
    %v337 = vlaneseq
    %v338 = vshrl.u32 %v337, 7
    %v339 = vsub.s32 %v294, %v338
    %v340 = vrot.slane %v331, %v339
    %v341 = vlaneseq
    %v342 = vshrl.u32 %v341, 7
    %v343 = vsub.s32 %v294, %v342
    %v344 = vrot.slane %v334, %v343
    %v345 = vsel %vm303, %v344, %v340
    %vm347 = vcmask 58368
    %v348 = vsel %vm347, %v345, -inf
    %349 = vmax.xlane.f32.xlu0 %v348
    %v350 = vpop.xlane.xlu0 %349
    %v352 = vlaneseq
    %v353 = vshrl.u32 %v352, 7
    %v354 = vsub.s32 0, %v353
    %v355 = vrot.slane %v350, %v354
    %v356 = vlaneseq
    %v357 = vshrl.u32 %v356, 7
    %v358 = vsub.s32 1, %v357
    %v359 = vrot.slane %v350, %v358
    %v362 = vsub.f32 %v331, %v355
    %v363 = vsub.f32 %v334, %v359
    %v364 = vmul.f32 %v362, 1.442695
    %v365 = vpow.pop %v364
    %v366 = vmul.f32 %v363, 1.442695
    %v367 = vpow.pop %v366
    %370 = vset.pattern.permute.xlu0 0
    %371 = vperm.xlu0 %370, %v365
    %v372 = vpop.permute.xlu0 %371
    %373 = vset.pattern.permute.xlu0 0
    %374 = vperm.xlu0 %373, %v367
    %v375 = vpop.permute.xlu0 %374
    %v376 = vlaneseq
    %v377 = vshrl.u32 %v376, 7
    %v378 = vsub.s32 %v294, %v377
    %v379 = vrot.slane %v372, %v378
    %v380 = vlaneseq
    %v381 = vshrl.u32 %v380, 7
    %v382 = vsub.s32 %v294, %v381
    %v383 = vrot.slane %v375, %v382
    %v384 = vsel %vm303, %v383, %v379
    %v386 = vsel %vm347, %v384, 0.0
    %387 = vadd.xlane.f32.xlu0 %v386
    %v388 = vpop.xlane.xlu0 %387
    %v389 = vrcp.pop %v388
    %v391 = vlaneseq
    %v392 = vshrl.u32 %v391, 7
    %v393 = vsub.s32 0, %v392
    %v394 = vrot.slane %v389, %v393
    %v395 = vlaneseq
    %v396 = vshrl.u32 %v395, 7
    %v397 = vsub.s32 1, %v396
    %v398 = vrot.slane %v389, %v397
    %v401 = vmul.f32 %v365, %v394
    %v402 = vmul.f32 %v367, %v398
    %404 = vset.pattern.permute.xlu0 0
    %405 = vperm.xlu0 %404, %v401
    %v406 = vpop.permute.xlu0 %405
    %409 = vset.pattern.permute.xlu0 0
    %410 = vperm.xlu0 %409, %v402
    %v411 = vpop.permute.xlu0 %410
    %v413 = vmul.f32 %v50, %v406
    %v414 = vmul.f32 %v51, %v411
    %v415 = vsel %vm58, %v413, 0.0
    %v416 = vrot.slane %v415, 4
    %v417 = vadd.f32 %v415, %v416
    %v418 = vrot.slane %v417, 2
    %v419 = vadd.f32 %v417, %v418
    %v420 = vrot.slane %v419, 1
    %v421 = vadd.f32 %v419, %v420
    %v422 = vsel %vm58, %v414, 0.0
    %v423 = vrot.slane %v422, 4
    %v424 = vadd.f32 %v422, %v423
    %v425 = vrot.slane %v424, 2
    %v426 = vadd.f32 %v424, %v425
    %v427 = vrot.slane %v426, 1
    %v428 = vadd.f32 %v426, %v427
    %v429 = vrot.slane %v329, 4
    %v430 = vmax.f32 %v329, %v429
    %v431 = vrot.slane %v430, 2
    %v432 = vmax.f32 %v430, %v431
    %v433 = vrot.slane %v432, 1
    %v434 = vmax.f32 %v432, %v433
    %v435 = vrot.slane %v332, 4
    %v436 = vmax.f32 %v332, %v435
    %v437 = vrot.slane %v436, 2
    %v438 = vmax.f32 %v436, %v437
    %v439 = vrot.slane %v438, 1
    %v440 = vmax.f32 %v438, %v439
    %v443 = vsel %vm303, %v440, %v434
    %vm445 = vcmask 25600
    %v446 = vsel %vm445, %v443, -inf
    %447 = vmax.xlane.f32.xlu0 %v446
    %v448 = vpop.xlane.xlu0 %447
    %v450 = vrot.slane %v448, 1
    %v453 = vsub.f32 %v434, %v448
    %v454 = vsub.f32 %v440, %v450
    %v455 = vmul.f32 %v453, 1.442695
    %v456 = vpow.pop %v455
    %v457 = vmul.f32 %v454, 1.442695
    %v458 = vpow.pop %v457
    %v461 = vrot.slane %v458, 7
    %v462 = vsel %vm303, %v461, %v456
    %v464 = vsel %vm445, %v462, 0.0
    %465 = vadd.xlane.f32.xlu0 %v464
    %v466 = vpop.xlane.xlu0 %465
    %v467 = vrcp.pop %v466
    %v469 = vrot.slane %v467, 1
    %v472 = vmul.f32 %v456, %v467
    %v473 = vmul.f32 %v458, %v469
    %v474 = vlaneseq
    %v475 = vshrl.u32 %v474, 7
    %v476 = vsub.s32 0, %v475
    %v477 = vrot.slane %v472, %v476
    %479 = vbcast.lane.b32.xlu0 %v477, 256
    %v480 = vpop.permute.xlu0 %479
    %v481 = vlaneseq
    %v482 = vshrl.u32 %v481, 7
    %v483 = vsub.s32 0, %v482
    %v484 = vrot.slane %v473, %v483
    %486 = vbcast.lane.b32.xlu0 %v484, 256
    %v487 = vpop.permute.xlu0 %486
    %v488 = vmul.f32 %v52, %v480
    %v489 = vmul.f32 %v53, %v487
    %v490 = vsel %vm82, %v488, 0.0
    %v491 = vrot.slane %v490, 4
    %v492 = vadd.f32 %v490, %v491
    %v493 = vrot.slane %v492, 2
    %v494 = vadd.f32 %v492, %v493
    %v495 = vrot.slane %v494, 1
    %v496 = vadd.f32 %v494, %v495
    %v497 = vsel %vm82, %v489, 0.0
    %v498 = vrot.slane %v497, 4
    %v499 = vadd.f32 %v497, %v498
    %v500 = vrot.slane %v499, 2
    %v501 = vadd.f32 %v499, %v500
    %v502 = vrot.slane %v501, 1
    %v503 = vadd.f32 %v501, %v502
    %v504 = vld [vmem:[%s6] sm:$0xff]
    %v505 = vld [vmem:[%s6 + $0x8] sm:$0xff]
    %v506 = vld [vmem:[%s6 + $0x10] sm:$0xff]
    %v507 = vld [vmem:[%s6 + $0x18] sm:$0xff]
    %v509 = vsel %vm58, %v50, 0
    %v512 = vsel %vm58, %v51, 0
    %514 = vmatprep.subr.mxu0 0.0
    %515 = vmatpush1.msra.mxu0 0.0
    %516 = vmatprep.subr.mxu0 0.0
    %517 = vmatpush1.msra.mxu0 0.0
    %518 = vmatprep.subr.mxu0 0.0
    %519 = vmatpush1.msra.mxu0 0.0
    %520 = vmatprep.subr.mxu0 0.0
    %521 = vmatpush1.msra.mxu0 0.0
    %522 = vmatprep.subr.mxu0 0.0
    %523 = vmatpush1.msra.mxu0 0.0
    %524 = vmatprep.subr.mxu0 0.0
    %525 = vmatpush1.msra.mxu0 0.0
    %526 = vmatprep.subr.mxu0 0.0
    %527 = vmatpush1.msra.mxu0 0.0
    %528 = vmatprep.subr.mxu0 0.0
    %529 = vmatpush1.msra.mxu0 0.0
    %530 = vmatprep.subr.mxu0 0.0
    %531 = vmatpush1.msra.mxu0 0.0
    %532 = vmatprep.subr.mxu0 0.0
    %533 = vmatpush1.msra.mxu0 0.0
    %534 = vmatprep.subr.mxu0 0.0
    %535 = vmatpush1.msra.mxu0 0.0
    %536 = vmatprep.subr.mxu0 0.0
    %537 = vmatpush1.msra.mxu0 0.0
    %538 = vmatprep.subr.mxu0 0.0
    %539 = vmatpush1.msra.mxu0 %v507
    %540 = vmatprep.subr.mxu0 0.0
    %541 = vmatpush1.msra.mxu0 %v506
    %542 = vmatprep.subr.mxu0 0.0
    %543 = vmatpush1.msra.mxu0 %v505
    %544 = vmatprep.subr.mxu0 0.0
    %545 = vmatpush1.msra.mxu0 %v504
    %546 = vmatprep.subr.mxu0 0.0
    %547 = vmatpush2.msra.mxu0 0.0
    %548 = vmatprep.subr.mxu0 0.0
    %549 = vmatpush2.msra.mxu0 0.0
    %550 = vmatprep.subr.mxu0 0.0
    %551 = vmatpush2.msra.mxu0 0.0
    %552 = vmatprep.subr.mxu0 0.0
    %553 = vmatpush2.msra.mxu0 0.0
    %554 = vmatprep.subr.mxu0 0.0
    %555 = vmatpush2.msra.mxu0 0.0
    %556 = vmatprep.subr.mxu0 0.0
    %557 = vmatpush2.msra.mxu0 0.0
    %558 = vmatprep.subr.mxu0 0.0
    %559 = vmatpush2.msra.mxu0 0.0
    %560 = vmatprep.subr.mxu0 0.0
    %561 = vmatpush2.msra.mxu0 0.0
    %562 = vmatprep.subr.mxu0 0.0
    %563 = vmatpush2.msra.mxu0 0.0
    %564 = vmatprep.subr.mxu0 0.0
    %565 = vmatpush2.msra.mxu0 0.0
    %566 = vmatprep.subr.mxu0 0.0
    %567 = vmatpush2.msra.mxu0 0.0
    %568 = vmatprep.subr.mxu0 0.0
    %569 = vmatpush2.msra.mxu0 0.0
    %570 = vmatprep.subr.mxu0 0.0
    %571 = vmatpush2.msra.mxu0 0.0
    %572 = vmatprep.subr.mxu0 0.0
    %573 = vmatpush2.msra.mxu0 0.0
    %574 = vmatprep.subr.mxu0 0.0
    %575 = vmatpush2.msra.mxu0 0.0
    %576 = vmatprep.subr.mxu0 0.0
    %577 = vmatpush2.msra.mxu0 0.0
    %578 = vmatprep.mubr.f32.mxu0 0.0
    %579 = vmatmul.mubr.f32.gmra.mxu0 %v509
    %v580 = vpop.f32.mrf.mxu0
    %v581 = vadd.f32 0.0, %v580
    %v582 = vpop.f32.mrf.mxu0
    %583 = vmatprep.mubr.f32.mxu0 0.0
    %584 = vmatmul.mubr.f32.gmra.mxu0 %v512
    %v585 = vpop.f32.mrf.mxu0
    %v586 = vadd.f32 0.0, %v585
    %v587 = vpop.f32.mrf.mxu0
    %588 = vdwg.mxu0
    %v589 = vlaneseq
    %v590 = vshrl.u32 %v589, 7
    %v591 = vsub.s32 0, %v590
    %v592 = vrot.slane %v104, %v591
    %v593 = vlaneseq
    %v594 = vshrl.u32 %v593, 7
    %v595 = vsub.s32 0, %v594
    %v596 = vrot.slane %v105, %v595
    %v597 = vmul.f32 %v581, %v592
    %v598 = vmul.f32 %v586, %v596
    %v599 = vsel %vm58, %v597, 0.0
    %600 = vadd.xlane.f32.xlu0 %v599
    %v601 = vpop.xlane.xlu0 %600
    %v602 = vsel %vm58, %v598, 0.0
    %603 = vadd.xlane.f32.xlu0 %v602
    %v604 = vpop.xlane.xlu0 %603
    %v607 = vlaneseq
    %v608 = vshrl.u32 %v607, 7
    %v609 = vsub.s32 %v294, %v608
    %v610 = vrot.slane %v601, %v609
    %v611 = vlaneseq
    %v612 = vshrl.u32 %v611, 7
    %v613 = vsub.s32 %v294, %v612
    %v614 = vrot.slane %v604, %v613
    %v615 = vsel %vm303, %v614, %v610
    %v617 = vsel %vm347, %v615, -inf
    %618 = vmax.xlane.f32.xlu0 %v617
    %v619 = vpop.xlane.xlu0 %618
    %v621 = vlaneseq
    %v622 = vshrl.u32 %v621, 7
    %v623 = vsub.s32 0, %v622
    %v624 = vrot.slane %v619, %v623
    %v625 = vlaneseq
    %v626 = vshrl.u32 %v625, 7
    %v627 = vsub.s32 1, %v626
    %v628 = vrot.slane %v619, %v627
    %v631 = vsub.f32 %v601, %v624
    %v632 = vsub.f32 %v604, %v628
    %v633 = vmul.f32 %v631, 1.442695
    %v634 = vpow.pop %v633
    %v635 = vmul.f32 %v632, 1.442695
    %v636 = vpow.pop %v635
    %639 = vset.pattern.permute.xlu0 0
    %640 = vperm.xlu0 %639, %v634
    %v641 = vpop.permute.xlu0 %640
    %642 = vset.pattern.permute.xlu0 0
    %643 = vperm.xlu0 %642, %v636
    %v644 = vpop.permute.xlu0 %643
    %v645 = vlaneseq
    %v646 = vshrl.u32 %v645, 7
    %v647 = vsub.s32 %v294, %v646
    %v648 = vrot.slane %v641, %v647
    %v649 = vlaneseq
    %v650 = vshrl.u32 %v649, 7
    %v651 = vsub.s32 %v294, %v650
    %v652 = vrot.slane %v644, %v651
    %v653 = vsel %vm303, %v652, %v648
    %v655 = vsel %vm347, %v653, 0.0
    %656 = vadd.xlane.f32.xlu0 %v655
    %v657 = vpop.xlane.xlu0 %656
    %v658 = vrcp.pop %v657
    %v660 = vlaneseq
    %v661 = vshrl.u32 %v660, 7
    %v662 = vsub.s32 0, %v661
    %v663 = vrot.slane %v658, %v662
    %v664 = vlaneseq
    %v665 = vshrl.u32 %v664, 7
    %v666 = vsub.s32 1, %v665
    %v667 = vrot.slane %v658, %v666
    %v670 = vmul.f32 %v634, %v663
    %v671 = vmul.f32 %v636, %v667
    %673 = vset.pattern.permute.xlu0 0
    %674 = vperm.xlu0 %673, %v670
    %v675 = vpop.permute.xlu0 %674
    %678 = vset.pattern.permute.xlu0 0
    %679 = vperm.xlu0 %678, %v671
    %v680 = vpop.permute.xlu0 %679
    %v682 = vmul.f32 %v50, %v675
    %v683 = vmul.f32 %v51, %v680
    %v684 = vsel %vm58, %v682, 0.0
    %v685 = vrot.slane %v684, 4
    %v686 = vadd.f32 %v684, %v685
    %v687 = vrot.slane %v686, 2
    %v688 = vadd.f32 %v686, %v687
    %v689 = vrot.slane %v688, 1
    %v690 = vadd.f32 %v688, %v689
    %v691 = vsel %vm58, %v683, 0.0
    %v692 = vrot.slane %v691, 4
    %v693 = vadd.f32 %v691, %v692
    %v694 = vrot.slane %v693, 2
    %v695 = vadd.f32 %v693, %v694
    %v696 = vrot.slane %v695, 1
    %v697 = vadd.f32 %v695, %v696
    %v698 = vld [vmem:[%s7] sm:$0xff]
    %v699 = vld [vmem:[%s7 + $0x8] sm:$0xff]
    %v700 = vld [vmem:[%s7 + $0x10] sm:$0xff]
    %v701 = vld [vmem:[%s7 + $0x18] sm:$0xff]
    %v702 = vcombine.low %v52, %v53
    %v703 = vsel %vm58, %v702, 0
    %705 = vmatprep.subr.mxu0 0.0
    %706 = vmatpush1.msra.mxu0 0.0
    %707 = vmatprep.subr.mxu0 0.0
    %708 = vmatpush1.msra.mxu0 0.0
    %709 = vmatprep.subr.mxu0 0.0
    %710 = vmatpush1.msra.mxu0 0.0
    %711 = vmatprep.subr.mxu0 0.0
    %712 = vmatpush1.msra.mxu0 0.0
    %713 = vmatprep.subr.mxu0 0.0
    %714 = vmatpush1.msra.mxu0 0.0
    %715 = vmatprep.subr.mxu0 0.0
    %716 = vmatpush1.msra.mxu0 0.0
    %717 = vmatprep.subr.mxu0 0.0
    %718 = vmatpush1.msra.mxu0 0.0
    %719 = vmatprep.subr.mxu0 0.0
    %720 = vmatpush1.msra.mxu0 0.0
    %721 = vmatprep.subr.mxu0 0.0
    %722 = vmatpush1.msra.mxu0 0.0
    %723 = vmatprep.subr.mxu0 0.0
    %724 = vmatpush1.msra.mxu0 0.0
    %725 = vmatprep.subr.mxu0 0.0
    %726 = vmatpush1.msra.mxu0 0.0
    %727 = vmatprep.subr.mxu0 0.0
    %728 = vmatpush1.msra.mxu0 0.0
    %729 = vmatprep.subr.mxu0 0.0
    %730 = vmatpush1.msra.mxu0 %v701
    %731 = vmatprep.subr.mxu0 0.0
    %732 = vmatpush1.msra.mxu0 %v700
    %733 = vmatprep.subr.mxu0 0.0
    %734 = vmatpush1.msra.mxu0 %v699
    %735 = vmatprep.subr.mxu0 0.0
    %736 = vmatpush1.msra.mxu0 %v698
    %737 = vmatprep.subr.mxu0 0.0
    %738 = vmatpush2.msra.mxu0 0.0
    %739 = vmatprep.subr.mxu0 0.0
    %740 = vmatpush2.msra.mxu0 0.0
    %741 = vmatprep.subr.mxu0 0.0
    %742 = vmatpush2.msra.mxu0 0.0
    %743 = vmatprep.subr.mxu0 0.0
    %744 = vmatpush2.msra.mxu0 0.0
    %745 = vmatprep.subr.mxu0 0.0
    %746 = vmatpush2.msra.mxu0 0.0
    %747 = vmatprep.subr.mxu0 0.0
    %748 = vmatpush2.msra.mxu0 0.0
    %749 = vmatprep.subr.mxu0 0.0
    %750 = vmatpush2.msra.mxu0 0.0
    %751 = vmatprep.subr.mxu0 0.0
    %752 = vmatpush2.msra.mxu0 0.0
    %753 = vmatprep.subr.mxu0 0.0
    %754 = vmatpush2.msra.mxu0 0.0
    %755 = vmatprep.subr.mxu0 0.0
    %756 = vmatpush2.msra.mxu0 0.0
    %757 = vmatprep.subr.mxu0 0.0
    %758 = vmatpush2.msra.mxu0 0.0
    %759 = vmatprep.subr.mxu0 0.0
    %760 = vmatpush2.msra.mxu0 0.0
    %761 = vmatprep.subr.mxu0 0.0
    %762 = vmatpush2.msra.mxu0 0.0
    %763 = vmatprep.subr.mxu0 0.0
    %764 = vmatpush2.msra.mxu0 0.0
    %765 = vmatprep.subr.mxu0 0.0
    %766 = vmatpush2.msra.mxu0 0.0
    %767 = vmatprep.subr.mxu0 0.0
    %768 = vmatpush2.msra.mxu0 0.0
    %769 = vmatprep.mubr.f32.mxu0 0.0
    %770 = vmatmul.mubr.f32.gmra.mxu0 %v703
    %v771 = vpop.f32.mrf.mxu0
    %v772 = vadd.f32 0.0, %v771
    %v773 = vpop.f32.mrf.mxu0
    %774 = vdwg.mxu0
    %v776 = vcombine.high %v772, %v772
    %v778 = vlaneseq
    %v779 = vshrl.u32 %v778, 7
    %v780 = vsub.s32 0, %v779
    %v781 = vrot.slane %v80, %v780
    %v782 = vlaneseq
    %v783 = vshrl.u32 %v782, 7
    %v784 = vsub.s32 0, %v783
    %v785 = vrot.slane %v81, %v784
    %v786 = vmul.f32 %v772, %v781
    %v787 = vmul.f32 %v776, %v785
    %v788 = vsel %vm82, %v786, 0.0
    %789 = vadd.xlane.f32.xlu0 %v788
    %v790 = vpop.xlane.xlu0 %789
    %v791 = vsel %vm82, %v787, 0.0
    %792 = vadd.xlane.f32.xlu0 %v791
    %v793 = vpop.xlane.xlu0 %792
    %v796 = vlaneseq
    %v797 = vshrl.u32 %v796, 7
    %v798 = vsub.s32 %v294, %v797
    %v799 = vrot.slane %v790, %v798
    %v800 = vlaneseq
    %v801 = vshrl.u32 %v800, 7
    %v802 = vsub.s32 %v294, %v801
    %v803 = vrot.slane %v793, %v802
    %v804 = vsel %vm303, %v803, %v799
    %v806 = vsel %vm445, %v804, -inf
    %807 = vmax.xlane.f32.xlu0 %v806
    %v808 = vpop.xlane.xlu0 %807
    %v810 = vlaneseq
    %v811 = vshrl.u32 %v810, 7
    %v812 = vsub.s32 0, %v811
    %v813 = vrot.slane %v808, %v812
    %v814 = vlaneseq
    %v815 = vshrl.u32 %v814, 7
    %v816 = vsub.s32 1, %v815
    %v817 = vrot.slane %v808, %v816
    %v820 = vsub.f32 %v790, %v813
    %v821 = vsub.f32 %v793, %v817
    %v822 = vmul.f32 %v820, 1.442695
    %v823 = vpow.pop %v822
    %v824 = vmul.f32 %v821, 1.442695
    %v825 = vpow.pop %v824
    %828 = vset.pattern.permute.xlu0 0
    %829 = vperm.xlu0 %828, %v823
    %v830 = vpop.permute.xlu0 %829
    %831 = vset.pattern.permute.xlu0 0
    %832 = vperm.xlu0 %831, %v825
    %v833 = vpop.permute.xlu0 %832
    %v834 = vlaneseq
    %v835 = vshrl.u32 %v834, 7
    %v836 = vsub.s32 %v294, %v835
    %v837 = vrot.slane %v830, %v836
    %v838 = vlaneseq
    %v839 = vshrl.u32 %v838, 7
    %v840 = vsub.s32 %v294, %v839
    %v841 = vrot.slane %v833, %v840
    %v842 = vsel %vm303, %v841, %v837
    %v844 = vsel %vm445, %v842, 0.0
    %845 = vadd.xlane.f32.xlu0 %v844
    %v846 = vpop.xlane.xlu0 %845
    %v847 = vrcp.pop %v846
    %v849 = vlaneseq
    %v850 = vshrl.u32 %v849, 7
    %v851 = vsub.s32 0, %v850
    %v852 = vrot.slane %v847, %v851
    %v853 = vlaneseq
    %v854 = vshrl.u32 %v853, 7
    %v855 = vsub.s32 1, %v854
    %v856 = vrot.slane %v847, %v855
    %v859 = vmul.f32 %v823, %v852
    %v860 = vmul.f32 %v825, %v856
    %862 = vset.pattern.permute.xlu0 0
    %863 = vperm.xlu0 %862, %v859
    %v864 = vpop.permute.xlu0 %863
    %867 = vset.pattern.permute.xlu0 0
    %868 = vperm.xlu0 %867, %v860
    %v869 = vpop.permute.xlu0 %868
    %v871 = vmul.f32 %v52, %v864
    %v872 = vmul.f32 %v53, %v869
    %v873 = vsel %vm82, %v871, 0.0
    %v874 = vrot.slane %v873, 4
    %v875 = vadd.f32 %v873, %v874
    %v876 = vrot.slane %v875, 2
    %v877 = vadd.f32 %v875, %v876
    %v878 = vrot.slane %v877, 1
    %v879 = vadd.f32 %v877, %v878
    %v880 = vsel %vm82, %v872, 0.0
    %v881 = vrot.slane %v880, 4
    %v882 = vadd.f32 %v880, %v881
    %v883 = vrot.slane %v882, 2
    %v884 = vadd.f32 %v882, %v883
    %v885 = vrot.slane %v884, 1
    %v886 = vadd.f32 %v884, %v885
    %v889 = vsel %vm303, %v697, %v690
    %v893 = vsel %vm303, %v428, %v421
    %894 = vrot.lane.b32.xlu0 %v893, 32
    %v895 = vpop.permute.xlu0 %894
    %v899 = vsel %vm303, %v503, %v496
    %900 = vrot.lane.b32.xlu0 %v899, 64
    %v901 = vpop.permute.xlu0 %900
    %v905 = vsel %vm303, %v886, %v879
    %906 = vrot.lane.b32.xlu0 %v905, 96
    %v907 = vpop.permute.xlu0 %906
    %v909 = vsel %vm58, %v889, %v895
    %vm910 = vcmask 523264
    %v911 = vsel %vm910, %v909, %v901
    %vm912 = vcmask 785408
    %v913 = vsel %vm912, %v911, %v907
    %v914 = vld [vmem:[%s8] sm:$0xff]
    %v915 = vld [vmem:[%s8 + $0x8] sm:$0xff]
    %v916 = vld [vmem:[%s8 + $0x10] sm:$0xff]
    %v917 = vld [vmem:[%s8 + $0x18] sm:$0xff]
    %v918 = vld [vmem:[%s8 + $0x20] sm:$0xff]
    %v919 = vld [vmem:[%s8 + $0x28] sm:$0xff]
    %v920 = vld [vmem:[%s8 + $0x30] sm:$0xff]
    %v921 = vld [vmem:[%s8 + $0x38] sm:$0xff]
    %v922 = vld [vmem:[%s8 + $0x40] sm:$0xff]
    %v923 = vld [vmem:[%s8 + $0x48] sm:$0xff]
    %v924 = vld [vmem:[%s8 + $0x50] sm:$0xff]
    %v925 = vld [vmem:[%s8 + $0x58] sm:$0xff]
    %v926 = vld [vmem:[%s8 + $0x60] sm:$0xff]
    %v927 = vld [vmem:[%s8 + $0x68] sm:$0xff]
    %v928 = vld [vmem:[%s8 + $0x70] sm:$0xff]
    %v929 = vld [vmem:[%s8 + $0x78] sm:$0xff]
    %v930 = vld [vmem:[%s9] sm:$0x1]
    %v932 = vlaneseq
    %v933 = vshrl.u32 %v932, 7
    %v934 = vsub.s32 0, %v933
    %v935 = vrot.slane %v930, %v934
    %937 = vmatprep.subr.mxu0 0.0
    %938 = vmatpush1.msra.mxu0 %v929
    %939 = vmatprep.subr.mxu0 0.0
    %940 = vmatpush1.msra.mxu0 %v928
    %941 = vmatprep.subr.mxu0 0.0
    %942 = vmatpush1.msra.mxu0 %v927
    %943 = vmatprep.subr.mxu0 0.0
    %944 = vmatpush1.msra.mxu0 %v926
    %945 = vmatprep.subr.mxu0 0.0
    %946 = vmatpush1.msra.mxu0 %v925
    %947 = vmatprep.subr.mxu0 0.0
    %948 = vmatpush1.msra.mxu0 %v924
    %949 = vmatprep.subr.mxu0 0.0
    %950 = vmatpush1.msra.mxu0 %v923
    %951 = vmatprep.subr.mxu0 0.0
    %952 = vmatpush1.msra.mxu0 %v922
    %953 = vmatprep.subr.mxu0 0.0
    %954 = vmatpush1.msra.mxu0 %v921
    %955 = vmatprep.subr.mxu0 0.0
    %956 = vmatpush1.msra.mxu0 %v920
    %957 = vmatprep.subr.mxu0 0.0
    %958 = vmatpush1.msra.mxu0 %v919
    %959 = vmatprep.subr.mxu0 0.0
    %960 = vmatpush1.msra.mxu0 %v918
    %961 = vmatprep.subr.mxu0 0.0
    %962 = vmatpush1.msra.mxu0 %v917
    %963 = vmatprep.subr.mxu0 0.0
    %964 = vmatpush1.msra.mxu0 %v916
    %965 = vmatprep.subr.mxu0 0.0
    %966 = vmatpush1.msra.mxu0 %v915
    %967 = vmatprep.subr.mxu0 0.0
    %968 = vmatpush1.msra.mxu0 %v914
    %969 = vmatprep.subr.mxu0 0.0
    %970 = vmatpush2.msra.mxu0 0.0
    %971 = vmatprep.subr.mxu0 0.0
    %972 = vmatpush2.msra.mxu0 0.0
    %973 = vmatprep.subr.mxu0 0.0
    %974 = vmatpush2.msra.mxu0 0.0
    %975 = vmatprep.subr.mxu0 0.0
    %976 = vmatpush2.msra.mxu0 0.0
    %977 = vmatprep.subr.mxu0 0.0
    %978 = vmatpush2.msra.mxu0 0.0
    %979 = vmatprep.subr.mxu0 0.0
    %980 = vmatpush2.msra.mxu0 0.0
    %981 = vmatprep.subr.mxu0 0.0
    %982 = vmatpush2.msra.mxu0 0.0
    %983 = vmatprep.subr.mxu0 0.0
    %984 = vmatpush2.msra.mxu0 0.0
    %985 = vmatprep.subr.mxu0 0.0
    %986 = vmatpush2.msra.mxu0 0.0
    %987 = vmatprep.subr.mxu0 0.0
    %988 = vmatpush2.msra.mxu0 0.0
    %989 = vmatprep.subr.mxu0 0.0
    %990 = vmatpush2.msra.mxu0 0.0
    %991 = vmatprep.subr.mxu0 0.0
    %992 = vmatpush2.msra.mxu0 0.0
    %993 = vmatprep.subr.mxu0 0.0
    %994 = vmatpush2.msra.mxu0 0.0
    %995 = vmatprep.subr.mxu0 0.0
    %996 = vmatpush2.msra.mxu0 0.0
    %997 = vmatprep.subr.mxu0 0.0
    %998 = vmatpush2.msra.mxu0 0.0
    %999 = vmatprep.subr.mxu0 0.0
    %1000 = vmatpush2.msra.mxu0 0.0
    %1001 = vmatprep.mubr.f32.mxu0 0.0
    %1002 = vmatmul.mubr.f32.gmra.mxu0 %v913
    %v1003 = vpop.f32.mrf.mxu0
    %v1004 = vadd.f32 %v935, %v1003
    %v1005 = vpop.f32.mrf.mxu0
    %1006 = vdwg.mxu0
    %1007 = vst [vmem:[#allocation2] sm:$0x3] %v1004
    // Predicated region
    $region42: #{mgan_forward.5} parent=1 // pred_check
      _
    $region43: #{mgan_forward.5} parent=1 // pred_check_branch
      %1009 = sbr.rel (0) target = $region45
    $region44: #{mgan_forward.5} parent=1 // pred_region
      %s1011 = ssub.s32 32, 32
      %1012 = vsyncadd [#allocation3], %s1011
      %s1014 = sshll.u32 [#allocation2], 4
      %s1015 = int_to_ptr.vmem [resolvable:$true] %s1014
      %1017 = dma.vmem_to_hbm [thread:$0]  %s1015, 32, %s10, [#allocation3]
    $region45: #{mgan_forward.5} parent=1 // pred_fallthru
      _
    // Predicated region
    $region46: #{mgan_forward.5} parent=1 // pred_check
      _
    $region47: #{mgan_forward.5} parent=1 // pred_check_branch
      %1019 = sbr.rel (0) target = $region49
    $region48: #{mgan_forward.5} parent=1 // pred_region
      %1020 = dma.done [#allocation3], 32
    $region49: #{mgan_forward.5} parent=1 // pred_fallthru
      _
    %1021 = vsyncpa [#allocation3], 1

</llo_original>
